<compile_context>
chip_gen: v6e
topology: v6e:2x2x1
jax: 0.10.0
libtpu: 0.0.40
codegen_flags: <defaults>
</compile_context>

<pallas_src>
import numpy as np

import jax
import jax.numpy as jnp
from jax import lax
from jax.experimental import pallas as pl
from jax.experimental.pallas import tpu as pltpu

EPS = 1e-5            # nn.BatchNorm2d default eps
N_BATCH = 2
IN_CH = 4
DEPTH = 5
WF = 2
OUT_DIM = 16          # input spatial size == out_dim == 16
N_LEVELS = 4          # number of 2x2 max-pools (16 -> 8 -> 4 -> 2 -> 1)
HW = OUT_DIM * OUT_DIM                     # 256 output pixels

# ------------- static plan for the packed parameter slabs (8-row aligned) -------------
D_COUT = [4, 8, 16, 16, 64]                # down conv out-channels
D_CIN = [4, 4, 8, 16, 16]                  # down conv in-channels
D_OFF = [0, 8, 16, 32, 48]                 # row offset of each conv block in dslab
D_BIAS_COL, D_GAMMA_COL, D_BETA_COL = 16, 17, 18
D_COMB_OFF = 112                           # rows 112:116 = combine column vectors
D_ROWS = 120

U_A_OFF = [0, 64, 80]                      # packed transconv weights per up level
U_A_ROWS = [64, 16, 64]
U_TB_OFF = [144, 152, 160]                 # transconv bias rows per level
U_ROWS = 168
U_COLS = 4 * HW                            # [mask_ic0 | mask_ic1 | cntr_ic0 | cntr_ic1]


# --------------------------- static index tables --------------------------- #

def _build_pixel_order(n, h, w, levels):
    """src[j] = flat (b, y, x) index feeding kernel column j, where
    j = phi_0*(P/4) + phi_1*(P/16) + ... + phi_{L-1}*n + b and
    phi_k = 2*bit_k(y) + bit_k(x).  With this ordering the 4 phases of every
    2x2 max-pool are contiguous column blocks, recursively at every level."""
    assert h == w == 2 ** levels
    src = np.zeros(n * h * w, dtype=np.int32)
    for b in range(n):
        for y in range(h):
            for x in range(w):
                j = b
                for k in range(levels):
                    phi = 2 * ((y >> k) & 1) + ((x >> k) & 1)
                    j += phi * (4 ** (levels - 1 - k)) * n
                src[j] = b * h * w + y * w + x
    return src


def _build_quadrant_scatter(k, out_hw):
    """R[q, r, s] == 1 iff patch element r = kh*k + kw of quadrant q lands at
    output pixel s = h*out_hw + w (row-major)."""
    rq = np.zeros((4, k * k, out_hw * out_hw), dtype=np.float32)
    for q in range(4):
        qh, qw = q // 2, q % 2
        for kh in range(k):
            for kw in range(k):
                r = kh * k + kw
                s = (qh * k + kh) * out_hw + (qw * k + kw)
                rq[q, r, s] = 1.0
    return rq


_PIX_SRC = _build_pixel_order(N_BATCH, OUT_DIM, OUT_DIM, N_LEVELS)   # (512,)
_RQ = _build_quadrant_scatter(OUT_DIM // 2, OUT_DIM)                 # (4, 64, 256)


# ------------------------------ kernel helpers ------------------------------ #

def _tree_sum(terms):
    """Pairwise (log-depth) reduction of a list of same-shape arrays."""
    while len(terms) > 1:
        nxt = [a + b for a, b in zip(terms[0::2], terms[1::2])]
        if len(terms) % 2:
            nxt.append(terms[-1])
        terms = nxt
    return terms[0]


def _maxpool4(y):
    """2x2 max pool; the 4 pool phases are contiguous column blocks."""
    q = y.shape[1] // 4
    return jnp.maximum(jnp.maximum(y[:, 0:q], y[:, q:2 * q]),
                       jnp.maximum(y[:, 2 * q:3 * q], y[:, 3 * q:4 * q]))


# -------------------------------- the kernel -------------------------------- #

def _dcan_kernel(x_ref, d_ref, u_ref, o_ref):
    # ------------------ down path: Conv1x1 -> ReLU -> BN -> pool ------------------
    act = x_ref[...]                        # (Cin, P) channel-major, pool-phase order
    ys = []
    for i in range(DEPTH):
        off, co, ci = D_OFF[i], D_COUT[i], D_CIN[i]
        blk = d_ref[off:off + co, :]        # (co, 128): [w | bias | gamma | beta]
        # Conv1x1 (+bias) as tree-reduced VPU broadcast-FMAs (Cin <= 16, no MXU).
        terms = [blk[:, k:k + 1] * act[k:k + 1, :] for k in range(ci)]
        y = _tree_sum(terms) + blk[:, D_BIAS_COL:D_BIAS_COL + 1]
        y = jnp.maximum(y, 0.0)
        # BatchNorm2d (training-mode batch stats), single-pass moments.
        m1 = jnp.mean(y, axis=1, keepdims=True)
        m2 = jnp.mean(y * y, axis=1, keepdims=True)
        var = jnp.maximum(m2 - m1 * m1, 0.0)
        scale = blk[:, D_GAMMA_COL:D_GAMMA_COL + 1] * lax.rsqrt(var + EPS)
        shift = blk[:, D_BETA_COL:D_BETA_COL + 1] - m1 * scale
        y = y * scale + shift
        if i < DEPTH - 1:
            y = _maxpool4(y)
        if i >= DEPTH - 3:
            ys.append(y)
        act = y

    # ys[0]: (16, 8) cols = quadrant*2 + b ; ys[1]: (16, 2) ; ys[2]: (64, 2) cols = b
    # Put (quadrant, channel) on rows for the level-0 transposed conv: row = q*16+c.
    y0 = jnp.concatenate([ys[0][:, 2 * q:2 * q + 2] for q in range(4)], axis=0)
    y_lvls = [y0, ys[1], ys[2]]

    comb = d_ref[D_COMB_OFF:D_COMB_OFF + 4, :]      # (4, 128) combine column vectors

    mask_outs = []
    cntr_outs = []
    for l in range(3):
        a = u_ref[U_A_OFF[l]:U_A_OFF[l] + U_A_ROWS[l], :]    # (C', 1024) packed weights
        tb = u_ref[U_TB_OFF[l]:U_TB_OFF[l] + 1, :]           # (1, 1024) transconv bias
        # Duplicate the batch columns so rows of the dot are (oc, b): [b0,b1,b0,b1].
        y4 = jnp.concatenate([y_lvls[l], y_lvls[l]], axis=1)  # (C', 4)
        # ConvTranspose2d(k=s=K) for BOTH heads and BOTH out-channels in ONE dot,
        # contracting the channel axis directly (no transpose of the activations).
        p = lax.dot_general(y4, a, (((0,), (0,)), ((), ())),
                            preferred_element_type=jnp.float32)   # (4, 1024)
        u = jnp.maximum(p + tb, 0.0)
        # Fused Conv2d(2,2,1) + ReLU per head: pure broadcast-FMA, rows are (oc, b).
        bm = (l * 2 + 0) * 3
        bc = (l * 2 + 1) * 3
        m = jnp.maximum(comb[:, bm:bm + 1] * u[:, 0:HW]
                        + comb[:, bm + 1:bm + 2] * u[:, HW:2 * HW]
                        + comb[:, bm + 2:bm + 3], 0.0)           # (4, 256)
        c_ = jnp.maximum(comb[:, bc:bc + 1] * u[:, 2 * HW:3 * HW]
                         + comb[:, bc + 1:bc + 2] * u[:, 3 * HW:4 * HW]
                         + comb[:, bc + 2:bc + 3], 0.0)          # (4, 256)
        mask_outs.append(m)
        cntr_outs.append(c_)

    mask = mask_outs[0] + mask_outs[1] + mask_outs[2]
    cntr = cntr_outs[0] + cntr_outs[1] + cntr_outs[2]
    # Single (32, 256) output slab: [mask, cntr, m0, m1, m2, c0, c1, c2] x 4 rows.
    o_ref[...] = jnp.concatenate([mask, cntr] + mask_outs + cntr_outs, axis=0)


# ----------------------------- host-side packing ----------------------------- #

def _pack_down_slab(params):
    """(120, 128) slab: per level rows [off:off+Cout], cols [0:Cin]=W, 16=b, 17=gamma,
    18=beta; rows 112:116 hold the 1x1-conv combine column vectors (rows = (oc, b))."""
    dslab = jnp.zeros((D_ROWS, 128), jnp.float32)
    for i, p in enumerate(params["down"]):
        co, ci = D_COUT[i], D_CIN[i]
        off = D_OFF[i]
        dslab = dslab.at[off:off + co, 0:ci].set(p["w"].reshape(co, ci))
        dslab = dslab.at[off:off + co, D_BIAS_COL].set(p["b"])
        dslab = dslab.at[off:off + co, D_GAMMA_COL].set(p["gamma"])
        dslab = dslab.at[off:off + co, D_BETA_COL].set(p["beta"])
    for l in range(3):
        for h, name in enumerate(("up_mask", "up_cntr")):
            p = params[name][l]
            cw = p["cw"].reshape(2, 2)
            base = (l * 2 + h) * 3
            rows = slice(D_COMB_OFF, D_COMB_OFF + 2 * N_BATCH)
            dslab = dslab.at[rows, base + 0].set(jnp.repeat(cw[:, 0], N_BATCH))
            dslab = dslab.at[rows, base + 1].set(jnp.repeat(cw[:, 1], N_BATCH))
            dslab = dslab.at[rows, base + 2].set(jnp.repeat(p["cb"], N_BATCH))
    return dslab


def _pack_up_slab(params):
    """(168, 1024) slab holding, per up level, the transposed-conv weights of both
    heads / both out-channels packed as (C', 1024) with columns
    [mask_ic0 | mask_ic1 | cntr_ic0 | cntr_ic1] x 256 output pixels (row-major h*16+w),
    plus one (1, 1024) bias row per level.  For level 0 the 2x2->four-8x8-patch
    scatter is folded in host-side (rows indexed by quadrant*16 + channel)."""
    rq = jnp.asarray(_RQ)                                     # (4, 64, 256)
    uslab = jnp.zeros((U_ROWS, U_COLS), jnp.float32)
    for l in range(3):
        tws = [params[name][l]["tw"] for name in ("up_mask", "up_cntr")]
        tbs = [params[name][l]["tb"] for name in ("up_mask", "up_cntr")]
        c = tws[0].shape[0]
        if l == 0:
            # (C,2,8,8): scatter patch elems to 16x16 pixels per quadrant.
            ts = [jnp.einsum('cir,qrs->qcis', tw.reshape(c, 2, 64), rq)
                  for tw in tws]                              # each (4, C, 2, 256)
            a = jnp.concatenate(ts, axis=2).reshape(4 * c, U_COLS)
        else:
            # (C,2,16,16): the single K=16 patch IS the 16x16 output.
            ts = [tw.reshape(c, 2, HW) for tw in tws]
            a = jnp.concatenate(ts, axis=1).reshape(c, U_COLS)
        uslab = uslab.at[U_A_OFF[l]:U_A_OFF[l] + a.shape[0], :].set(a)
        tb_row = jnp.repeat(jnp.concatenate(tbs), HW)[None, :]  # (1, 1024)
        uslab = uslab.at[U_TB_OFF[l]:U_TB_OFF[l] + 1, :].set(tb_row)
    return uslab


# ------------------------------- full forward ------------------------------- #

def init_params(key, in_channels=IN_CH, depth=DEPTH, wf=WF):
    params = {"down": [], "up_mask": [], "up_cntr": []}
    prev = in_channels
    outs = []
    for i in range(depth):
        out_c = prev if i == depth - 2 else 2 ** (wf + i)
        key, k1, k2, k3, k4 = jax.random.split(key, 5)
        params["down"].append(dict(
            w=0.1 * jax.random.normal(k1, (out_c, prev, 1, 1), jnp.float32),
            b=0.1 * jax.random.normal(k2, (out_c,), jnp.float32),
            gamma=1.0 + 0.1 * jax.random.normal(k3, (out_c,), jnp.float32),
            beta=0.1 * jax.random.normal(k4, (out_c,), jnp.float32),
        ))
        outs.append(out_c)
        prev = out_c

    scale_factor = depth + 3
    for i in range(depth):
        if i < depth - 3:
            continue
        if i < depth - 1:
            up_kern = scale_factor * 2 ** (i - 2)
        else:
            up_kern = scale_factor * 2 ** (i - 3)
        up_kern = int(up_kern)
        c = outs[i]
        for name in ("up_mask", "up_cntr"):
            key, k1, k2, k3, k4 = jax.random.split(key, 5)
            params[name].append(dict(
                tw=0.1 * jax.random.normal(k1, (c, 2, up_kern, up_kern), jnp.float32),
                tb=0.1 * jax.random.normal(k2, (2,), jnp.float32),
                cw=0.1 * jax.random.normal(k3, (2, 2, 1, 1), jnp.float32),
                cb=0.1 * jax.random.normal(k4, (2,), jnp.float32),
            ))
    return params


@jax.jit
def dcan_forward(params, x):
    n, c, h, w = x.shape
    assert (n, c, h, w) == (N_BATCH, IN_CH, OUT_DIM, OUT_DIM)

    # NCHW -> channel-major (C, N*H*W) with pixels in pool-phase-block order.
    x_flat = jnp.transpose(x.astype(jnp.float32), (1, 0, 2, 3)).reshape(c, n * h * w)
    x_k = x_flat[:, _PIX_SRC]

    dslab = _pack_down_slab(params)
    uslab = _pack_up_slab(params)

    slab = pl.pallas_call(
        _dcan_kernel,
        out_shape=jax.ShapeDtypeStruct((32, HW), jnp.float32),
        in_specs=[pl.BlockSpec(memory_space=pltpu.MemorySpace.VMEM)] * 3,
        out_specs=pl.BlockSpec(memory_space=pltpu.MemorySpace.VMEM),
    )(x_k, dslab, uslab)

    # slab rows = block*4 + (oc*2 + b); blocks = [mask, cntr, m0, m1, m2, c0, c1, c2];
    # columns = h*16 + w.  Pure layout plumbing back to NCHW.
    parts = jnp.transpose(slab.reshape(8, 2, n, h, w), (0, 2, 1, 3, 4))
    mask, cntr = parts[0], parts[1]
    mask_outs = [parts[2 + l] for l in range(3)]
    cntr_outs = [parts[5 + l] for l in range(3)]
    return mask, cntr, list(zip(mask_outs, cntr_outs))


# ----------------------------------- main ------------------------------------ #

if __name__ == "__main__":
    key = jax.random.PRNGKey(0)
    kp, kx = jax.random.split(key)

    params = init_params(kp)
    x = jax.random.normal(kx, (N_BATCH, IN_CH, OUT_DIM, OUT_DIM), jnp.float32)

    mask, cntr, interms = dcan_forward(params, x)

    jax.block_until_ready(mask)
    jax.block_until_ready(cntr)
    for m, c in interms:
        jax.block_until_ready(m)
        jax.block_until_ready(c)

    assert mask.shape == (N_BATCH, 2, OUT_DIM, OUT_DIM)
    assert cntr.shape == (N_BATCH, 2, OUT_DIM, OUT_DIM)
    assert len(interms) == 3
    print("KERNEL_OK")
</pallas_src>

<mosaic_0001>
module attributes {stable_mosaic.version = 11 : i64} {
  func.func @_dcan_kernel(%arg0: memref<4x512xf32, #tpu.memory_space<vmem>>, %arg1: memref<120x128xf32, #tpu.memory_space<vmem>>, %arg2: memref<168x1024xf32, #tpu.memory_space<vmem>>, %arg3: memref<32x256xf32, #tpu.memory_space<vmem>>) attributes {dimension_semantics = [], scalar_prefetch = 0 : i64, scratch_operands = 0 : i64, tpu.core_type = #tpu.core_type<tc>} {
    %c0 = arith.constant 0 : index
    %c0_0 = arith.constant 0 : index
    %0 = vector.load %arg0[%c0, %c0_0] : memref<4x512xf32, #tpu.memory_space<vmem>>, vector<4x512xf32>
    %c0_1 = arith.constant 0 : index
    %c0_2 = arith.constant 0 : index
    %1 = vector.load %arg1[%c0_1, %c0_2] : memref<120x128xf32, #tpu.memory_space<vmem>>, vector<4x128xf32>
    %2 = vector.extract_strided_slice %1 {offsets = [0, 0], sizes = [4, 1], strides = [1, 1]} : vector<4x128xf32> to vector<4x1xf32>
    %3 = vector.extract_strided_slice %0 {offsets = [0, 0], sizes = [1, 512], strides = [1, 1]} : vector<4x512xf32> to vector<1x512xf32>
    %4 = vector.broadcast %2 : vector<4x1xf32> to vector<4x512xf32>
    %5 = vector.broadcast %3 : vector<1x512xf32> to vector<4x512xf32>
    %6 = arith.mulf %4, %5 : vector<4x512xf32>
    %7 = vector.extract_strided_slice %1 {offsets = [0, 1], sizes = [4, 1], strides = [1, 1]} : vector<4x128xf32> to vector<4x1xf32>
    %8 = vector.extract_strided_slice %0 {offsets = [1, 0], sizes = [1, 512], strides = [1, 1]} : vector<4x512xf32> to vector<1x512xf32>
    %9 = vector.broadcast %7 : vector<4x1xf32> to vector<4x512xf32>
    %10 = vector.broadcast %8 : vector<1x512xf32> to vector<4x512xf32>
    %11 = arith.mulf %9, %10 : vector<4x512xf32>
    %12 = vector.extract_strided_slice %1 {offsets = [0, 2], sizes = [4, 1], strides = [1, 1]} : vector<4x128xf32> to vector<4x1xf32>
    %13 = vector.extract_strided_slice %0 {offsets = [2, 0], sizes = [1, 512], strides = [1, 1]} : vector<4x512xf32> to vector<1x512xf32>
    %14 = vector.broadcast %12 : vector<4x1xf32> to vector<4x512xf32>
    %15 = vector.broadcast %13 : vector<1x512xf32> to vector<4x512xf32>
    %16 = arith.mulf %14, %15 : vector<4x512xf32>
    %17 = vector.extract_strided_slice %1 {offsets = [0, 3], sizes = [4, 1], strides = [1, 1]} : vector<4x128xf32> to vector<4x1xf32>
    %18 = vector.extract_strided_slice %0 {offsets = [3, 0], sizes = [1, 512], strides = [1, 1]} : vector<4x512xf32> to vector<1x512xf32>
    %19 = vector.broadcast %17 : vector<4x1xf32> to vector<4x512xf32>
    %20 = vector.broadcast %18 : vector<1x512xf32> to vector<4x512xf32>
    %21 = arith.mulf %19, %20 : vector<4x512xf32>
    %22 = arith.addf %6, %11 : vector<4x512xf32>
    %23 = arith.addf %16, %21 : vector<4x512xf32>
    %24 = arith.addf %22, %23 : vector<4x512xf32>
    %25 = vector.extract_strided_slice %1 {offsets = [0, 16], sizes = [4, 1], strides = [1, 1]} : vector<4x128xf32> to vector<4x1xf32>
    %26 = vector.broadcast %25 : vector<4x1xf32> to vector<4x512xf32>
    %27 = arith.addf %24, %26 : vector<4x512xf32>
    %cst = arith.constant 0.000000e+00 : f32
    %28 = vector.broadcast %cst : f32 to vector<4x512xf32>
    %29 = arith.maximumf %27, %28 : vector<4x512xf32>
    %cst_3 = arith.constant dense<0.000000e+00> : vector<4xf32>
    %30 = vector.multi_reduction <add>, %29, %cst_3 [1] : vector<4x512xf32> to vector<4xf32>
    %31 = vector.shape_cast %30 : vector<4xf32> to vector<4x1xf32>
    %cst_4 = arith.constant 5.120000e+02 : f32
    %32 = vector.broadcast %cst_4 : f32 to vector<4x1xf32>
    %33 = arith.divf %31, %32 : vector<4x1xf32>
    %34 = arith.mulf %29, %29 : vector<4x512xf32>
    %cst_5 = arith.constant dense<0.000000e+00> : vector<4xf32>
    %35 = vector.multi_reduction <add>, %34, %cst_5 [1] : vector<4x512xf32> to vector<4xf32>
    %36 = vector.shape_cast %35 : vector<4xf32> to vector<4x1xf32>
    %cst_6 = arith.constant 5.120000e+02 : f32
    %37 = vector.broadcast %cst_6 : f32 to vector<4x1xf32>
    %38 = arith.divf %36, %37 : vector<4x1xf32>
    %39 = arith.mulf %33, %33 : vector<4x1xf32>
    %40 = arith.subf %38, %39 : vector<4x1xf32>
    %cst_7 = arith.constant 0.000000e+00 : f32
    %41 = vector.broadcast %cst_7 : f32 to vector<4x1xf32>
    %42 = arith.maximumf %40, %41 : vector<4x1xf32>
    %43 = vector.extract_strided_slice %1 {offsets = [0, 17], sizes = [4, 1], strides = [1, 1]} : vector<4x128xf32> to vector<4x1xf32>
    %cst_8 = arith.constant 9.99999974E-6 : f32
    %44 = vector.broadcast %cst_8 : f32 to vector<4x1xf32>
    %45 = arith.addf %42, %44 : vector<4x1xf32>
    %46 = math.rsqrt %45 : vector<4x1xf32>
    %47 = arith.mulf %43, %46 : vector<4x1xf32>
    %48 = vector.extract_strided_slice %1 {offsets = [0, 18], sizes = [4, 1], strides = [1, 1]} : vector<4x128xf32> to vector<4x1xf32>
    %49 = arith.mulf %33, %47 : vector<4x1xf32>
    %50 = arith.subf %48, %49 : vector<4x1xf32>
    %51 = vector.broadcast %47 : vector<4x1xf32> to vector<4x512xf32>
    %52 = arith.mulf %29, %51 : vector<4x512xf32>
    %53 = vector.broadcast %50 : vector<4x1xf32> to vector<4x512xf32>
    %54 = arith.addf %52, %53 : vector<4x512xf32>
    %55 = vector.extract_strided_slice %54 {offsets = [0, 0], sizes = [4, 128], strides = [1, 1]} : vector<4x512xf32> to vector<4x128xf32>
    %56 = vector.extract_strided_slice %54 {offsets = [0, 128], sizes = [4, 128], strides = [1, 1]} : vector<4x512xf32> to vector<4x128xf32>
    %57 = arith.maximumf %55, %56 : vector<4x128xf32>
    %58 = vector.extract_strided_slice %54 {offsets = [0, 256], sizes = [4, 128], strides = [1, 1]} : vector<4x512xf32> to vector<4x128xf32>
    %59 = vector.extract_strided_slice %54 {offsets = [0, 384], sizes = [4, 128], strides = [1, 1]} : vector<4x512xf32> to vector<4x128xf32>
    %60 = arith.maximumf %58, %59 : vector<4x128xf32>
    %61 = arith.maximumf %57, %60 : vector<4x128xf32>
    %c8 = arith.constant 8 : index
    %c0_9 = arith.constant 0 : index
    %62 = vector.load %arg1[%c8, %c0_9] : memref<120x128xf32, #tpu.memory_space<vmem>>, vector<8x128xf32>
    %63 = vector.extract_strided_slice %62 {offsets = [0, 0], sizes = [8, 1], strides = [1, 1]} : vector<8x128xf32> to vector<8x1xf32>
    %64 = vector.extract_strided_slice %61 {offsets = [0, 0], sizes = [1, 128], strides = [1, 1]} : vector<4x128xf32> to vector<1x128xf32>
    %65 = vector.broadcast %63 : vector<8x1xf32> to vector<8x128xf32>
    %66 = vector.broadcast %64 : vector<1x128xf32> to vector<8x128xf32>
    %67 = arith.mulf %65, %66 : vector<8x128xf32>
    %68 = vector.extract_strided_slice %62 {offsets = [0, 1], sizes = [8, 1], strides = [1, 1]} : vector<8x128xf32> to vector<8x1xf32>
    %69 = vector.extract_strided_slice %61 {offsets = [1, 0], sizes = [1, 128], strides = [1, 1]} : vector<4x128xf32> to vector<1x128xf32>
    %70 = vector.broadcast %68 : vector<8x1xf32> to vector<8x128xf32>
    %71 = vector.broadcast %69 : vector<1x128xf32> to vector<8x128xf32>
    %72 = arith.mulf %70, %71 : vector<8x128xf32>
    %73 = vector.extract_strided_slice %62 {offsets = [0, 2], sizes = [8, 1], strides = [1, 1]} : vector<8x128xf32> to vector<8x1xf32>
    %74 = vector.extract_strided_slice %61 {offsets = [2, 0], sizes = [1, 128], strides = [1, 1]} : vector<4x128xf32> to vector<1x128xf32>
    %75 = vector.broadcast %73 : vector<8x1xf32> to vector<8x128xf32>
    %76 = vector.broadcast %74 : vector<1x128xf32> to vector<8x128xf32>
    %77 = arith.mulf %75, %76 : vector<8x128xf32>
    %78 = vector.extract_strided_slice %62 {offsets = [0, 3], sizes = [8, 1], strides = [1, 1]} : vector<8x128xf32> to vector<8x1xf32>
    %79 = vector.extract_strided_slice %61 {offsets = [3, 0], sizes = [1, 128], strides = [1, 1]} : vector<4x128xf32> to vector<1x128xf32>
    %80 = vector.broadcast %78 : vector<8x1xf32> to vector<8x128xf32>
    %81 = vector.broadcast %79 : vector<1x128xf32> to vector<8x128xf32>
    %82 = arith.mulf %80, %81 : vector<8x128xf32>
    %83 = arith.addf %67, %72 : vector<8x128xf32>
    %84 = arith.addf %77, %82 : vector<8x128xf32>
    %85 = arith.addf %83, %84 : vector<8x128xf32>
    %86 = vector.extract_strided_slice %62 {offsets = [0, 16], sizes = [8, 1], strides = [1, 1]} : vector<8x128xf32> to vector<8x1xf32>
    %87 = vector.broadcast %86 : vector<8x1xf32> to vector<8x128xf32>
    %88 = arith.addf %85, %87 : vector<8x128xf32>
    %cst_10 = arith.constant 0.000000e+00 : f32
    %89 = vector.broadcast %cst_10 : f32 to vector<8x128xf32>
    %90 = arith.maximumf %88, %89 : vector<8x128xf32>
    %cst_11 = arith.constant dense<0.000000e+00> : vector<8xf32>
    %91 = vector.multi_reduction <add>, %90, %cst_11 [1] : vector<8x128xf32> to vector<8xf32>
    %92 = vector.shape_cast %91 : vector<8xf32> to vector<8x1xf32>
    %cst_12 = arith.constant 1.280000e+02 : f32
    %93 = vector.broadcast %cst_12 : f32 to vector<8x1xf32>
    %94 = arith.divf %92, %93 : vector<8x1xf32>
    %95 = arith.mulf %90, %90 : vector<8x128xf32>
    %cst_13 = arith.constant dense<0.000000e+00> : vector<8xf32>
    %96 = vector.multi_reduction <add>, %95, %cst_13 [1] : vector<8x128xf32> to vector<8xf32>
    %97 = vector.shape_cast %96 : vector<8xf32> to vector<8x1xf32>
    %cst_14 = arith.constant 1.280000e+02 : f32
    %98 = vector.broadcast %cst_14 : f32 to vector<8x1xf32>
    %99 = arith.divf %97, %98 : vector<8x1xf32>
    %100 = arith.mulf %94, %94 : vector<8x1xf32>
    %101 = arith.subf %99, %100 : vector<8x1xf32>
    %cst_15 = arith.constant 0.000000e+00 : f32
    %102 = vector.broadcast %cst_15 : f32 to vector<8x1xf32>
    %103 = arith.maximumf %101, %102 : vector<8x1xf32>
    %104 = vector.extract_strided_slice %62 {offsets = [0, 17], sizes = [8, 1], strides = [1, 1]} : vector<8x128xf32> to vector<8x1xf32>
    %cst_16 = arith.constant 9.99999974E-6 : f32
    %105 = vector.broadcast %cst_16 : f32 to vector<8x1xf32>
    %106 = arith.addf %103, %105 : vector<8x1xf32>
    %107 = math.rsqrt %106 : vector<8x1xf32>
    %108 = arith.mulf %104, %107 : vector<8x1xf32>
    %109 = vector.extract_strided_slice %62 {offsets = [0, 18], sizes = [8, 1], strides = [1, 1]} : vector<8x128xf32> to vector<8x1xf32>
    %110 = arith.mulf %94, %108 : vector<8x1xf32>
    %111 = arith.subf %109, %110 : vector<8x1xf32>
    %112 = vector.broadcast %108 : vector<8x1xf32> to vector<8x128xf32>
    %113 = arith.mulf %90, %112 : vector<8x128xf32>
    %114 = vector.broadcast %111 : vector<8x1xf32> to vector<8x128xf32>
    %115 = arith.addf %113, %114 : vector<8x128xf32>
    %116 = vector.extract_strided_slice %115 {offsets = [0, 0], sizes = [8, 32], strides = [1, 1]} : vector<8x128xf32> to vector<8x32xf32>
    %117 = vector.extract_strided_slice %115 {offsets = [0, 32], sizes = [8, 32], strides = [1, 1]} : vector<8x128xf32> to vector<8x32xf32>
    %118 = arith.maximumf %116, %117 : vector<8x32xf32>
    %119 = vector.extract_strided_slice %115 {offsets = [0, 64], sizes = [8, 32], strides = [1, 1]} : vector<8x128xf32> to vector<8x32xf32>
    %120 = vector.extract_strided_slice %115 {offsets = [0, 96], sizes = [8, 32], strides = [1, 1]} : vector<8x128xf32> to vector<8x32xf32>
    %121 = arith.maximumf %119, %120 : vector<8x32xf32>
    %122 = arith.maximumf %118, %121 : vector<8x32xf32>
    %c16 = arith.constant 16 : index
    %c0_17 = arith.constant 0 : index
    %123 = vector.load %arg1[%c16, %c0_17] : memref<120x128xf32, #tpu.memory_space<vmem>>, vector<16x128xf32>
    %124 = vector.extract_strided_slice %123 {offsets = [0, 0], sizes = [16, 1], strides = [1, 1]} : vector<16x128xf32> to vector<16x1xf32>
    %125 = vector.extract_strided_slice %122 {offsets = [0, 0], sizes = [1, 32], strides = [1, 1]} : vector<8x32xf32> to vector<1x32xf32>
    %126 = vector.broadcast %124 : vector<16x1xf32> to vector<16x32xf32>
    %127 = vector.broadcast %125 : vector<1x32xf32> to vector<16x32xf32>
    %128 = arith.mulf %126, %127 : vector<16x32xf32>
    %129 = vector.extract_strided_slice %123 {offsets = [0, 1], sizes = [16, 1], strides = [1, 1]} : vector<16x128xf32> to vector<16x1xf32>
    %130 = vector.extract_strided_slice %122 {offsets = [1, 0], sizes = [1, 32], strides = [1, 1]} : vector<8x32xf32> to vector<1x32xf32>
    %131 = vector.broadcast %129 : vector<16x1xf32> to vector<16x32xf32>
    %132 = vector.broadcast %130 : vector<1x32xf32> to vector<16x32xf32>
    %133 = arith.mulf %131, %132 : vector<16x32xf32>
    %134 = vector.extract_strided_slice %123 {offsets = [0, 2], sizes = [16, 1], strides = [1, 1]} : vector<16x128xf32> to vector<16x1xf32>
    %135 = vector.extract_strided_slice %122 {offsets = [2, 0], sizes = [1, 32], strides = [1, 1]} : vector<8x32xf32> to vector<1x32xf32>
    %136 = vector.broadcast %134 : vector<16x1xf32> to vector<16x32xf32>
    %137 = vector.broadcast %135 : vector<1x32xf32> to vector<16x32xf32>
    %138 = arith.mulf %136, %137 : vector<16x32xf32>
    %139 = vector.extract_strided_slice %123 {offsets = [0, 3], sizes = [16, 1], strides = [1, 1]} : vector<16x128xf32> to vector<16x1xf32>
    %140 = vector.extract_strided_slice %122 {offsets = [3, 0], sizes = [1, 32], strides = [1, 1]} : vector<8x32xf32> to vector<1x32xf32>
    %141 = vector.broadcast %139 : vector<16x1xf32> to vector<16x32xf32>
    %142 = vector.broadcast %140 : vector<1x32xf32> to vector<16x32xf32>
    %143 = arith.mulf %141, %142 : vector<16x32xf32>
    %144 = vector.extract_strided_slice %123 {offsets = [0, 4], sizes = [16, 1], strides = [1, 1]} : vector<16x128xf32> to vector<16x1xf32>
    %145 = vector.extract_strided_slice %122 {offsets = [4, 0], sizes = [1, 32], strides = [1, 1]} : vector<8x32xf32> to vector<1x32xf32>
    %146 = vector.broadcast %144 : vector<16x1xf32> to vector<16x32xf32>
    %147 = vector.broadcast %145 : vector<1x32xf32> to vector<16x32xf32>
    %148 = arith.mulf %146, %147 : vector<16x32xf32>
    %149 = vector.extract_strided_slice %123 {offsets = [0, 5], sizes = [16, 1], strides = [1, 1]} : vector<16x128xf32> to vector<16x1xf32>
    %150 = vector.extract_strided_slice %122 {offsets = [5, 0], sizes = [1, 32], strides = [1, 1]} : vector<8x32xf32> to vector<1x32xf32>
    %151 = vector.broadcast %149 : vector<16x1xf32> to vector<16x32xf32>
    %152 = vector.broadcast %150 : vector<1x32xf32> to vector<16x32xf32>
    %153 = arith.mulf %151, %152 : vector<16x32xf32>
    %154 = vector.extract_strided_slice %123 {offsets = [0, 6], sizes = [16, 1], strides = [1, 1]} : vector<16x128xf32> to vector<16x1xf32>
    %155 = vector.extract_strided_slice %122 {offsets = [6, 0], sizes = [1, 32], strides = [1, 1]} : vector<8x32xf32> to vector<1x32xf32>
    %156 = vector.broadcast %154 : vector<16x1xf32> to vector<16x32xf32>
    %157 = vector.broadcast %155 : vector<1x32xf32> to vector<16x32xf32>
    %158 = arith.mulf %156, %157 : vector<16x32xf32>
    %159 = vector.extract_strided_slice %123 {offsets = [0, 7], sizes = [16, 1], strides = [1, 1]} : vector<16x128xf32> to vector<16x1xf32>
    %160 = vector.extract_strided_slice %122 {offsets = [7, 0], sizes = [1, 32], strides = [1, 1]} : vector<8x32xf32> to vector<1x32xf32>
    %161 = vector.broadcast %159 : vector<16x1xf32> to vector<16x32xf32>
    %162 = vector.broadcast %160 : vector<1x32xf32> to vector<16x32xf32>
    %163 = arith.mulf %161, %162 : vector<16x32xf32>
    %164 = arith.addf %128, %133 : vector<16x32xf32>
    %165 = arith.addf %138, %143 : vector<16x32xf32>
    %166 = arith.addf %148, %153 : vector<16x32xf32>
    %167 = arith.addf %158, %163 : vector<16x32xf32>
    %168 = arith.addf %164, %165 : vector<16x32xf32>
    %169 = arith.addf %166, %167 : vector<16x32xf32>
    %170 = arith.addf %168, %169 : vector<16x32xf32>
    %171 = vector.extract_strided_slice %123 {offsets = [0, 16], sizes = [16, 1], strides = [1, 1]} : vector<16x128xf32> to vector<16x1xf32>
    %172 = vector.broadcast %171 : vector<16x1xf32> to vector<16x32xf32>
    %173 = arith.addf %170, %172 : vector<16x32xf32>
    %cst_18 = arith.constant 0.000000e+00 : f32
    %174 = vector.broadcast %cst_18 : f32 to vector<16x32xf32>
    %175 = arith.maximumf %173, %174 : vector<16x32xf32>
    %cst_19 = arith.constant dense<0.000000e+00> : vector<16xf32>
    %176 = vector.multi_reduction <add>, %175, %cst_19 [1] : vector<16x32xf32> to vector<16xf32>
    %177 = vector.shape_cast %176 : vector<16xf32> to vector<16x1xf32>
    %cst_20 = arith.constant 3.200000e+01 : f32
    %178 = vector.broadcast %cst_20 : f32 to vector<16x1xf32>
    %179 = arith.divf %177, %178 : vector<16x1xf32>
    %180 = arith.mulf %175, %175 : vector<16x32xf32>
    %cst_21 = arith.constant dense<0.000000e+00> : vector<16xf32>
    %181 = vector.multi_reduction <add>, %180, %cst_21 [1] : vector<16x32xf32> to vector<16xf32>
    %182 = vector.shape_cast %181 : vector<16xf32> to vector<16x1xf32>
    %cst_22 = arith.constant 3.200000e+01 : f32
    %183 = vector.broadcast %cst_22 : f32 to vector<16x1xf32>
    %184 = arith.divf %182, %183 : vector<16x1xf32>
    %185 = arith.mulf %179, %179 : vector<16x1xf32>
    %186 = arith.subf %184, %185 : vector<16x1xf32>
    %cst_23 = arith.constant 0.000000e+00 : f32
    %187 = vector.broadcast %cst_23 : f32 to vector<16x1xf32>
    %188 = arith.maximumf %186, %187 : vector<16x1xf32>
    %189 = vector.extract_strided_slice %123 {offsets = [0, 17], sizes = [16, 1], strides = [1, 1]} : vector<16x128xf32> to vector<16x1xf32>
    %cst_24 = arith.constant 9.99999974E-6 : f32
    %190 = vector.broadcast %cst_24 : f32 to vector<16x1xf32>
    %191 = arith.addf %188, %190 : vector<16x1xf32>
    %192 = math.rsqrt %191 : vector<16x1xf32>
    %193 = arith.mulf %189, %192 : vector<16x1xf32>
    %194 = vector.extract_strided_slice %123 {offsets = [0, 18], sizes = [16, 1], strides = [1, 1]} : vector<16x128xf32> to vector<16x1xf32>
    %195 = arith.mulf %179, %193 : vector<16x1xf32>
    %196 = arith.subf %194, %195 : vector<16x1xf32>
    %197 = vector.broadcast %193 : vector<16x1xf32> to vector<16x32xf32>
    %198 = arith.mulf %175, %197 : vector<16x32xf32>
    %199 = vector.broadcast %196 : vector<16x1xf32> to vector<16x32xf32>
    %200 = arith.addf %198, %199 : vector<16x32xf32>
    %201 = vector.extract_strided_slice %200 {offsets = [0, 0], sizes = [16, 8], strides = [1, 1]} : vector<16x32xf32> to vector<16x8xf32>
    %202 = vector.extract_strided_slice %200 {offsets = [0, 8], sizes = [16, 8], strides = [1, 1]} : vector<16x32xf32> to vector<16x8xf32>
    %203 = arith.maximumf %201, %202 : vector<16x8xf32>
    %204 = vector.extract_strided_slice %200 {offsets = [0, 16], sizes = [16, 8], strides = [1, 1]} : vector<16x32xf32> to vector<16x8xf32>
    %205 = vector.extract_strided_slice %200 {offsets = [0, 24], sizes = [16, 8], strides = [1, 1]} : vector<16x32xf32> to vector<16x8xf32>
    %206 = arith.maximumf %204, %205 : vector<16x8xf32>
    %207 = arith.maximumf %203, %206 : vector<16x8xf32>
    %c32 = arith.constant 32 : index
    %c0_25 = arith.constant 0 : index
    %208 = vector.load %arg1[%c32, %c0_25] : memref<120x128xf32, #tpu.memory_space<vmem>>, vector<16x128xf32>
    %209 = vector.extract_strided_slice %208 {offsets = [0, 0], sizes = [16, 1], strides = [1, 1]} : vector<16x128xf32> to vector<16x1xf32>
    %210 = vector.extract_strided_slice %207 {offsets = [0, 0], sizes = [1, 8], strides = [1, 1]} : vector<16x8xf32> to vector<1x8xf32>
    %211 = vector.broadcast %209 : vector<16x1xf32> to vector<16x8xf32>
    %212 = vector.broadcast %210 : vector<1x8xf32> to vector<16x8xf32>
    %213 = arith.mulf %211, %212 : vector<16x8xf32>
    %214 = vector.extract_strided_slice %208 {offsets = [0, 1], sizes = [16, 1], strides = [1, 1]} : vector<16x128xf32> to vector<16x1xf32>
    %215 = vector.extract_strided_slice %207 {offsets = [1, 0], sizes = [1, 8], strides = [1, 1]} : vector<16x8xf32> to vector<1x8xf32>
    %216 = vector.broadcast %214 : vector<16x1xf32> to vector<16x8xf32>
    %217 = vector.broadcast %215 : vector<1x8xf32> to vector<16x8xf32>
    %218 = arith.mulf %216, %217 : vector<16x8xf32>
    %219 = vector.extract_strided_slice %208 {offsets = [0, 2], sizes = [16, 1], strides = [1, 1]} : vector<16x128xf32> to vector<16x1xf32>
    %220 = vector.extract_strided_slice %207 {offsets = [2, 0], sizes = [1, 8], strides = [1, 1]} : vector<16x8xf32> to vector<1x8xf32>
    %221 = vector.broadcast %219 : vector<16x1xf32> to vector<16x8xf32>
    %222 = vector.broadcast %220 : vector<1x8xf32> to vector<16x8xf32>
    %223 = arith.mulf %221, %222 : vector<16x8xf32>
    %224 = vector.extract_strided_slice %208 {offsets = [0, 3], sizes = [16, 1], strides = [1, 1]} : vector<16x128xf32> to vector<16x1xf32>
    %225 = vector.extract_strided_slice %207 {offsets = [3, 0], sizes = [1, 8], strides = [1, 1]} : vector<16x8xf32> to vector<1x8xf32>
    %226 = vector.broadcast %224 : vector<16x1xf32> to vector<16x8xf32>
    %227 = vector.broadcast %225 : vector<1x8xf32> to vector<16x8xf32>
    %228 = arith.mulf %226, %227 : vector<16x8xf32>
    %229 = vector.extract_strided_slice %208 {offsets = [0, 4], sizes = [16, 1], strides = [1, 1]} : vector<16x128xf32> to vector<16x1xf32>
    %230 = vector.extract_strided_slice %207 {offsets = [4, 0], sizes = [1, 8], strides = [1, 1]} : vector<16x8xf32> to vector<1x8xf32>
    %231 = vector.broadcast %229 : vector<16x1xf32> to vector<16x8xf32>
    %232 = vector.broadcast %230 : vector<1x8xf32> to vector<16x8xf32>
    %233 = arith.mulf %231, %232 : vector<16x8xf32>
    %234 = vector.extract_strided_slice %208 {offsets = [0, 5], sizes = [16, 1], strides = [1, 1]} : vector<16x128xf32> to vector<16x1xf32>
    %235 = vector.extract_strided_slice %207 {offsets = [5, 0], sizes = [1, 8], strides = [1, 1]} : vector<16x8xf32> to vector<1x8xf32>
    %236 = vector.broadcast %234 : vector<16x1xf32> to vector<16x8xf32>
    %237 = vector.broadcast %235 : vector<1x8xf32> to vector<16x8xf32>
    %238 = arith.mulf %236, %237 : vector<16x8xf32>
    %239 = vector.extract_strided_slice %208 {offsets = [0, 6], sizes = [16, 1], strides = [1, 1]} : vector<16x128xf32> to vector<16x1xf32>
    %240 = vector.extract_strided_slice %207 {offsets = [6, 0], sizes = [1, 8], strides = [1, 1]} : vector<16x8xf32> to vector<1x8xf32>
    %241 = vector.broadcast %239 : vector<16x1xf32> to vector<16x8xf32>
    %242 = vector.broadcast %240 : vector<1x8xf32> to vector<16x8xf32>
    %243 = arith.mulf %241, %242 : vector<16x8xf32>
    %244 = vector.extract_strided_slice %208 {offsets = [0, 7], sizes = [16, 1], strides = [1, 1]} : vector<16x128xf32> to vector<16x1xf32>
    %245 = vector.extract_strided_slice %207 {offsets = [7, 0], sizes = [1, 8], strides = [1, 1]} : vector<16x8xf32> to vector<1x8xf32>
    %246 = vector.broadcast %244 : vector<16x1xf32> to vector<16x8xf32>
    %247 = vector.broadcast %245 : vector<1x8xf32> to vector<16x8xf32>
    %248 = arith.mulf %246, %247 : vector<16x8xf32>
    %249 = vector.extract_strided_slice %208 {offsets = [0, 8], sizes = [16, 1], strides = [1, 1]} : vector<16x128xf32> to vector<16x1xf32>
    %250 = vector.extract_strided_slice %207 {offsets = [8, 0], sizes = [1, 8], strides = [1, 1]} : vector<16x8xf32> to vector<1x8xf32>
    %251 = vector.broadcast %249 : vector<16x1xf32> to vector<16x8xf32>
    %252 = vector.broadcast %250 : vector<1x8xf32> to vector<16x8xf32>
    %253 = arith.mulf %251, %252 : vector<16x8xf32>
    %254 = vector.extract_strided_slice %208 {offsets = [0, 9], sizes = [16, 1], strides = [1, 1]} : vector<16x128xf32> to vector<16x1xf32>
    %255 = vector.extract_strided_slice %207 {offsets = [9, 0], sizes = [1, 8], strides = [1, 1]} : vector<16x8xf32> to vector<1x8xf32>
    %256 = vector.broadcast %254 : vector<16x1xf32> to vector<16x8xf32>
    %257 = vector.broadcast %255 : vector<1x8xf32> to vector<16x8xf32>
    %258 = arith.mulf %256, %257 : vector<16x8xf32>
    %259 = vector.extract_strided_slice %208 {offsets = [0, 10], sizes = [16, 1], strides = [1, 1]} : vector<16x128xf32> to vector<16x1xf32>
    %260 = vector.extract_strided_slice %207 {offsets = [10, 0], sizes = [1, 8], strides = [1, 1]} : vector<16x8xf32> to vector<1x8xf32>
    %261 = vector.broadcast %259 : vector<16x1xf32> to vector<16x8xf32>
    %262 = vector.broadcast %260 : vector<1x8xf32> to vector<16x8xf32>
    %263 = arith.mulf %261, %262 : vector<16x8xf32>
    %264 = vector.extract_strided_slice %208 {offsets = [0, 11], sizes = [16, 1], strides = [1, 1]} : vector<16x128xf32> to vector<16x1xf32>
    %265 = vector.extract_strided_slice %207 {offsets = [11, 0], sizes = [1, 8], strides = [1, 1]} : vector<16x8xf32> to vector<1x8xf32>
    %266 = vector.broadcast %264 : vector<16x1xf32> to vector<16x8xf32>
    %267 = vector.broadcast %265 : vector<1x8xf32> to vector<16x8xf32>
    %268 = arith.mulf %266, %267 : vector<16x8xf32>
    %269 = vector.extract_strided_slice %208 {offsets = [0, 12], sizes = [16, 1], strides = [1, 1]} : vector<16x128xf32> to vector<16x1xf32>
    %270 = vector.extract_strided_slice %207 {offsets = [12, 0], sizes = [1, 8], strides = [1, 1]} : vector<16x8xf32> to vector<1x8xf32>
    %271 = vector.broadcast %269 : vector<16x1xf32> to vector<16x8xf32>
    %272 = vector.broadcast %270 : vector<1x8xf32> to vector<16x8xf32>
    %273 = arith.mulf %271, %272 : vector<16x8xf32>
    %274 = vector.extract_strided_slice %208 {offsets = [0, 13], sizes = [16, 1], strides = [1, 1]} : vector<16x128xf32> to vector<16x1xf32>
    %275 = vector.extract_strided_slice %207 {offsets = [13, 0], sizes = [1, 8], strides = [1, 1]} : vector<16x8xf32> to vector<1x8xf32>
    %276 = vector.broadcast %274 : vector<16x1xf32> to vector<16x8xf32>
    %277 = vector.broadcast %275 : vector<1x8xf32> to vector<16x8xf32>
    %278 = arith.mulf %276, %277 : vector<16x8xf32>
    %279 = vector.extract_strided_slice %208 {offsets = [0, 14], sizes = [16, 1], strides = [1, 1]} : vector<16x128xf32> to vector<16x1xf32>
    %280 = vector.extract_strided_slice %207 {offsets = [14, 0], sizes = [1, 8], strides = [1, 1]} : vector<16x8xf32> to vector<1x8xf32>
    %281 = vector.broadcast %279 : vector<16x1xf32> to vector<16x8xf32>
    %282 = vector.broadcast %280 : vector<1x8xf32> to vector<16x8xf32>
    %283 = arith.mulf %281, %282 : vector<16x8xf32>
    %284 = vector.extract_strided_slice %208 {offsets = [0, 15], sizes = [16, 1], strides = [1, 1]} : vector<16x128xf32> to vector<16x1xf32>
    %285 = vector.extract_strided_slice %207 {offsets = [15, 0], sizes = [1, 8], strides = [1, 1]} : vector<16x8xf32> to vector<1x8xf32>
    %286 = vector.broadcast %284 : vector<16x1xf32> to vector<16x8xf32>
    %287 = vector.broadcast %285 : vector<1x8xf32> to vector<16x8xf32>
    %288 = arith.mulf %286, %287 : vector<16x8xf32>
    %289 = arith.addf %213, %218 : vector<16x8xf32>
    %290 = arith.addf %223, %228 : vector<16x8xf32>
    %291 = arith.addf %233, %238 : vector<16x8xf32>
    %292 = arith.addf %243, %248 : vector<16x8xf32>
    %293 = arith.addf %253, %258 : vector<16x8xf32>
    %294 = arith.addf %263, %268 : vector<16x8xf32>
    %295 = arith.addf %273, %278 : vector<16x8xf32>
    %296 = arith.addf %283, %288 : vector<16x8xf32>
    %297 = arith.addf %289, %290 : vector<16x8xf32>
    %298 = arith.addf %291, %292 : vector<16x8xf32>
    %299 = arith.addf %293, %294 : vector<16x8xf32>
    %300 = arith.addf %295, %296 : vector<16x8xf32>
    %301 = arith.addf %297, %298 : vector<16x8xf32>
    %302 = arith.addf %299, %300 : vector<16x8xf32>
    %303 = arith.addf %301, %302 : vector<16x8xf32>
    %304 = vector.extract_strided_slice %208 {offsets = [0, 16], sizes = [16, 1], strides = [1, 1]} : vector<16x128xf32> to vector<16x1xf32>
    %305 = vector.broadcast %304 : vector<16x1xf32> to vector<16x8xf32>
    %306 = arith.addf %303, %305 : vector<16x8xf32>
    %cst_26 = arith.constant 0.000000e+00 : f32
    %307 = vector.broadcast %cst_26 : f32 to vector<16x8xf32>
    %308 = arith.maximumf %306, %307 : vector<16x8xf32>
    %cst_27 = arith.constant dense<0.000000e+00> : vector<16xf32>
    %309 = vector.multi_reduction <add>, %308, %cst_27 [1] : vector<16x8xf32> to vector<16xf32>
    %310 = vector.shape_cast %309 : vector<16xf32> to vector<16x1xf32>
    %cst_28 = arith.constant 8.000000e+00 : f32
    %311 = vector.broadcast %cst_28 : f32 to vector<16x1xf32>
    %312 = arith.divf %310, %311 : vector<16x1xf32>
    %313 = arith.mulf %308, %308 : vector<16x8xf32>
    %cst_29 = arith.constant dense<0.000000e+00> : vector<16xf32>
    %314 = vector.multi_reduction <add>, %313, %cst_29 [1] : vector<16x8xf32> to vector<16xf32>
    %315 = vector.shape_cast %314 : vector<16xf32> to vector<16x1xf32>
    %cst_30 = arith.constant 8.000000e+00 : f32
    %316 = vector.broadcast %cst_30 : f32 to vector<16x1xf32>
    %317 = arith.divf %315, %316 : vector<16x1xf32>
    %318 = arith.mulf %312, %312 : vector<16x1xf32>
    %319 = arith.subf %317, %318 : vector<16x1xf32>
    %cst_31 = arith.constant 0.000000e+00 : f32
    %320 = vector.broadcast %cst_31 : f32 to vector<16x1xf32>
    %321 = arith.maximumf %319, %320 : vector<16x1xf32>
    %322 = vector.extract_strided_slice %208 {offsets = [0, 17], sizes = [16, 1], strides = [1, 1]} : vector<16x128xf32> to vector<16x1xf32>
    %cst_32 = arith.constant 9.99999974E-6 : f32
    %323 = vector.broadcast %cst_32 : f32 to vector<16x1xf32>
    %324 = arith.addf %321, %323 : vector<16x1xf32>
    %325 = math.rsqrt %324 : vector<16x1xf32>
    %326 = arith.mulf %322, %325 : vector<16x1xf32>
    %327 = vector.extract_strided_slice %208 {offsets = [0, 18], sizes = [16, 1], strides = [1, 1]} : vector<16x128xf32> to vector<16x1xf32>
    %328 = arith.mulf %312, %326 : vector<16x1xf32>
    %329 = arith.subf %327, %328 : vector<16x1xf32>
    %330 = vector.broadcast %326 : vector<16x1xf32> to vector<16x8xf32>
    %331 = arith.mulf %308, %330 : vector<16x8xf32>
    %332 = vector.broadcast %329 : vector<16x1xf32> to vector<16x8xf32>
    %333 = arith.addf %331, %332 : vector<16x8xf32>
    %334 = vector.extract_strided_slice %333 {offsets = [0, 0], sizes = [16, 2], strides = [1, 1]} : vector<16x8xf32> to vector<16x2xf32>
    %335 = vector.extract_strided_slice %333 {offsets = [0, 2], sizes = [16, 2], strides = [1, 1]} : vector<16x8xf32> to vector<16x2xf32>
    %336 = arith.maximumf %334, %335 : vector<16x2xf32>
    %337 = vector.extract_strided_slice %333 {offsets = [0, 4], sizes = [16, 2], strides = [1, 1]} : vector<16x8xf32> to vector<16x2xf32>
    %338 = vector.extract_strided_slice %333 {offsets = [0, 6], sizes = [16, 2], strides = [1, 1]} : vector<16x8xf32> to vector<16x2xf32>
    %339 = arith.maximumf %337, %338 : vector<16x2xf32>
    %340 = arith.maximumf %336, %339 : vector<16x2xf32>
    %c48 = arith.constant 48 : index
    %c0_33 = arith.constant 0 : index
    %341 = vector.load %arg1[%c48, %c0_33] : memref<120x128xf32, #tpu.memory_space<vmem>>, vector<64x128xf32>
    %342 = vector.extract_strided_slice %341 {offsets = [0, 0], sizes = [64, 1], strides = [1, 1]} : vector<64x128xf32> to vector<64x1xf32>
    %343 = vector.extract_strided_slice %340 {offsets = [0, 0], sizes = [1, 2], strides = [1, 1]} : vector<16x2xf32> to vector<1x2xf32>
    %344 = vector.broadcast %342 : vector<64x1xf32> to vector<64x2xf32>
    %345 = vector.broadcast %343 : vector<1x2xf32> to vector<64x2xf32>
    %346 = arith.mulf %344, %345 : vector<64x2xf32>
    %347 = vector.extract_strided_slice %341 {offsets = [0, 1], sizes = [64, 1], strides = [1, 1]} : vector<64x128xf32> to vector<64x1xf32>
    %348 = vector.extract_strided_slice %340 {offsets = [1, 0], sizes = [1, 2], strides = [1, 1]} : vector<16x2xf32> to vector<1x2xf32>
    %349 = vector.broadcast %347 : vector<64x1xf32> to vector<64x2xf32>
    %350 = vector.broadcast %348 : vector<1x2xf32> to vector<64x2xf32>
    %351 = arith.mulf %349, %350 : vector<64x2xf32>
    %352 = vector.extract_strided_slice %341 {offsets = [0, 2], sizes = [64, 1], strides = [1, 1]} : vector<64x128xf32> to vector<64x1xf32>
    %353 = vector.extract_strided_slice %340 {offsets = [2, 0], sizes = [1, 2], strides = [1, 1]} : vector<16x2xf32> to vector<1x2xf32>
    %354 = vector.broadcast %352 : vector<64x1xf32> to vector<64x2xf32>
    %355 = vector.broadcast %353 : vector<1x2xf32> to vector<64x2xf32>
    %356 = arith.mulf %354, %355 : vector<64x2xf32>
    %357 = vector.extract_strided_slice %341 {offsets = [0, 3], sizes = [64, 1], strides = [1, 1]} : vector<64x128xf32> to vector<64x1xf32>
    %358 = vector.extract_strided_slice %340 {offsets = [3, 0], sizes = [1, 2], strides = [1, 1]} : vector<16x2xf32> to vector<1x2xf32>
    %359 = vector.broadcast %357 : vector<64x1xf32> to vector<64x2xf32>
    %360 = vector.broadcast %358 : vector<1x2xf32> to vector<64x2xf32>
    %361 = arith.mulf %359, %360 : vector<64x2xf32>
    %362 = vector.extract_strided_slice %341 {offsets = [0, 4], sizes = [64, 1], strides = [1, 1]} : vector<64x128xf32> to vector<64x1xf32>
    %363 = vector.extract_strided_slice %340 {offsets = [4, 0], sizes = [1, 2], strides = [1, 1]} : vector<16x2xf32> to vector<1x2xf32>
    %364 = vector.broadcast %362 : vector<64x1xf32> to vector<64x2xf32>
    %365 = vector.broadcast %363 : vector<1x2xf32> to vector<64x2xf32>
    %366 = arith.mulf %364, %365 : vector<64x2xf32>
    %367 = vector.extract_strided_slice %341 {offsets = [0, 5], sizes = [64, 1], strides = [1, 1]} : vector<64x128xf32> to vector<64x1xf32>
    %368 = vector.extract_strided_slice %340 {offsets = [5, 0], sizes = [1, 2], strides = [1, 1]} : vector<16x2xf32> to vector<1x2xf32>
    %369 = vector.broadcast %367 : vector<64x1xf32> to vector<64x2xf32>
    %370 = vector.broadcast %368 : vector<1x2xf32> to vector<64x2xf32>
    %371 = arith.mulf %369, %370 : vector<64x2xf32>
    %372 = vector.extract_strided_slice %341 {offsets = [0, 6], sizes = [64, 1], strides = [1, 1]} : vector<64x128xf32> to vector<64x1xf32>
    %373 = vector.extract_strided_slice %340 {offsets = [6, 0], sizes = [1, 2], strides = [1, 1]} : vector<16x2xf32> to vector<1x2xf32>
    %374 = vector.broadcast %372 : vector<64x1xf32> to vector<64x2xf32>
    %375 = vector.broadcast %373 : vector<1x2xf32> to vector<64x2xf32>
    %376 = arith.mulf %374, %375 : vector<64x2xf32>
    %377 = vector.extract_strided_slice %341 {offsets = [0, 7], sizes = [64, 1], strides = [1, 1]} : vector<64x128xf32> to vector<64x1xf32>
    %378 = vector.extract_strided_slice %340 {offsets = [7, 0], sizes = [1, 2], strides = [1, 1]} : vector<16x2xf32> to vector<1x2xf32>
    %379 = vector.broadcast %377 : vector<64x1xf32> to vector<64x2xf32>
    %380 = vector.broadcast %378 : vector<1x2xf32> to vector<64x2xf32>
    %381 = arith.mulf %379, %380 : vector<64x2xf32>
    %382 = vector.extract_strided_slice %341 {offsets = [0, 8], sizes = [64, 1], strides = [1, 1]} : vector<64x128xf32> to vector<64x1xf32>
    %383 = vector.extract_strided_slice %340 {offsets = [8, 0], sizes = [1, 2], strides = [1, 1]} : vector<16x2xf32> to vector<1x2xf32>
    %384 = vector.broadcast %382 : vector<64x1xf32> to vector<64x2xf32>
    %385 = vector.broadcast %383 : vector<1x2xf32> to vector<64x2xf32>
    %386 = arith.mulf %384, %385 : vector<64x2xf32>
    %387 = vector.extract_strided_slice %341 {offsets = [0, 9], sizes = [64, 1], strides = [1, 1]} : vector<64x128xf32> to vector<64x1xf32>
    %388 = vector.extract_strided_slice %340 {offsets = [9, 0], sizes = [1, 2], strides = [1, 1]} : vector<16x2xf32> to vector<1x2xf32>
    %389 = vector.broadcast %387 : vector<64x1xf32> to vector<64x2xf32>
    %390 = vector.broadcast %388 : vector<1x2xf32> to vector<64x2xf32>
    %391 = arith.mulf %389, %390 : vector<64x2xf32>
    %392 = vector.extract_strided_slice %341 {offsets = [0, 10], sizes = [64, 1], strides = [1, 1]} : vector<64x128xf32> to vector<64x1xf32>
    %393 = vector.extract_strided_slice %340 {offsets = [10, 0], sizes = [1, 2], strides = [1, 1]} : vector<16x2xf32> to vector<1x2xf32>
    %394 = vector.broadcast %392 : vector<64x1xf32> to vector<64x2xf32>
    %395 = vector.broadcast %393 : vector<1x2xf32> to vector<64x2xf32>
    %396 = arith.mulf %394, %395 : vector<64x2xf32>
    %397 = vector.extract_strided_slice %341 {offsets = [0, 11], sizes = [64, 1], strides = [1, 1]} : vector<64x128xf32> to vector<64x1xf32>
    %398 = vector.extract_strided_slice %340 {offsets = [11, 0], sizes = [1, 2], strides = [1, 1]} : vector<16x2xf32> to vector<1x2xf32>
    %399 = vector.broadcast %397 : vector<64x1xf32> to vector<64x2xf32>
    %400 = vector.broadcast %398 : vector<1x2xf32> to vector<64x2xf32>
    %401 = arith.mulf %399, %400 : vector<64x2xf32>
    %402 = vector.extract_strided_slice %341 {offsets = [0, 12], sizes = [64, 1], strides = [1, 1]} : vector<64x128xf32> to vector<64x1xf32>
    %403 = vector.extract_strided_slice %340 {offsets = [12, 0], sizes = [1, 2], strides = [1, 1]} : vector<16x2xf32> to vector<1x2xf32>
    %404 = vector.broadcast %402 : vector<64x1xf32> to vector<64x2xf32>
    %405 = vector.broadcast %403 : vector<1x2xf32> to vector<64x2xf32>
    %406 = arith.mulf %404, %405 : vector<64x2xf32>
    %407 = vector.extract_strided_slice %341 {offsets = [0, 13], sizes = [64, 1], strides = [1, 1]} : vector<64x128xf32> to vector<64x1xf32>
    %408 = vector.extract_strided_slice %340 {offsets = [13, 0], sizes = [1, 2], strides = [1, 1]} : vector<16x2xf32> to vector<1x2xf32>
    %409 = vector.broadcast %407 : vector<64x1xf32> to vector<64x2xf32>
    %410 = vector.broadcast %408 : vector<1x2xf32> to vector<64x2xf32>
    %411 = arith.mulf %409, %410 : vector<64x2xf32>
    %412 = vector.extract_strided_slice %341 {offsets = [0, 14], sizes = [64, 1], strides = [1, 1]} : vector<64x128xf32> to vector<64x1xf32>
    %413 = vector.extract_strided_slice %340 {offsets = [14, 0], sizes = [1, 2], strides = [1, 1]} : vector<16x2xf32> to vector<1x2xf32>
    %414 = vector.broadcast %412 : vector<64x1xf32> to vector<64x2xf32>
    %415 = vector.broadcast %413 : vector<1x2xf32> to vector<64x2xf32>
    %416 = arith.mulf %414, %415 : vector<64x2xf32>
    %417 = vector.extract_strided_slice %341 {offsets = [0, 15], sizes = [64, 1], strides = [1, 1]} : vector<64x128xf32> to vector<64x1xf32>
    %418 = vector.extract_strided_slice %340 {offsets = [15, 0], sizes = [1, 2], strides = [1, 1]} : vector<16x2xf32> to vector<1x2xf32>
    %419 = vector.broadcast %417 : vector<64x1xf32> to vector<64x2xf32>
    %420 = vector.broadcast %418 : vector<1x2xf32> to vector<64x2xf32>
    %421 = arith.mulf %419, %420 : vector<64x2xf32>
    %422 = arith.addf %346, %351 : vector<64x2xf32>
    %423 = arith.addf %356, %361 : vector<64x2xf32>
    %424 = arith.addf %366, %371 : vector<64x2xf32>
    %425 = arith.addf %376, %381 : vector<64x2xf32>
    %426 = arith.addf %386, %391 : vector<64x2xf32>
    %427 = arith.addf %396, %401 : vector<64x2xf32>
    %428 = arith.addf %406, %411 : vector<64x2xf32>
    %429 = arith.addf %416, %421 : vector<64x2xf32>
    %430 = arith.addf %422, %423 : vector<64x2xf32>
    %431 = arith.addf %424, %425 : vector<64x2xf32>
    %432 = arith.addf %426, %427 : vector<64x2xf32>
    %433 = arith.addf %428, %429 : vector<64x2xf32>
    %434 = arith.addf %430, %431 : vector<64x2xf32>
    %435 = arith.addf %432, %433 : vector<64x2xf32>
    %436 = arith.addf %434, %435 : vector<64x2xf32>
    %437 = vector.extract_strided_slice %341 {offsets = [0, 16], sizes = [64, 1], strides = [1, 1]} : vector<64x128xf32> to vector<64x1xf32>
    %438 = vector.broadcast %437 : vector<64x1xf32> to vector<64x2xf32>
    %439 = arith.addf %436, %438 : vector<64x2xf32>
    %cst_34 = arith.constant 0.000000e+00 : f32
    %440 = vector.broadcast %cst_34 : f32 to vector<64x2xf32>
    %441 = arith.maximumf %439, %440 : vector<64x2xf32>
    %cst_35 = arith.constant dense<0.000000e+00> : vector<64xf32>
    %442 = vector.multi_reduction <add>, %441, %cst_35 [1] : vector<64x2xf32> to vector<64xf32>
    %443 = vector.shape_cast %442 : vector<64xf32> to vector<64x1xf32>
    %cst_36 = arith.constant 2.000000e+00 : f32
    %444 = vector.broadcast %cst_36 : f32 to vector<64x1xf32>
    %445 = arith.divf %443, %444 : vector<64x1xf32>
    %446 = arith.mulf %441, %441 : vector<64x2xf32>
    %cst_37 = arith.constant dense<0.000000e+00> : vector<64xf32>
    %447 = vector.multi_reduction <add>, %446, %cst_37 [1] : vector<64x2xf32> to vector<64xf32>
    %448 = vector.shape_cast %447 : vector<64xf32> to vector<64x1xf32>
    %cst_38 = arith.constant 2.000000e+00 : f32
    %449 = vector.broadcast %cst_38 : f32 to vector<64x1xf32>
    %450 = arith.divf %448, %449 : vector<64x1xf32>
    %451 = arith.mulf %445, %445 : vector<64x1xf32>
    %452 = arith.subf %450, %451 : vector<64x1xf32>
    %cst_39 = arith.constant 0.000000e+00 : f32
    %453 = vector.broadcast %cst_39 : f32 to vector<64x1xf32>
    %454 = arith.maximumf %452, %453 : vector<64x1xf32>
    %455 = vector.extract_strided_slice %341 {offsets = [0, 17], sizes = [64, 1], strides = [1, 1]} : vector<64x128xf32> to vector<64x1xf32>
    %cst_40 = arith.constant 9.99999974E-6 : f32
    %456 = vector.broadcast %cst_40 : f32 to vector<64x1xf32>
    %457 = arith.addf %454, %456 : vector<64x1xf32>
    %458 = math.rsqrt %457 : vector<64x1xf32>
    %459 = arith.mulf %455, %458 : vector<64x1xf32>
    %460 = vector.extract_strided_slice %341 {offsets = [0, 18], sizes = [64, 1], strides = [1, 1]} : vector<64x128xf32> to vector<64x1xf32>
    %461 = arith.mulf %445, %459 : vector<64x1xf32>
    %462 = arith.subf %460, %461 : vector<64x1xf32>
    %463 = vector.broadcast %459 : vector<64x1xf32> to vector<64x2xf32>
    %464 = arith.mulf %441, %463 : vector<64x2xf32>
    %465 = vector.broadcast %462 : vector<64x1xf32> to vector<64x2xf32>
    %466 = arith.addf %464, %465 : vector<64x2xf32>
    %467 = vector.extract_strided_slice %207 {offsets = [0, 0], sizes = [16, 2], strides = [1, 1]} : vector<16x8xf32> to vector<16x2xf32>
    %468 = vector.extract_strided_slice %207 {offsets = [0, 2], sizes = [16, 2], strides = [1, 1]} : vector<16x8xf32> to vector<16x2xf32>
    %469 = vector.extract_strided_slice %207 {offsets = [0, 4], sizes = [16, 2], strides = [1, 1]} : vector<16x8xf32> to vector<16x2xf32>
    %470 = vector.extract_strided_slice %207 {offsets = [0, 6], sizes = [16, 2], strides = [1, 1]} : vector<16x8xf32> to vector<16x2xf32>
    %471 = tpu.concatenate %467, %468, %469, %470 in 0 : vector<16x2xf32>, vector<16x2xf32>, vector<16x2xf32>, vector<16x2xf32> -> vector<64x2xf32>
    %c112 = arith.constant 112 : index
    %c0_41 = arith.constant 0 : index
    %472 = vector.load %arg1[%c112, %c0_41] : memref<120x128xf32, #tpu.memory_space<vmem>>, vector<4x128xf32>
    %c0_42 = arith.constant 0 : index
    %c0_43 = arith.constant 0 : index
    %473 = vector.load %arg2[%c0_42, %c0_43] : memref<168x1024xf32, #tpu.memory_space<vmem>>, vector<64x1024xf32>
    %c144 = arith.constant 144 : index
    %c0_44 = arith.constant 0 : index
    %474 = vector.load %arg2[%c144, %c0_44] : memref<168x1024xf32, #tpu.memory_space<vmem>>, vector<1x1024xf32>
    %475 = tpu.concatenate %471, %471 in 1 : vector<64x2xf32>, vector<64x2xf32> -> vector<64x4xf32>
    %cst_45 = arith.constant dense<0.000000e+00> : vector<4x1024xf32>
    %476 = tpu.matmul %475, %473, %cst_45 {dimension_numbers = #tpu.dot_dimension_numbers<[0], [0], [1], [1], [0, 1, 1, 1], [], []>} : vector<64x4xf32>, vector<64x1024xf32>, vector<4x1024xf32> -> vector<4x1024xf32>
    %477 = vector.broadcast %474 : vector<1x1024xf32> to vector<4x1024xf32>
    %478 = arith.addf %476, %477 : vector<4x1024xf32>
    %cst_46 = arith.constant 0.000000e+00 : f32
    %479 = vector.broadcast %cst_46 : f32 to vector<4x1024xf32>
    %480 = arith.maximumf %478, %479 : vector<4x1024xf32>
    %481 = vector.extract_strided_slice %472 {offsets = [0, 0], sizes = [4, 1], strides = [1, 1]} : vector<4x128xf32> to vector<4x1xf32>
    %482 = vector.extract_strided_slice %480 {offsets = [0, 0], sizes = [4, 256], strides = [1, 1]} : vector<4x1024xf32> to vector<4x256xf32>
    %483 = vector.broadcast %481 : vector<4x1xf32> to vector<4x256xf32>
    %484 = arith.mulf %483, %482 : vector<4x256xf32>
    %485 = vector.extract_strided_slice %472 {offsets = [0, 1], sizes = [4, 1], strides = [1, 1]} : vector<4x128xf32> to vector<4x1xf32>
    %486 = vector.extract_strided_slice %480 {offsets = [0, 256], sizes = [4, 256], strides = [1, 1]} : vector<4x1024xf32> to vector<4x256xf32>
    %487 = vector.broadcast %485 : vector<4x1xf32> to vector<4x256xf32>
    %488 = arith.mulf %487, %486 : vector<4x256xf32>
    %489 = arith.addf %484, %488 : vector<4x256xf32>
    %490 = vector.extract_strided_slice %472 {offsets = [0, 2], sizes = [4, 1], strides = [1, 1]} : vector<4x128xf32> to vector<4x1xf32>
    %491 = vector.broadcast %490 : vector<4x1xf32> to vector<4x256xf32>
    %492 = arith.addf %489, %491 : vector<4x256xf32>
    %cst_47 = arith.constant 0.000000e+00 : f32
    %493 = vector.broadcast %cst_47 : f32 to vector<4x256xf32>
    %494 = arith.maximumf %492, %493 : vector<4x256xf32>
    %495 = vector.extract_strided_slice %472 {offsets = [0, 3], sizes = [4, 1], strides = [1, 1]} : vector<4x128xf32> to vector<4x1xf32>
    %496 = vector.extract_strided_slice %480 {offsets = [0, 512], sizes = [4, 256], strides = [1, 1]} : vector<4x1024xf32> to vector<4x256xf32>
    %497 = vector.broadcast %495 : vector<4x1xf32> to vector<4x256xf32>
    %498 = arith.mulf %497, %496 : vector<4x256xf32>
    %499 = vector.extract_strided_slice %472 {offsets = [0, 4], sizes = [4, 1], strides = [1, 1]} : vector<4x128xf32> to vector<4x1xf32>
    %500 = vector.extract_strided_slice %480 {offsets = [0, 768], sizes = [4, 256], strides = [1, 1]} : vector<4x1024xf32> to vector<4x256xf32>
    %501 = vector.broadcast %499 : vector<4x1xf32> to vector<4x256xf32>
    %502 = arith.mulf %501, %500 : vector<4x256xf32>
    %503 = arith.addf %498, %502 : vector<4x256xf32>
    %504 = vector.extract_strided_slice %472 {offsets = [0, 5], sizes = [4, 1], strides = [1, 1]} : vector<4x128xf32> to vector<4x1xf32>
    %505 = vector.broadcast %504 : vector<4x1xf32> to vector<4x256xf32>
    %506 = arith.addf %503, %505 : vector<4x256xf32>
    %cst_48 = arith.constant 0.000000e+00 : f32
    %507 = vector.broadcast %cst_48 : f32 to vector<4x256xf32>
    %508 = arith.maximumf %506, %507 : vector<4x256xf32>
    %c64 = arith.constant 64 : index
    %c0_49 = arith.constant 0 : index
    %509 = vector.load %arg2[%c64, %c0_49] : memref<168x1024xf32, #tpu.memory_space<vmem>>, vector<16x1024xf32>
    %c152 = arith.constant 152 : index
    %c0_50 = arith.constant 0 : index
    %510 = vector.load %arg2[%c152, %c0_50] : memref<168x1024xf32, #tpu.memory_space<vmem>>, vector<1x1024xf32>
    %511 = tpu.concatenate %340, %340 in 1 : vector<16x2xf32>, vector<16x2xf32> -> vector<16x4xf32>
    %cst_51 = arith.constant dense<0.000000e+00> : vector<4x1024xf32>
    %512 = tpu.matmul %511, %509, %cst_51 {dimension_numbers = #tpu.dot_dimension_numbers<[0], [0], [1], [1], [0, 1, 1, 1], [], []>} : vector<16x4xf32>, vector<16x1024xf32>, vector<4x1024xf32> -> vector<4x1024xf32>
    %513 = vector.broadcast %510 : vector<1x1024xf32> to vector<4x1024xf32>
    %514 = arith.addf %512, %513 : vector<4x1024xf32>
    %cst_52 = arith.constant 0.000000e+00 : f32
    %515 = vector.broadcast %cst_52 : f32 to vector<4x1024xf32>
    %516 = arith.maximumf %514, %515 : vector<4x1024xf32>
    %517 = vector.extract_strided_slice %472 {offsets = [0, 6], sizes = [4, 1], strides = [1, 1]} : vector<4x128xf32> to vector<4x1xf32>
    %518 = vector.extract_strided_slice %516 {offsets = [0, 0], sizes = [4, 256], strides = [1, 1]} : vector<4x1024xf32> to vector<4x256xf32>
    %519 = vector.broadcast %517 : vector<4x1xf32> to vector<4x256xf32>
    %520 = arith.mulf %519, %518 : vector<4x256xf32>
    %521 = vector.extract_strided_slice %472 {offsets = [0, 7], sizes = [4, 1], strides = [1, 1]} : vector<4x128xf32> to vector<4x1xf32>
    %522 = vector.extract_strided_slice %516 {offsets = [0, 256], sizes = [4, 256], strides = [1, 1]} : vector<4x1024xf32> to vector<4x256xf32>
    %523 = vector.broadcast %521 : vector<4x1xf32> to vector<4x256xf32>
    %524 = arith.mulf %523, %522 : vector<4x256xf32>
    %525 = arith.addf %520, %524 : vector<4x256xf32>
    %526 = vector.extract_strided_slice %472 {offsets = [0, 8], sizes = [4, 1], strides = [1, 1]} : vector<4x128xf32> to vector<4x1xf32>
    %527 = vector.broadcast %526 : vector<4x1xf32> to vector<4x256xf32>
    %528 = arith.addf %525, %527 : vector<4x256xf32>
    %cst_53 = arith.constant 0.000000e+00 : f32
    %529 = vector.broadcast %cst_53 : f32 to vector<4x256xf32>
    %530 = arith.maximumf %528, %529 : vector<4x256xf32>
    %531 = vector.extract_strided_slice %472 {offsets = [0, 9], sizes = [4, 1], strides = [1, 1]} : vector<4x128xf32> to vector<4x1xf32>
    %532 = vector.extract_strided_slice %516 {offsets = [0, 512], sizes = [4, 256], strides = [1, 1]} : vector<4x1024xf32> to vector<4x256xf32>
    %533 = vector.broadcast %531 : vector<4x1xf32> to vector<4x256xf32>
    %534 = arith.mulf %533, %532 : vector<4x256xf32>
    %535 = vector.extract_strided_slice %472 {offsets = [0, 10], sizes = [4, 1], strides = [1, 1]} : vector<4x128xf32> to vector<4x1xf32>
    %536 = vector.extract_strided_slice %516 {offsets = [0, 768], sizes = [4, 256], strides = [1, 1]} : vector<4x1024xf32> to vector<4x256xf32>
    %537 = vector.broadcast %535 : vector<4x1xf32> to vector<4x256xf32>
    %538 = arith.mulf %537, %536 : vector<4x256xf32>
    %539 = arith.addf %534, %538 : vector<4x256xf32>
    %540 = vector.extract_strided_slice %472 {offsets = [0, 11], sizes = [4, 1], strides = [1, 1]} : vector<4x128xf32> to vector<4x1xf32>
    %541 = vector.broadcast %540 : vector<4x1xf32> to vector<4x256xf32>
    %542 = arith.addf %539, %541 : vector<4x256xf32>
    %cst_54 = arith.constant 0.000000e+00 : f32
    %543 = vector.broadcast %cst_54 : f32 to vector<4x256xf32>
    %544 = arith.maximumf %542, %543 : vector<4x256xf32>
    %c80 = arith.constant 80 : index
    %c0_55 = arith.constant 0 : index
    %545 = vector.load %arg2[%c80, %c0_55] : memref<168x1024xf32, #tpu.memory_space<vmem>>, vector<64x1024xf32>
    %c160 = arith.constant 160 : index
    %c0_56 = arith.constant 0 : index
    %546 = vector.load %arg2[%c160, %c0_56] : memref<168x1024xf32, #tpu.memory_space<vmem>>, vector<1x1024xf32>
    %547 = tpu.concatenate %466, %466 in 1 : vector<64x2xf32>, vector<64x2xf32> -> vector<64x4xf32>
    %cst_57 = arith.constant dense<0.000000e+00> : vector<4x1024xf32>
    %548 = tpu.matmul %547, %545, %cst_57 {dimension_numbers = #tpu.dot_dimension_numbers<[0], [0], [1], [1], [0, 1, 1, 1], [], []>} : vector<64x4xf32>, vector<64x1024xf32>, vector<4x1024xf32> -> vector<4x1024xf32>
    %549 = vector.broadcast %546 : vector<1x1024xf32> to vector<4x1024xf32>
    %550 = arith.addf %548, %549 : vector<4x1024xf32>
    %cst_58 = arith.constant 0.000000e+00 : f32
    %551 = vector.broadcast %cst_58 : f32 to vector<4x1024xf32>
    %552 = arith.maximumf %550, %551 : vector<4x1024xf32>
    %553 = vector.extract_strided_slice %472 {offsets = [0, 12], sizes = [4, 1], strides = [1, 1]} : vector<4x128xf32> to vector<4x1xf32>
    %554 = vector.extract_strided_slice %552 {offsets = [0, 0], sizes = [4, 256], strides = [1, 1]} : vector<4x1024xf32> to vector<4x256xf32>
    %555 = vector.broadcast %553 : vector<4x1xf32> to vector<4x256xf32>
    %556 = arith.mulf %555, %554 : vector<4x256xf32>
    %557 = vector.extract_strided_slice %472 {offsets = [0, 13], sizes = [4, 1], strides = [1, 1]} : vector<4x128xf32> to vector<4x1xf32>
    %558 = vector.extract_strided_slice %552 {offsets = [0, 256], sizes = [4, 256], strides = [1, 1]} : vector<4x1024xf32> to vector<4x256xf32>
    %559 = vector.broadcast %557 : vector<4x1xf32> to vector<4x256xf32>
    %560 = arith.mulf %559, %558 : vector<4x256xf32>
    %561 = arith.addf %556, %560 : vector<4x256xf32>
    %562 = vector.extract_strided_slice %472 {offsets = [0, 14], sizes = [4, 1], strides = [1, 1]} : vector<4x128xf32> to vector<4x1xf32>
    %563 = vector.broadcast %562 : vector<4x1xf32> to vector<4x256xf32>
    %564 = arith.addf %561, %563 : vector<4x256xf32>
    %cst_59 = arith.constant 0.000000e+00 : f32
    %565 = vector.broadcast %cst_59 : f32 to vector<4x256xf32>
    %566 = arith.maximumf %564, %565 : vector<4x256xf32>
    %567 = vector.extract_strided_slice %472 {offsets = [0, 15], sizes = [4, 1], strides = [1, 1]} : vector<4x128xf32> to vector<4x1xf32>
    %568 = vector.extract_strided_slice %552 {offsets = [0, 512], sizes = [4, 256], strides = [1, 1]} : vector<4x1024xf32> to vector<4x256xf32>
    %569 = vector.broadcast %567 : vector<4x1xf32> to vector<4x256xf32>
    %570 = arith.mulf %569, %568 : vector<4x256xf32>
    %571 = vector.extract_strided_slice %472 {offsets = [0, 16], sizes = [4, 1], strides = [1, 1]} : vector<4x128xf32> to vector<4x1xf32>
    %572 = vector.extract_strided_slice %552 {offsets = [0, 768], sizes = [4, 256], strides = [1, 1]} : vector<4x1024xf32> to vector<4x256xf32>
    %573 = vector.broadcast %571 : vector<4x1xf32> to vector<4x256xf32>
    %574 = arith.mulf %573, %572 : vector<4x256xf32>
    %575 = arith.addf %570, %574 : vector<4x256xf32>
    %576 = vector.extract_strided_slice %472 {offsets = [0, 17], sizes = [4, 1], strides = [1, 1]} : vector<4x128xf32> to vector<4x1xf32>
    %577 = vector.broadcast %576 : vector<4x1xf32> to vector<4x256xf32>
    %578 = arith.addf %575, %577 : vector<4x256xf32>
    %cst_60 = arith.constant 0.000000e+00 : f32
    %579 = vector.broadcast %cst_60 : f32 to vector<4x256xf32>
    %580 = arith.maximumf %578, %579 : vector<4x256xf32>
    %581 = arith.addf %494, %530 : vector<4x256xf32>
    %582 = arith.addf %581, %566 : vector<4x256xf32>
    %583 = arith.addf %508, %544 : vector<4x256xf32>
    %584 = arith.addf %583, %580 : vector<4x256xf32>
    %585 = tpu.concatenate %582, %584, %494, %530, %566, %508, %544, %580 in 0 : vector<4x256xf32>, vector<4x256xf32>, vector<4x256xf32>, vector<4x256xf32>, vector<4x256xf32>, vector<4x256xf32>, vector<4x256xf32>, vector<4x256xf32> -> vector<32x256xf32>
    %c0_61 = arith.constant 0 : index
    %c0_62 = arith.constant 0 : index
    %586 = vector.load %arg3[%c0_61, %c0_62] : memref<32x256xf32, #tpu.memory_space<vmem>>, vector<32x256xf32>
    tpu.vector_store %arg3[%c0_61, %c0_62], %585 {strides = array<i32>} : memref<32x256xf32, #tpu.memory_space<vmem>>, vector<32x256xf32>,
    return
  }
}

</mosaic_0001>

<llo_original>
// kernel: dcan_forward.1
$region0: #{dcan_forward.1}
  #allocation0 [shape = 'u32[]', space=smem, size = 0x4, offset = 0x4, fixed_abs, tag = 'smem constant byte address 0x4 - core index']
  #allocation1 [shape = 'u32[144,128]{1,0:T(1,128)}', space=vmem, size = 0x12000, scoped, tag = 'internal scratch']
  %s0 = inlined_call_operand.vmem [shape: f32[4,512], index: 0, kind: input, shape index: {}]
  %s1 = inlined_call_operand.vmem [shape: f32[120,128], index: 1, kind: input, shape index: {}]
  %s2 = inlined_call_operand.vmem [shape: f32[168,1024], index: 2, kind: input, shape index: {}]
  %s3 = inlined_call_operand.vmem [shape: f32[32,256], index: 3, kind: output, shape index: {}]
  %s4 = sld [smem:[#allocation0]]
  $region22: #{dcan_forward.1} parent=0
    _
  %s6 = ssub.s32 1, %s4
  %s7 = scalar_select 0, %s6, %s4
  // Predicated region
  $region2: #{dcan_forward.1} parent=0 // pred_check
    _
  $region3: #{dcan_forward.1} parent=0 // pred_check_branch
    %9 = sbr.rel (0) target = $region5
  $region4: #{dcan_forward.1} parent=0 // pred_region
    _
  $region5: #{dcan_forward.1} parent=0 // pred_fallthru
    _
  // Predicated region
  $region6: #{dcan_forward.1} parent=0 // pred_check
    _
  $region7: #{dcan_forward.1} parent=0 // pred_check_branch
    %11 = sbr.rel (0) target = $region9
  $region8: #{dcan_forward.1} parent=0 // pred_region
    _
  $region9: #{dcan_forward.1} parent=0 // pred_fallthru
    _
  // Predicated region
  $region10: #{dcan_forward.1} parent=0 // pred_check
    _
  $region11: #{dcan_forward.1} parent=0 // pred_check_branch
    %13 = sbr.rel (0) target = $region13
  $region12: #{dcan_forward.1} parent=0 // pred_region
    _
  $region13: #{dcan_forward.1} parent=0 // pred_fallthru
    _
  %v14 = vld [vmem:[%s0] sm:$0xff]
  %v15 = vld [vmem:[%s0 + $0x8] sm:$0xff]
  %v16 = vld [vmem:[%s1] sm:$0xf]
  %18 = vset.pattern.permute.xlu0 0
  %19 = vperm.xlu0 %18, %v16
  %v20 = vpop.permute.xlu0 %19
  %v24 = vlaneseq
  %v25 = vshrl.u32 %v24, 7
  %v26 = vsub.s32 0, %v25
  %v27 = vrot.slane %v14, %v26
  %v28 = vlaneseq
  %v29 = vshrl.u32 %v28, 7
  %v30 = vsub.s32 4, %v29
  %v31 = vrot.slane %v14, %v30
  %v32 = vlaneseq
  %v33 = vshrl.u32 %v32, 7
  %v34 = vsub.s32 0, %v33
  %v35 = vrot.slane %v15, %v34
  %v36 = vlaneseq
  %v37 = vshrl.u32 %v36, 7
  %v38 = vsub.s32 4, %v37
  %v39 = vrot.slane %v15, %v38
  %v44 = vlaneseq
  %v45 = vshrl.u32 %v44, 7
  %v46 = vsub.s32 0, %v45
  %v47 = vrot.slane %v27, %v46
  %v48 = vlaneseq
  %v49 = vshrl.u32 %v48, 7
  %v50 = vsub.s32 0, %v49
  %v51 = vrot.slane %v31, %v50
  %v52 = vlaneseq
  %v53 = vshrl.u32 %v52, 7
  %v54 = vsub.s32 0, %v53
  %v55 = vrot.slane %v35, %v54
  %v56 = vlaneseq
  %v57 = vshrl.u32 %v56, 7
  %v58 = vsub.s32 0, %v57
  %v59 = vrot.slane %v39, %v58
  %v60 = vmul.f32 %v20, %v47
  %v61 = vmul.f32 %v20, %v51
  %v62 = vmul.f32 %v20, %v55
  %v63 = vmul.f32 %v20, %v59
  %64 = vset.pattern.permute.xlu0 1
  %65 = vperm.xlu0 %64, %v16
  %v66 = vpop.permute.xlu0 %65
  %v68 = vlaneseq
  %v69 = vshrl.u32 %v68, 7
  %v70 = vsub.s32 1, %v69
  %v71 = vrot.slane %v14, %v70
  %v72 = vlaneseq
  %v73 = vshrl.u32 %v72, 7
  %v74 = vsub.s32 5, %v73
  %v75 = vrot.slane %v14, %v74
  %v76 = vlaneseq
  %v77 = vshrl.u32 %v76, 7
  %v78 = vsub.s32 1, %v77
  %v79 = vrot.slane %v15, %v78
  %v80 = vlaneseq
  %v81 = vshrl.u32 %v80, 7
  %v82 = vsub.s32 5, %v81
  %v83 = vrot.slane %v15, %v82
  %v88 = vlaneseq
  %v89 = vshrl.u32 %v88, 7
  %v90 = vsub.s32 1, %v89
  %v91 = vrot.slane %v71, %v90
  %v92 = vlaneseq
  %v93 = vshrl.u32 %v92, 7
  %v94 = vsub.s32 1, %v93
  %v95 = vrot.slane %v75, %v94
  %v96 = vlaneseq
  %v97 = vshrl.u32 %v96, 7
  %v98 = vsub.s32 1, %v97
  %v99 = vrot.slane %v79, %v98
  %v100 = vlaneseq
  %v101 = vshrl.u32 %v100, 7
  %v102 = vsub.s32 1, %v101
  %v103 = vrot.slane %v83, %v102
  %v104 = vmul.f32 %v66, %v91
  %v105 = vmul.f32 %v66, %v95
  %v106 = vmul.f32 %v66, %v99
  %v107 = vmul.f32 %v66, %v103
  %108 = vset.pattern.permute.xlu0 2
  %109 = vperm.xlu0 %108, %v16
  %v110 = vpop.permute.xlu0 %109
  %v112 = vlaneseq
  %v113 = vshrl.u32 %v112, 7
  %v114 = vsub.s32 2, %v113
  %v115 = vrot.slane %v14, %v114
  %v116 = vlaneseq
  %v117 = vshrl.u32 %v116, 7
  %v118 = vsub.s32 6, %v117
  %v119 = vrot.slane %v14, %v118
  %v120 = vlaneseq
  %v121 = vshrl.u32 %v120, 7
  %v122 = vsub.s32 2, %v121
  %v123 = vrot.slane %v15, %v122
  %v124 = vlaneseq
  %v125 = vshrl.u32 %v124, 7
  %v126 = vsub.s32 6, %v125
  %v127 = vrot.slane %v15, %v126
  %v132 = vlaneseq
  %v133 = vshrl.u32 %v132, 7
  %v134 = vsub.s32 2, %v133
  %v135 = vrot.slane %v115, %v134
  %v136 = vlaneseq
  %v137 = vshrl.u32 %v136, 7
  %v138 = vsub.s32 2, %v137
  %v139 = vrot.slane %v119, %v138
  %v140 = vlaneseq
  %v141 = vshrl.u32 %v140, 7
  %v142 = vsub.s32 2, %v141
  %v143 = vrot.slane %v123, %v142
  %v144 = vlaneseq
  %v145 = vshrl.u32 %v144, 7
  %v146 = vsub.s32 2, %v145
  %v147 = vrot.slane %v127, %v146
  %v148 = vmul.f32 %v110, %v135
  %v149 = vmul.f32 %v110, %v139
  %v150 = vmul.f32 %v110, %v143
  %v151 = vmul.f32 %v110, %v147
  %152 = vset.pattern.permute.xlu0 3
  %153 = vperm.xlu0 %152, %v16
  %v154 = vpop.permute.xlu0 %153
  %v156 = vlaneseq
  %v157 = vshrl.u32 %v156, 7
  %v158 = vsub.s32 3, %v157
  %v159 = vrot.slane %v14, %v158
  %v160 = vlaneseq
  %v161 = vshrl.u32 %v160, 7
  %v162 = vsub.s32 7, %v161
  %v163 = vrot.slane %v14, %v162
  %v164 = vlaneseq
  %v165 = vshrl.u32 %v164, 7
  %v166 = vsub.s32 3, %v165
  %v167 = vrot.slane %v15, %v166
  %v168 = vlaneseq
  %v169 = vshrl.u32 %v168, 7
  %v170 = vsub.s32 7, %v169
  %v171 = vrot.slane %v15, %v170
  %v176 = vlaneseq
  %v177 = vshrl.u32 %v176, 7
  %v178 = vsub.s32 3, %v177
  %v179 = vrot.slane %v159, %v178
  %v180 = vlaneseq
  %v181 = vshrl.u32 %v180, 7
  %v182 = vsub.s32 3, %v181
  %v183 = vrot.slane %v163, %v182
  %v184 = vlaneseq
  %v185 = vshrl.u32 %v184, 7
  %v186 = vsub.s32 3, %v185
  %v187 = vrot.slane %v167, %v186
  %v188 = vlaneseq
  %v189 = vshrl.u32 %v188, 7
  %v190 = vsub.s32 3, %v189
  %v191 = vrot.slane %v171, %v190
  %v192 = vmul.f32 %v154, %v179
  %v193 = vmul.f32 %v154, %v183
  %v194 = vmul.f32 %v154, %v187
  %v195 = vmul.f32 %v154, %v191
  %v196 = vadd.f32 %v60, %v104
  %v197 = vadd.f32 %v61, %v105
  %v198 = vadd.f32 %v62, %v106
  %v199 = vadd.f32 %v63, %v107
  %v200 = vadd.f32 %v148, %v192
  %v201 = vadd.f32 %v149, %v193
  %v202 = vadd.f32 %v150, %v194
  %v203 = vadd.f32 %v151, %v195
  %v204 = vadd.f32 %v196, %v200
  %v205 = vadd.f32 %v197, %v201
  %v206 = vadd.f32 %v198, %v202
  %v207 = vadd.f32 %v199, %v203
  %208 = vset.pattern.permute.xlu0 16
  %209 = vperm.xlu0 %208, %v16
  %v210 = vpop.permute.xlu0 %209
  %v212 = vadd.f32 %v204, %v210
  %v213 = vadd.f32 %v205, %v210
  %v214 = vadd.f32 %v206, %v210
  %v215 = vadd.f32 %v207, %v210
  %v216 = vmax.f32 %v212, 0.0
  %v217 = vmax.f32 %v213, 0.0
  %v218 = vmax.f32 %v214, 0.0
  %v219 = vmax.f32 %v215, 0.0
  %vm220 = vcmask 1043456
  %v221 = vsel %vm220, %v216, 0.0
  %v222 = vsel %vm220, %v217, 0.0
  %v223 = vadd.f32 %v221, %v222
  %v224 = vsel %vm220, %v218, 0.0
  %v225 = vadd.f32 %v223, %v224
  %v226 = vsel %vm220, %v219, 0.0
  %v227 = vadd.f32 %v225, %v226
  %228 = vadd.xlane.f32.xlu0 %v227
  %v229 = vpop.xlane.xlu0 %228
  %v230 = vrcp.pop 512.0
  %v231 = vmul.f32 %v229, %v230
  %v232 = vmul.f32 %v216, %v216
  %v233 = vmul.f32 %v217, %v217
  %v234 = vmul.f32 %v218, %v218
  %v235 = vmul.f32 %v219, %v219
  %v236 = vsel %vm220, %v232, 0.0
  %v237 = vsel %vm220, %v233, 0.0
  %v238 = vadd.f32 %v236, %v237
  %v239 = vsel %vm220, %v234, 0.0
  %v240 = vadd.f32 %v238, %v239
  %v241 = vsel %vm220, %v235, 0.0
  %v242 = vadd.f32 %v240, %v241
  %243 = vadd.xlane.f32.xlu0 %v242
  %v244 = vpop.xlane.xlu0 %243
  %v245 = vmul.f32 %v244, %v230
  %v246 = vmul.f32 %v231, %v231
  %v247 = vsub.f32 %v245, %v246
  %v248 = vmax.f32 %v247, 0.0
  %v249 = vadd.f32 %v248, 1e-05
  %v250 = vrsqrt.pop %v249
  %v251 = vmul.f32 %v16, %v250
  %v252 = vmul.f32 %v231, %v251
  %254 = vrot.lane.b32.xlu0 %v252, 1
  %v255 = vpop.permute.xlu0 %254
  %v257 = vsub.f32 %v16, %v255
  %259 = vset.pattern.permute.xlu0 17
  %260 = vperm.xlu0 %259, %v251
  %v261 = vpop.permute.xlu0 %260
  %v263 = vmul.f32 %v216, %v261
  %v264 = vmul.f32 %v217, %v261
  %v265 = vmul.f32 %v218, %v261
  %v266 = vmul.f32 %v219, %v261
  %268 = vset.pattern.permute.xlu0 18
  %269 = vperm.xlu0 %268, %v257
  %v270 = vpop.permute.xlu0 %269
  %v272 = vadd.f32 %v263, %v270
  %v273 = vadd.f32 %v264, %v270
  %v274 = vadd.f32 %v265, %v270
  %v275 = vadd.f32 %v266, %v270
  %v276 = vmax.f32 %v272, %v273
  %v277 = vmax.f32 %v274, %v275
  %v278 = vmax.f32 %v276, %v277
  %v279 = vld [vmem:[%s1 + $0x8] sm:$0xff]
  %281 = vset.pattern.permute.xlu0 0
  %282 = vperm.xlu0 %281, %v279
  %v283 = vpop.permute.xlu0 %282
  %v285 = vlaneseq
  %v286 = vshrl.u32 %v285, 7
  %v287 = vsub.s32 0, %v286
  %v288 = vrot.slane %v278, %v287
  %v289 = vmul.f32 %v283, %v288
  %290 = vset.pattern.permute.xlu0 1
  %291 = vperm.xlu0 %290, %v279
  %v292 = vpop.permute.xlu0 %291
  %v294 = vlaneseq
  %v295 = vshrl.u32 %v294, 7
  %v296 = vsub.s32 1, %v295
  %v297 = vrot.slane %v278, %v296
  %v298 = vmul.f32 %v292, %v297
  %299 = vset.pattern.permute.xlu0 2
  %300 = vperm.xlu0 %299, %v279
  %v301 = vpop.permute.xlu0 %300
  %v303 = vlaneseq
  %v304 = vshrl.u32 %v303, 7
  %v305 = vsub.s32 2, %v304
  %v306 = vrot.slane %v278, %v305
  %v307 = vmul.f32 %v301, %v306
  %308 = vset.pattern.permute.xlu0 3
  %309 = vperm.xlu0 %308, %v279
  %v310 = vpop.permute.xlu0 %309
  %v312 = vlaneseq
  %v313 = vshrl.u32 %v312, 7
  %v314 = vsub.s32 3, %v313
  %v315 = vrot.slane %v278, %v314
  %v316 = vmul.f32 %v310, %v315
  %v317 = vadd.f32 %v289, %v298
  %v318 = vadd.f32 %v307, %v316
  %v319 = vadd.f32 %v317, %v318
  %320 = vset.pattern.permute.xlu0 16
  %321 = vperm.xlu0 %320, %v279
  %v322 = vpop.permute.xlu0 %321
  %v324 = vadd.f32 %v319, %v322
  %v325 = vmax.f32 %v324, 0.0
  %326 = vadd.xlane.f32.xlu0 %v325
  %v327 = vpop.xlane.xlu0 %326
  %v328 = vrcp.pop 128.0
  %v329 = vmul.f32 %v327, %v328
  %v330 = vmul.f32 %v325, %v325
  %331 = vadd.xlane.f32.xlu0 %v330
  %v332 = vpop.xlane.xlu0 %331
  %v333 = vmul.f32 %v332, %v328
  %v334 = vmul.f32 %v329, %v329
  %v335 = vsub.f32 %v333, %v334
  %v336 = vmax.f32 %v335, 0.0
  %v337 = vadd.f32 %v336, 1e-05
  %v338 = vrsqrt.pop %v337
  %v339 = vmul.f32 %v279, %v338
  %v340 = vmul.f32 %v329, %v339
  %342 = vrot.lane.b32.xlu0 %v340, 1
  %v343 = vpop.permute.xlu0 %342
  %v345 = vsub.f32 %v279, %v343
  %347 = vset.pattern.permute.xlu0 17
  %348 = vperm.xlu0 %347, %v339
  %v349 = vpop.permute.xlu0 %348
  %v351 = vmul.f32 %v325, %v349
  %353 = vset.pattern.permute.xlu0 18
  %354 = vperm.xlu0 %353, %v345
  %v355 = vpop.permute.xlu0 %354
  %v357 = vadd.f32 %v351, %v355
  %359 = vrot.lane.b32.xlu0 %v357, 96
  %v360 = vpop.permute.xlu0 %359
  %v362 = vmax.f32 %v357, %v360
  %364 = vrot.lane.b32.xlu0 %v362, 64
  %v365 = vpop.permute.xlu0 %364
  %v367 = vmax.f32 %v362, %v365
  %v368 = vld [vmem:[%s1 + $0x10] sm:$0xff]
  %v369 = vld [vmem:[%s1 + $0x18] sm:$0xff]
  %371 = vset.pattern.permute.xlu0 0
  %372 = vperm.xlu0 %371, %v368
  %v373 = vpop.permute.xlu0 %372
  %376 = vset.pattern.permute.xlu0 0
  %377 = vperm.xlu0 %376, %v369
  %v378 = vpop.permute.xlu0 %377
  %v380 = vlaneseq
  %v381 = vshrl.u32 %v380, 7
  %v382 = vsub.s32 0, %v381
  %v383 = vrot.slane %v367, %v382
  %v384 = vmul.f32 %v373, %v383
  %v385 = vmul.f32 %v378, %v383
  %386 = vset.pattern.permute.xlu0 1
  %387 = vperm.xlu0 %386, %v368
  %v388 = vpop.permute.xlu0 %387
  %390 = vset.pattern.permute.xlu0 1
  %391 = vperm.xlu0 %390, %v369
  %v392 = vpop.permute.xlu0 %391
  %v394 = vlaneseq
  %v395 = vshrl.u32 %v394, 7
  %v396 = vsub.s32 1, %v395
  %v397 = vrot.slane %v367, %v396
  %v398 = vmul.f32 %v388, %v397
  %v399 = vmul.f32 %v392, %v397
  %400 = vset.pattern.permute.xlu0 2
  %401 = vperm.xlu0 %400, %v368
  %v402 = vpop.permute.xlu0 %401
  %404 = vset.pattern.permute.xlu0 2
  %405 = vperm.xlu0 %404, %v369
  %v406 = vpop.permute.xlu0 %405
  %v408 = vlaneseq
  %v409 = vshrl.u32 %v408, 7
  %v410 = vsub.s32 2, %v409
  %v411 = vrot.slane %v367, %v410
  %v412 = vmul.f32 %v402, %v411
  %v413 = vmul.f32 %v406, %v411
  %414 = vset.pattern.permute.xlu0 3
  %415 = vperm.xlu0 %414, %v368
  %v416 = vpop.permute.xlu0 %415
  %418 = vset.pattern.permute.xlu0 3
  %419 = vperm.xlu0 %418, %v369
  %v420 = vpop.permute.xlu0 %419
  %v422 = vlaneseq
  %v423 = vshrl.u32 %v422, 7
  %v424 = vsub.s32 3, %v423
  %v425 = vrot.slane %v367, %v424
  %v426 = vmul.f32 %v416, %v425
  %v427 = vmul.f32 %v420, %v425
  %428 = vset.pattern.permute.xlu0 4
  %429 = vperm.xlu0 %428, %v368
  %v430 = vpop.permute.xlu0 %429
  %432 = vset.pattern.permute.xlu0 4
  %433 = vperm.xlu0 %432, %v369
  %v434 = vpop.permute.xlu0 %433
  %v436 = vlaneseq
  %v437 = vshrl.u32 %v436, 7
  %v438 = vsub.s32 4, %v437
  %v439 = vrot.slane %v367, %v438
  %v440 = vmul.f32 %v430, %v439
  %v441 = vmul.f32 %v434, %v439
  %442 = vset.pattern.permute.xlu0 5
  %443 = vperm.xlu0 %442, %v368
  %v444 = vpop.permute.xlu0 %443
  %446 = vset.pattern.permute.xlu0 5
  %447 = vperm.xlu0 %446, %v369
  %v448 = vpop.permute.xlu0 %447
  %v450 = vlaneseq
  %v451 = vshrl.u32 %v450, 7
  %v452 = vsub.s32 5, %v451
  %v453 = vrot.slane %v367, %v452
  %v454 = vmul.f32 %v444, %v453
  %v455 = vmul.f32 %v448, %v453
  %456 = vset.pattern.permute.xlu0 6
  %457 = vperm.xlu0 %456, %v368
  %v458 = vpop.permute.xlu0 %457
  %460 = vset.pattern.permute.xlu0 6
  %461 = vperm.xlu0 %460, %v369
  %v462 = vpop.permute.xlu0 %461
  %v464 = vlaneseq
  %v465 = vshrl.u32 %v464, 7
  %v466 = vsub.s32 6, %v465
  %v467 = vrot.slane %v367, %v466
  %v468 = vmul.f32 %v458, %v467
  %v469 = vmul.f32 %v462, %v467
  %470 = vset.pattern.permute.xlu0 7
  %471 = vperm.xlu0 %470, %v368
  %v472 = vpop.permute.xlu0 %471
  %474 = vset.pattern.permute.xlu0 7
  %475 = vperm.xlu0 %474, %v369
  %v476 = vpop.permute.xlu0 %475
  %v478 = vlaneseq
  %v479 = vshrl.u32 %v478, 7
  %v480 = vsub.s32 7, %v479
  %v481 = vrot.slane %v367, %v480
  %v482 = vmul.f32 %v472, %v481
  %v483 = vmul.f32 %v476, %v481
  %v484 = vadd.f32 %v384, %v398
  %v485 = vadd.f32 %v385, %v399
  %v486 = vadd.f32 %v412, %v426
  %v487 = vadd.f32 %v413, %v427
  %v488 = vadd.f32 %v440, %v454
  %v489 = vadd.f32 %v441, %v455
  %v490 = vadd.f32 %v468, %v482
  %v491 = vadd.f32 %v469, %v483
  %v492 = vadd.f32 %v484, %v486
  %v493 = vadd.f32 %v485, %v487
  %v494 = vadd.f32 %v488, %v490
  %v495 = vadd.f32 %v489, %v491
  %v496 = vadd.f32 %v492, %v494
  %v497 = vadd.f32 %v493, %v495
  %498 = vset.pattern.permute.xlu0 16
  %499 = vperm.xlu0 %498, %v368
  %v500 = vpop.permute.xlu0 %499
  %502 = vset.pattern.permute.xlu0 16
  %503 = vperm.xlu0 %502, %v369
  %v504 = vpop.permute.xlu0 %503
  %v506 = vadd.f32 %v496, %v500
  %v507 = vadd.f32 %v497, %v504
  %v508 = vmax.f32 %v506, 0.0
  %v509 = vmax.f32 %v507, 0.0
  %vm510 = vcmask 261120
  %v511 = vsel %vm510, %v508, 0.0
  %512 = vadd.xlane.f32.xlu0 %v511
  %v513 = vpop.xlane.xlu0 %512
  %v514 = vsel %vm510, %v509, 0.0
  %515 = vadd.xlane.f32.xlu0 %v514
  %v516 = vpop.xlane.xlu0 %515
  %v517 = vrcp.pop 32.0
  %v518 = vmul.f32 %v513, %v517
  %v519 = vmul.f32 %v516, %v517
  %v520 = vmul.f32 %v508, %v508
  %v521 = vmul.f32 %v509, %v509
  %v522 = vsel %vm510, %v520, 0.0
  %523 = vadd.xlane.f32.xlu0 %v522
  %v524 = vpop.xlane.xlu0 %523
  %v525 = vsel %vm510, %v521, 0.0
  %526 = vadd.xlane.f32.xlu0 %v525
  %v527 = vpop.xlane.xlu0 %526
  %v528 = vmul.f32 %v524, %v517
  %v529 = vmul.f32 %v527, %v517
  %v530 = vmul.f32 %v518, %v518
  %v531 = vmul.f32 %v519, %v519
  %v532 = vsub.f32 %v528, %v530
  %v533 = vsub.f32 %v529, %v531
  %v534 = vmax.f32 %v532, 0.0
  %v535 = vmax.f32 %v533, 0.0
  %v536 = vadd.f32 %v534, 1e-05
  %v537 = vadd.f32 %v535, 1e-05
  %v538 = vrsqrt.pop %v536
  %v539 = vrsqrt.pop %v537
  %v540 = vmul.f32 %v368, %v538
  %v541 = vmul.f32 %v369, %v539
  %v542 = vmul.f32 %v518, %v540
  %v543 = vmul.f32 %v519, %v541
  %546 = vrot.lane.b32.xlu0 %v542, 1
  %v547 = vpop.permute.xlu0 %546
  %548 = vrot.lane.b32.xlu0 %v543, 1
  %v549 = vpop.permute.xlu0 %548
  %v552 = vsub.f32 %v368, %v547
  %v553 = vsub.f32 %v369, %v549
  %555 = vset.pattern.permute.xlu0 17
  %556 = vperm.xlu0 %555, %v540
  %v557 = vpop.permute.xlu0 %556
  %560 = vset.pattern.permute.xlu0 17
  %561 = vperm.xlu0 %560, %v541
  %v562 = vpop.permute.xlu0 %561
  %v564 = vmul.f32 %v508, %v557
  %v565 = vmul.f32 %v509, %v562
  %567 = vset.pattern.permute.xlu0 18
  %568 = vperm.xlu0 %567, %v552
  %v569 = vpop.permute.xlu0 %568
  %572 = vset.pattern.permute.xlu0 18
  %573 = vperm.xlu0 %572, %v553
  %v574 = vpop.permute.xlu0 %573
  %v576 = vadd.f32 %v564, %v569
  %v577 = vadd.f32 %v565, %v574
  %580 = vrot.lane.b32.xlu0 %v576, 120
  %v581 = vpop.permute.xlu0 %580
  %582 = vrot.lane.b32.xlu0 %v577, 120
  %v583 = vpop.permute.xlu0 %582
  %v586 = vmax.f32 %v576, %v581
  %v587 = vmax.f32 %v577, %v583
  %590 = vrot.lane.b32.xlu0 %v586, 112
  %v591 = vpop.permute.xlu0 %590
  %592 = vrot.lane.b32.xlu0 %v587, 112
  %v593 = vpop.permute.xlu0 %592
  %v596 = vmax.f32 %v586, %v591
  %v597 = vmax.f32 %v587, %v593
  %v598 = vld [vmem:[%s1 + $0x20] sm:$0xff]
  %v599 = vld [vmem:[%s1 + $0x28] sm:$0xff]
  %601 = vset.pattern.permute.xlu0 0
  %602 = vperm.xlu0 %601, %v598
  %v603 = vpop.permute.xlu0 %602
  %606 = vset.pattern.permute.xlu0 0
  %607 = vperm.xlu0 %606, %v599
  %v608 = vpop.permute.xlu0 %607
  %v610 = vlaneseq
  %v611 = vshrl.u32 %v610, 7
  %v612 = vsub.s32 0, %v611
  %v613 = vrot.slane %v596, %v612
  %v614 = vmul.f32 %v603, %v613
  %v615 = vmul.f32 %v608, %v613
  %616 = vset.pattern.permute.xlu0 1
  %617 = vperm.xlu0 %616, %v598
  %v618 = vpop.permute.xlu0 %617
  %620 = vset.pattern.permute.xlu0 1
  %621 = vperm.xlu0 %620, %v599
  %v622 = vpop.permute.xlu0 %621
  %v624 = vlaneseq
  %v625 = vshrl.u32 %v624, 7
  %v626 = vsub.s32 1, %v625
  %v627 = vrot.slane %v596, %v626
  %v628 = vmul.f32 %v618, %v627
  %v629 = vmul.f32 %v622, %v627
  %630 = vset.pattern.permute.xlu0 2
  %631 = vperm.xlu0 %630, %v598
  %v632 = vpop.permute.xlu0 %631
  %634 = vset.pattern.permute.xlu0 2
  %635 = vperm.xlu0 %634, %v599
  %v636 = vpop.permute.xlu0 %635
  %v638 = vlaneseq
  %v639 = vshrl.u32 %v638, 7
  %v640 = vsub.s32 2, %v639
  %v641 = vrot.slane %v596, %v640
  %v642 = vmul.f32 %v632, %v641
  %v643 = vmul.f32 %v636, %v641
  %644 = vset.pattern.permute.xlu0 3
  %645 = vperm.xlu0 %644, %v598
  %v646 = vpop.permute.xlu0 %645
  %648 = vset.pattern.permute.xlu0 3
  %649 = vperm.xlu0 %648, %v599
  %v650 = vpop.permute.xlu0 %649
  %v652 = vlaneseq
  %v653 = vshrl.u32 %v652, 7
  %v654 = vsub.s32 3, %v653
  %v655 = vrot.slane %v596, %v654
  %v656 = vmul.f32 %v646, %v655
  %v657 = vmul.f32 %v650, %v655
  %658 = vset.pattern.permute.xlu0 4
  %659 = vperm.xlu0 %658, %v598
  %v660 = vpop.permute.xlu0 %659
  %662 = vset.pattern.permute.xlu0 4
  %663 = vperm.xlu0 %662, %v599
  %v664 = vpop.permute.xlu0 %663
  %v666 = vlaneseq
  %v667 = vshrl.u32 %v666, 7
  %v668 = vsub.s32 4, %v667
  %v669 = vrot.slane %v596, %v668
  %v670 = vmul.f32 %v660, %v669
  %v671 = vmul.f32 %v664, %v669
  %672 = vset.pattern.permute.xlu0 5
  %673 = vperm.xlu0 %672, %v598
  %v674 = vpop.permute.xlu0 %673
  %676 = vset.pattern.permute.xlu0 5
  %677 = vperm.xlu0 %676, %v599
  %v678 = vpop.permute.xlu0 %677
  %v680 = vlaneseq
  %v681 = vshrl.u32 %v680, 7
  %v682 = vsub.s32 5, %v681
  %v683 = vrot.slane %v596, %v682
  %v684 = vmul.f32 %v674, %v683
  %v685 = vmul.f32 %v678, %v683
  %686 = vset.pattern.permute.xlu0 6
  %687 = vperm.xlu0 %686, %v598
  %v688 = vpop.permute.xlu0 %687
  %690 = vset.pattern.permute.xlu0 6
  %691 = vperm.xlu0 %690, %v599
  %v692 = vpop.permute.xlu0 %691
  %v694 = vlaneseq
  %v695 = vshrl.u32 %v694, 7
  %v696 = vsub.s32 6, %v695
  %v697 = vrot.slane %v596, %v696
  %v698 = vmul.f32 %v688, %v697
  %v699 = vmul.f32 %v692, %v697
  %700 = vset.pattern.permute.xlu0 7
  %701 = vperm.xlu0 %700, %v598
  %v702 = vpop.permute.xlu0 %701
  %704 = vset.pattern.permute.xlu0 7
  %705 = vperm.xlu0 %704, %v599
  %v706 = vpop.permute.xlu0 %705
  %v708 = vlaneseq
  %v709 = vshrl.u32 %v708, 7
  %v710 = vsub.s32 7, %v709
  %v711 = vrot.slane %v596, %v710
  %v712 = vmul.f32 %v702, %v711
  %v713 = vmul.f32 %v706, %v711
  %714 = vset.pattern.permute.xlu0 8
  %715 = vperm.xlu0 %714, %v598
  %v716 = vpop.permute.xlu0 %715
  %718 = vset.pattern.permute.xlu0 8
  %719 = vperm.xlu0 %718, %v599
  %v720 = vpop.permute.xlu0 %719
  %v722 = vlaneseq
  %v723 = vshrl.u32 %v722, 7
  %v724 = vsub.s32 0, %v723
  %v725 = vrot.slane %v597, %v724
  %v726 = vmul.f32 %v716, %v725
  %v727 = vmul.f32 %v720, %v725
  %728 = vset.pattern.permute.xlu0 9
  %729 = vperm.xlu0 %728, %v598
  %v730 = vpop.permute.xlu0 %729
  %732 = vset.pattern.permute.xlu0 9
  %733 = vperm.xlu0 %732, %v599
  %v734 = vpop.permute.xlu0 %733
  %v736 = vlaneseq
  %v737 = vshrl.u32 %v736, 7
  %v738 = vsub.s32 1, %v737
  %v739 = vrot.slane %v597, %v738
  %v740 = vmul.f32 %v730, %v739
  %v741 = vmul.f32 %v734, %v739
  %742 = vset.pattern.permute.xlu0 10
  %743 = vperm.xlu0 %742, %v598
  %v744 = vpop.permute.xlu0 %743
  %746 = vset.pattern.permute.xlu0 10
  %747 = vperm.xlu0 %746, %v599
  %v748 = vpop.permute.xlu0 %747
  %v750 = vlaneseq
  %v751 = vshrl.u32 %v750, 7
  %v752 = vsub.s32 2, %v751
  %v753 = vrot.slane %v597, %v752
  %v754 = vmul.f32 %v744, %v753
  %v755 = vmul.f32 %v748, %v753
  %756 = vset.pattern.permute.xlu0 11
  %757 = vperm.xlu0 %756, %v598
  %v758 = vpop.permute.xlu0 %757
  %760 = vset.pattern.permute.xlu0 11
  %761 = vperm.xlu0 %760, %v599
  %v762 = vpop.permute.xlu0 %761
  %v764 = vlaneseq
  %v765 = vshrl.u32 %v764, 7
  %v766 = vsub.s32 3, %v765
  %v767 = vrot.slane %v597, %v766
  %v768 = vmul.f32 %v758, %v767
  %v769 = vmul.f32 %v762, %v767
  %770 = vset.pattern.permute.xlu0 12
  %771 = vperm.xlu0 %770, %v598
  %v772 = vpop.permute.xlu0 %771
  %774 = vset.pattern.permute.xlu0 12
  %775 = vperm.xlu0 %774, %v599
  %v776 = vpop.permute.xlu0 %775
  %v778 = vlaneseq
  %v779 = vshrl.u32 %v778, 7
  %v780 = vsub.s32 4, %v779
  %v781 = vrot.slane %v597, %v780
  %v782 = vmul.f32 %v772, %v781
  %v783 = vmul.f32 %v776, %v781
  %784 = vset.pattern.permute.xlu0 13
  %785 = vperm.xlu0 %784, %v598
  %v786 = vpop.permute.xlu0 %785
  %788 = vset.pattern.permute.xlu0 13
  %789 = vperm.xlu0 %788, %v599
  %v790 = vpop.permute.xlu0 %789
  %v792 = vlaneseq
  %v793 = vshrl.u32 %v792, 7
  %v794 = vsub.s32 5, %v793
  %v795 = vrot.slane %v597, %v794
  %v796 = vmul.f32 %v786, %v795
  %v797 = vmul.f32 %v790, %v795
  %798 = vset.pattern.permute.xlu0 14
  %799 = vperm.xlu0 %798, %v598
  %v800 = vpop.permute.xlu0 %799
  %802 = vset.pattern.permute.xlu0 14
  %803 = vperm.xlu0 %802, %v599
  %v804 = vpop.permute.xlu0 %803
  %v806 = vlaneseq
  %v807 = vshrl.u32 %v806, 7
  %v808 = vsub.s32 6, %v807
  %v809 = vrot.slane %v597, %v808
  %v810 = vmul.f32 %v800, %v809
  %v811 = vmul.f32 %v804, %v809
  %812 = vset.pattern.permute.xlu0 15
  %813 = vperm.xlu0 %812, %v598
  %v814 = vpop.permute.xlu0 %813
  %816 = vset.pattern.permute.xlu0 15
  %817 = vperm.xlu0 %816, %v599
  %v818 = vpop.permute.xlu0 %817
  %v820 = vlaneseq
  %v821 = vshrl.u32 %v820, 7
  %v822 = vsub.s32 7, %v821
  %v823 = vrot.slane %v597, %v822
  %v824 = vmul.f32 %v814, %v823
  %v825 = vmul.f32 %v818, %v823
  %v826 = vadd.f32 %v614, %v628
  %v827 = vadd.f32 %v615, %v629
  %v828 = vadd.f32 %v642, %v656
  %v829 = vadd.f32 %v643, %v657
  %v830 = vadd.f32 %v670, %v684
  %v831 = vadd.f32 %v671, %v685
  %v832 = vadd.f32 %v698, %v712
  %v833 = vadd.f32 %v699, %v713
  %v834 = vadd.f32 %v726, %v740
  %v835 = vadd.f32 %v727, %v741
  %v836 = vadd.f32 %v754, %v768
  %v837 = vadd.f32 %v755, %v769
  %v838 = vadd.f32 %v782, %v796
  %v839 = vadd.f32 %v783, %v797
  %v840 = vadd.f32 %v810, %v824
  %v841 = vadd.f32 %v811, %v825
  %v842 = vadd.f32 %v826, %v828
  %v843 = vadd.f32 %v827, %v829
  %v844 = vadd.f32 %v830, %v832
  %v845 = vadd.f32 %v831, %v833
  %v846 = vadd.f32 %v834, %v836
  %v847 = vadd.f32 %v835, %v837
  %v848 = vadd.f32 %v838, %v840
  %v849 = vadd.f32 %v839, %v841
  %v850 = vadd.f32 %v842, %v844
  %v851 = vadd.f32 %v843, %v845
  %v852 = vadd.f32 %v846, %v848
  %v853 = vadd.f32 %v847, %v849
  %v854 = vadd.f32 %v850, %v852
  %v855 = vadd.f32 %v851, %v853
  %856 = vset.pattern.permute.xlu0 16
  %857 = vperm.xlu0 %856, %v598
  %v858 = vpop.permute.xlu0 %857
  %860 = vset.pattern.permute.xlu0 16
  %861 = vperm.xlu0 %860, %v599
  %v862 = vpop.permute.xlu0 %861
  %v864 = vadd.f32 %v854, %v858
  %v865 = vadd.f32 %v855, %v862
  %v866 = vmax.f32 %v864, 0.0
  %v867 = vmax.f32 %v865, 0.0
  %vm868 = vcmask 64512
  %v869 = vsel %vm868, %v866, 0.0
  %870 = vadd.xlane.f32.xlu0 %v869
  %v871 = vpop.xlane.xlu0 %870
  %v872 = vsel %vm868, %v867, 0.0
  %873 = vadd.xlane.f32.xlu0 %v872
  %v874 = vpop.xlane.xlu0 %873
  %v875 = vrcp.pop 8.0
  %v876 = vmul.f32 %v871, %v875
  %v877 = vmul.f32 %v874, %v875
  %v878 = vmul.f32 %v866, %v866
  %v879 = vmul.f32 %v867, %v867
  %v880 = vsel %vm868, %v878, 0.0
  %881 = vadd.xlane.f32.xlu0 %v880
  %v882 = vpop.xlane.xlu0 %881
  %v883 = vsel %vm868, %v879, 0.0
  %884 = vadd.xlane.f32.xlu0 %v883
  %v885 = vpop.xlane.xlu0 %884
  %v886 = vmul.f32 %v882, %v875
  %v887 = vmul.f32 %v885, %v875
  %v888 = vmul.f32 %v876, %v876
  %v889 = vmul.f32 %v877, %v877
  %v890 = vsub.f32 %v886, %v888
  %v891 = vsub.f32 %v887, %v889
  %v892 = vmax.f32 %v890, 0.0
  %v893 = vmax.f32 %v891, 0.0
  %v894 = vadd.f32 %v892, 1e-05
  %v895 = vadd.f32 %v893, 1e-05
  %v896 = vrsqrt.pop %v894
  %v897 = vrsqrt.pop %v895
  %v898 = vmul.f32 %v598, %v896
  %v899 = vmul.f32 %v599, %v897
  %v900 = vmul.f32 %v876, %v898
  %v901 = vmul.f32 %v877, %v899
  %904 = vrot.lane.b32.xlu0 %v900, 1
  %v905 = vpop.permute.xlu0 %904
  %906 = vrot.lane.b32.xlu0 %v901, 1
  %v907 = vpop.permute.xlu0 %906
  %v910 = vsub.f32 %v598, %v905
  %v911 = vsub.f32 %v599, %v907
  %913 = vset.pattern.permute.xlu0 17
  %914 = vperm.xlu0 %913, %v898
  %v915 = vpop.permute.xlu0 %914
  %918 = vset.pattern.permute.xlu0 17
  %919 = vperm.xlu0 %918, %v899
  %v920 = vpop.permute.xlu0 %919
  %v922 = vmul.f32 %v866, %v915
  %v923 = vmul.f32 %v867, %v920
  %925 = vset.pattern.permute.xlu0 18
  %926 = vperm.xlu0 %925, %v910
  %v927 = vpop.permute.xlu0 %926
  %930 = vset.pattern.permute.xlu0 18
  %931 = vperm.xlu0 %930, %v911
  %v932 = vpop.permute.xlu0 %931
  %v934 = vadd.f32 %v922, %v927
  %v935 = vadd.f32 %v923, %v932
  %938 = vrot.lane.b32.xlu0 %v934, 126
  %v939 = vpop.permute.xlu0 %938
  %940 = vrot.lane.b32.xlu0 %v935, 126
  %v941 = vpop.permute.xlu0 %940
  %v944 = vmax.f32 %v934, %v939
  %v945 = vmax.f32 %v935, %v941
  %948 = vrot.lane.b32.xlu0 %v944, 124
  %v949 = vpop.permute.xlu0 %948
  %950 = vrot.lane.b32.xlu0 %v945, 124
  %v951 = vpop.permute.xlu0 %950
  %v954 = vmax.f32 %v944, %v949
  %v955 = vmax.f32 %v945, %v951
  %v956 = vld [vmem:[%s1 + $0x30] sm:$0xff]
  %v957 = vld [vmem:[%s1 + $0x38] sm:$0xff]
  %v958 = vld [vmem:[%s1 + $0x40] sm:$0xff]
  %v959 = vld [vmem:[%s1 + $0x48] sm:$0xff]
  %v960 = vld [vmem:[%s1 + $0x50] sm:$0xff]
  %v961 = vld [vmem:[%s1 + $0x58] sm:$0xff]
  %v962 = vld [vmem:[%s1 + $0x60] sm:$0xff]
  %v963 = vld [vmem:[%s1 + $0x68] sm:$0xff]
  %965 = vset.pattern.permute.xlu0 0
  %966 = vperm.xlu0 %965, %v956
  %v967 = vpop.permute.xlu0 %966
  %970 = vset.pattern.permute.xlu0 0
  %971 = vperm.xlu0 %970, %v957
  %v972 = vpop.permute.xlu0 %971
  %975 = vset.pattern.permute.xlu0 0
  %976 = vperm.xlu0 %975, %v958
  %v977 = vpop.permute.xlu0 %976
  %980 = vset.pattern.permute.xlu0 0
  %981 = vperm.xlu0 %980, %v959
  %v982 = vpop.permute.xlu0 %981
  %985 = vset.pattern.permute.xlu0 0
  %986 = vperm.xlu0 %985, %v960
  %v987 = vpop.permute.xlu0 %986
  %990 = vset.pattern.permute.xlu0 0
  %991 = vperm.xlu0 %990, %v961
  %v992 = vpop.permute.xlu0 %991
  %995 = vset.pattern.permute.xlu0 0
  %996 = vperm.xlu0 %995, %v962
  %v997 = vpop.permute.xlu0 %996
  %1000 = vset.pattern.permute.xlu0 0
  %1001 = vperm.xlu0 %1000, %v963
  %v1002 = vpop.permute.xlu0 %1001
  %v1004 = vlaneseq
  %v1005 = vshrl.u32 %v1004, 7
  %v1006 = vsub.s32 0, %v1005
  %v1007 = vrot.slane %v954, %v1006
  %v1008 = vmul.f32 %v967, %v1007
  %v1009 = vmul.f32 %v972, %v1007
  %v1010 = vmul.f32 %v977, %v1007
  %v1011 = vmul.f32 %v982, %v1007
  %v1012 = vmul.f32 %v987, %v1007
  %v1013 = vmul.f32 %v992, %v1007
  %v1014 = vmul.f32 %v997, %v1007
  %v1015 = vmul.f32 %v1002, %v1007
  %1016 = vset.pattern.permute.xlu0 1
  %1017 = vperm.xlu0 %1016, %v956
  %v1018 = vpop.permute.xlu0 %1017
  %1020 = vset.pattern.permute.xlu0 1
  %1021 = vperm.xlu0 %1020, %v957
  %v1022 = vpop.permute.xlu0 %1021
  %1024 = vset.pattern.permute.xlu0 1
  %1025 = vperm.xlu0 %1024, %v958
  %v1026 = vpop.permute.xlu0 %1025
  %1028 = vset.pattern.permute.xlu0 1
  %1029 = vperm.xlu0 %1028, %v959
  %v1030 = vpop.permute.xlu0 %1029
  %1032 = vset.pattern.permute.xlu0 1
  %1033 = vperm.xlu0 %1032, %v960
  %v1034 = vpop.permute.xlu0 %1033
  %1036 = vset.pattern.permute.xlu0 1
  %1037 = vperm.xlu0 %1036, %v961
  %v1038 = vpop.permute.xlu0 %1037
  %1040 = vset.pattern.permute.xlu0 1
  %1041 = vperm.xlu0 %1040, %v962
  %v1042 = vpop.permute.xlu0 %1041
  %1044 = vset.pattern.permute.xlu0 1
  %1045 = vperm.xlu0 %1044, %v963
  %v1046 = vpop.permute.xlu0 %1045
  %v1048 = vlaneseq
  %v1049 = vshrl.u32 %v1048, 7
  %v1050 = vsub.s32 1, %v1049
  %v1051 = vrot.slane %v954, %v1050
  %v1052 = vmul.f32 %v1018, %v1051
  %v1053 = vmul.f32 %v1022, %v1051
  %v1054 = vmul.f32 %v1026, %v1051
  %v1055 = vmul.f32 %v1030, %v1051
  %v1056 = vmul.f32 %v1034, %v1051
  %v1057 = vmul.f32 %v1038, %v1051
  %v1058 = vmul.f32 %v1042, %v1051
  %v1059 = vmul.f32 %v1046, %v1051
  %1060 = vset.pattern.permute.xlu0 2
  %1061 = vperm.xlu0 %1060, %v956
  %v1062 = vpop.permute.xlu0 %1061
  %1064 = vset.pattern.permute.xlu0 2
  %1065 = vperm.xlu0 %1064, %v957
  %v1066 = vpop.permute.xlu0 %1065
  %1068 = vset.pattern.permute.xlu0 2
  %1069 = vperm.xlu0 %1068, %v958
  %v1070 = vpop.permute.xlu0 %1069
  %1072 = vset.pattern.permute.xlu0 2
  %1073 = vperm.xlu0 %1072, %v959
  %v1074 = vpop.permute.xlu0 %1073
  %1076 = vset.pattern.permute.xlu0 2
  %1077 = vperm.xlu0 %1076, %v960
  %v1078 = vpop.permute.xlu0 %1077
  %1080 = vset.pattern.permute.xlu0 2
  %1081 = vperm.xlu0 %1080, %v961
  %v1082 = vpop.permute.xlu0 %1081
  %1084 = vset.pattern.permute.xlu0 2
  %1085 = vperm.xlu0 %1084, %v962
  %v1086 = vpop.permute.xlu0 %1085
  %1088 = vset.pattern.permute.xlu0 2
  %1089 = vperm.xlu0 %1088, %v963
  %v1090 = vpop.permute.xlu0 %1089
  %v1092 = vlaneseq
  %v1093 = vshrl.u32 %v1092, 7
  %v1094 = vsub.s32 2, %v1093
  %v1095 = vrot.slane %v954, %v1094
  %v1096 = vmul.f32 %v1062, %v1095
  %v1097 = vmul.f32 %v1066, %v1095
  %v1098 = vmul.f32 %v1070, %v1095
  %v1099 = vmul.f32 %v1074, %v1095
  %v1100 = vmul.f32 %v1078, %v1095
  %v1101 = vmul.f32 %v1082, %v1095
  %v1102 = vmul.f32 %v1086, %v1095
  %v1103 = vmul.f32 %v1090, %v1095
  %1104 = vset.pattern.permute.xlu0 3
  %1105 = vperm.xlu0 %1104, %v956
  %v1106 = vpop.permute.xlu0 %1105
  %1108 = vset.pattern.permute.xlu0 3
  %1109 = vperm.xlu0 %1108, %v957
  %v1110 = vpop.permute.xlu0 %1109
  %1112 = vset.pattern.permute.xlu0 3
  %1113 = vperm.xlu0 %1112, %v958
  %v1114 = vpop.permute.xlu0 %1113
  %1116 = vset.pattern.permute.xlu0 3
  %1117 = vperm.xlu0 %1116, %v959
  %v1118 = vpop.permute.xlu0 %1117
  %1120 = vset.pattern.permute.xlu0 3
  %1121 = vperm.xlu0 %1120, %v960
  %v1122 = vpop.permute.xlu0 %1121
  %1124 = vset.pattern.permute.xlu0 3
  %1125 = vperm.xlu0 %1124, %v961
  %v1126 = vpop.permute.xlu0 %1125
  %1128 = vset.pattern.permute.xlu0 3
  %1129 = vperm.xlu0 %1128, %v962
  %v1130 = vpop.permute.xlu0 %1129
  %1132 = vset.pattern.permute.xlu0 3
  %1133 = vperm.xlu0 %1132, %v963
  %v1134 = vpop.permute.xlu0 %1133
  %v1136 = vlaneseq
  %v1137 = vshrl.u32 %v1136, 7
  %v1138 = vsub.s32 3, %v1137
  %v1139 = vrot.slane %v954, %v1138
  %v1140 = vmul.f32 %v1106, %v1139
  %v1141 = vmul.f32 %v1110, %v1139
  %v1142 = vmul.f32 %v1114, %v1139
  %v1143 = vmul.f32 %v1118, %v1139
  %v1144 = vmul.f32 %v1122, %v1139
  %v1145 = vmul.f32 %v1126, %v1139
  %v1146 = vmul.f32 %v1130, %v1139
  %v1147 = vmul.f32 %v1134, %v1139
  %1148 = vset.pattern.permute.xlu0 4
  %1149 = vperm.xlu0 %1148, %v956
  %v1150 = vpop.permute.xlu0 %1149
  %1152 = vset.pattern.permute.xlu0 4
  %1153 = vperm.xlu0 %1152, %v957
  %v1154 = vpop.permute.xlu0 %1153
  %1156 = vset.pattern.permute.xlu0 4
  %1157 = vperm.xlu0 %1156, %v958
  %v1158 = vpop.permute.xlu0 %1157
  %1160 = vset.pattern.permute.xlu0 4
  %1161 = vperm.xlu0 %1160, %v959
  %v1162 = vpop.permute.xlu0 %1161
  %1164 = vset.pattern.permute.xlu0 4
  %1165 = vperm.xlu0 %1164, %v960
  %v1166 = vpop.permute.xlu0 %1165
  %1168 = vset.pattern.permute.xlu0 4
  %1169 = vperm.xlu0 %1168, %v961
  %v1170 = vpop.permute.xlu0 %1169
  %1172 = vset.pattern.permute.xlu0 4
  %1173 = vperm.xlu0 %1172, %v962
  %v1174 = vpop.permute.xlu0 %1173
  %1176 = vset.pattern.permute.xlu0 4
  %1177 = vperm.xlu0 %1176, %v963
  %v1178 = vpop.permute.xlu0 %1177
  %v1180 = vlaneseq
  %v1181 = vshrl.u32 %v1180, 7
  %v1182 = vsub.s32 4, %v1181
  %v1183 = vrot.slane %v954, %v1182
  %v1184 = vmul.f32 %v1150, %v1183
  %v1185 = vmul.f32 %v1154, %v1183
  %v1186 = vmul.f32 %v1158, %v1183
  %v1187 = vmul.f32 %v1162, %v1183
  %v1188 = vmul.f32 %v1166, %v1183
  %v1189 = vmul.f32 %v1170, %v1183
  %v1190 = vmul.f32 %v1174, %v1183
  %v1191 = vmul.f32 %v1178, %v1183
  %1192 = vset.pattern.permute.xlu0 5
  %1193 = vperm.xlu0 %1192, %v956
  %v1194 = vpop.permute.xlu0 %1193
  %1196 = vset.pattern.permute.xlu0 5
  %1197 = vperm.xlu0 %1196, %v957
  %v1198 = vpop.permute.xlu0 %1197
  %1200 = vset.pattern.permute.xlu0 5
  %1201 = vperm.xlu0 %1200, %v958
  %v1202 = vpop.permute.xlu0 %1201
  %1204 = vset.pattern.permute.xlu0 5
  %1205 = vperm.xlu0 %1204, %v959
  %v1206 = vpop.permute.xlu0 %1205
  %1208 = vset.pattern.permute.xlu0 5
  %1209 = vperm.xlu0 %1208, %v960
  %v1210 = vpop.permute.xlu0 %1209
  %1212 = vset.pattern.permute.xlu0 5
  %1213 = vperm.xlu0 %1212, %v961
  %v1214 = vpop.permute.xlu0 %1213
  %1216 = vset.pattern.permute.xlu0 5
  %1217 = vperm.xlu0 %1216, %v962
  %v1218 = vpop.permute.xlu0 %1217
  %1220 = vset.pattern.permute.xlu0 5
  %1221 = vperm.xlu0 %1220, %v963
  %v1222 = vpop.permute.xlu0 %1221
  %v1224 = vlaneseq
  %v1225 = vshrl.u32 %v1224, 7
  %v1226 = vsub.s32 5, %v1225
  %v1227 = vrot.slane %v954, %v1226
  %v1228 = vmul.f32 %v1194, %v1227
  %v1229 = vmul.f32 %v1198, %v1227
  %v1230 = vmul.f32 %v1202, %v1227
  %v1231 = vmul.f32 %v1206, %v1227
  %v1232 = vmul.f32 %v1210, %v1227
  %v1233 = vmul.f32 %v1214, %v1227
  %v1234 = vmul.f32 %v1218, %v1227
  %v1235 = vmul.f32 %v1222, %v1227
  %1236 = vset.pattern.permute.xlu0 6
  %1237 = vperm.xlu0 %1236, %v956
  %v1238 = vpop.permute.xlu0 %1237
  %1240 = vset.pattern.permute.xlu0 6
  %1241 = vperm.xlu0 %1240, %v957
  %v1242 = vpop.permute.xlu0 %1241
  %1244 = vset.pattern.permute.xlu0 6
  %1245 = vperm.xlu0 %1244, %v958
  %v1246 = vpop.permute.xlu0 %1245
  %1248 = vset.pattern.permute.xlu0 6
  %1249 = vperm.xlu0 %1248, %v959
  %v1250 = vpop.permute.xlu0 %1249
  %1252 = vset.pattern.permute.xlu0 6
  %1253 = vperm.xlu0 %1252, %v960
  %v1254 = vpop.permute.xlu0 %1253
  %1256 = vset.pattern.permute.xlu0 6
  %1257 = vperm.xlu0 %1256, %v961
  %v1258 = vpop.permute.xlu0 %1257
  %1260 = vset.pattern.permute.xlu0 6
  %1261 = vperm.xlu0 %1260, %v962
  %v1262 = vpop.permute.xlu0 %1261
  %1264 = vset.pattern.permute.xlu0 6
  %1265 = vperm.xlu0 %1264, %v963
  %v1266 = vpop.permute.xlu0 %1265
  %v1268 = vlaneseq
  %v1269 = vshrl.u32 %v1268, 7
  %v1270 = vsub.s32 6, %v1269
  %v1271 = vrot.slane %v954, %v1270
  %v1272 = vmul.f32 %v1238, %v1271
  %v1273 = vmul.f32 %v1242, %v1271
  %v1274 = vmul.f32 %v1246, %v1271
  %v1275 = vmul.f32 %v1250, %v1271
  %v1276 = vmul.f32 %v1254, %v1271
  %v1277 = vmul.f32 %v1258, %v1271
  %v1278 = vmul.f32 %v1262, %v1271
  %v1279 = vmul.f32 %v1266, %v1271
  %1280 = vset.pattern.permute.xlu0 7
  %1281 = vperm.xlu0 %1280, %v956
  %v1282 = vpop.permute.xlu0 %1281
  %1284 = vset.pattern.permute.xlu0 7
  %1285 = vperm.xlu0 %1284, %v957
  %v1286 = vpop.permute.xlu0 %1285
  %1288 = vset.pattern.permute.xlu0 7
  %1289 = vperm.xlu0 %1288, %v958
  %v1290 = vpop.permute.xlu0 %1289
  %1292 = vset.pattern.permute.xlu0 7
  %1293 = vperm.xlu0 %1292, %v959
  %v1294 = vpop.permute.xlu0 %1293
  %1296 = vset.pattern.permute.xlu0 7
  %1297 = vperm.xlu0 %1296, %v960
  %v1298 = vpop.permute.xlu0 %1297
  %1300 = vset.pattern.permute.xlu0 7
  %1301 = vperm.xlu0 %1300, %v961
  %v1302 = vpop.permute.xlu0 %1301
  %1304 = vset.pattern.permute.xlu0 7
  %1305 = vperm.xlu0 %1304, %v962
  %v1306 = vpop.permute.xlu0 %1305
  %1308 = vset.pattern.permute.xlu0 7
  %1309 = vperm.xlu0 %1308, %v963
  %v1310 = vpop.permute.xlu0 %1309
  %v1312 = vlaneseq
  %v1313 = vshrl.u32 %v1312, 7
  %v1314 = vsub.s32 7, %v1313
  %v1315 = vrot.slane %v954, %v1314
  %v1316 = vmul.f32 %v1282, %v1315
  %v1317 = vmul.f32 %v1286, %v1315
  %v1318 = vmul.f32 %v1290, %v1315
  %v1319 = vmul.f32 %v1294, %v1315
  %v1320 = vmul.f32 %v1298, %v1315
  %v1321 = vmul.f32 %v1302, %v1315
  %v1322 = vmul.f32 %v1306, %v1315
  %v1323 = vmul.f32 %v1310, %v1315
  %1324 = vset.pattern.permute.xlu0 8
  %1325 = vperm.xlu0 %1324, %v956
  %v1326 = vpop.permute.xlu0 %1325
  %1328 = vset.pattern.permute.xlu0 8
  %1329 = vperm.xlu0 %1328, %v957
  %v1330 = vpop.permute.xlu0 %1329
  %1332 = vset.pattern.permute.xlu0 8
  %1333 = vperm.xlu0 %1332, %v958
  %v1334 = vpop.permute.xlu0 %1333
  %1336 = vset.pattern.permute.xlu0 8
  %1337 = vperm.xlu0 %1336, %v959
  %v1338 = vpop.permute.xlu0 %1337
  %1340 = vset.pattern.permute.xlu0 8
  %1341 = vperm.xlu0 %1340, %v960
  %v1342 = vpop.permute.xlu0 %1341
  %1344 = vset.pattern.permute.xlu0 8
  %1345 = vperm.xlu0 %1344, %v961
  %v1346 = vpop.permute.xlu0 %1345
  %1348 = vset.pattern.permute.xlu0 8
  %1349 = vperm.xlu0 %1348, %v962
  %v1350 = vpop.permute.xlu0 %1349
  %1352 = vset.pattern.permute.xlu0 8
  %1353 = vperm.xlu0 %1352, %v963
  %v1354 = vpop.permute.xlu0 %1353
  %v1356 = vlaneseq
  %v1357 = vshrl.u32 %v1356, 7
  %v1358 = vsub.s32 0, %v1357
  %v1359 = vrot.slane %v955, %v1358
  %v1360 = vmul.f32 %v1326, %v1359
  %v1361 = vmul.f32 %v1330, %v1359
  %v1362 = vmul.f32 %v1334, %v1359
  %v1363 = vmul.f32 %v1338, %v1359
  %v1364 = vmul.f32 %v1342, %v1359
  %v1365 = vmul.f32 %v1346, %v1359
  %v1366 = vmul.f32 %v1350, %v1359
  %v1367 = vmul.f32 %v1354, %v1359
  %1368 = vset.pattern.permute.xlu0 9
  %1369 = vperm.xlu0 %1368, %v956
  %v1370 = vpop.permute.xlu0 %1369
  %1372 = vset.pattern.permute.xlu0 9
  %1373 = vperm.xlu0 %1372, %v957
  %v1374 = vpop.permute.xlu0 %1373
  %1376 = vset.pattern.permute.xlu0 9
  %1377 = vperm.xlu0 %1376, %v958
  %v1378 = vpop.permute.xlu0 %1377
  %1380 = vset.pattern.permute.xlu0 9
  %1381 = vperm.xlu0 %1380, %v959
  %v1382 = vpop.permute.xlu0 %1381
  %1384 = vset.pattern.permute.xlu0 9
  %1385 = vperm.xlu0 %1384, %v960
  %v1386 = vpop.permute.xlu0 %1385
  %1388 = vset.pattern.permute.xlu0 9
  %1389 = vperm.xlu0 %1388, %v961
  %v1390 = vpop.permute.xlu0 %1389
  %1392 = vset.pattern.permute.xlu0 9
  %1393 = vperm.xlu0 %1392, %v962
  %v1394 = vpop.permute.xlu0 %1393
  %1396 = vset.pattern.permute.xlu0 9
  %1397 = vperm.xlu0 %1396, %v963
  %v1398 = vpop.permute.xlu0 %1397
  %v1400 = vlaneseq
  %v1401 = vshrl.u32 %v1400, 7
  %v1402 = vsub.s32 1, %v1401
  %v1403 = vrot.slane %v955, %v1402
  %v1404 = vmul.f32 %v1370, %v1403
  %v1405 = vmul.f32 %v1374, %v1403
  %v1406 = vmul.f32 %v1378, %v1403
  %v1407 = vmul.f32 %v1382, %v1403
  %v1408 = vmul.f32 %v1386, %v1403
  %v1409 = vmul.f32 %v1390, %v1403
  %v1410 = vmul.f32 %v1394, %v1403
  %v1411 = vmul.f32 %v1398, %v1403
  %1412 = vset.pattern.permute.xlu0 10
  %1413 = vperm.xlu0 %1412, %v956
  %v1414 = vpop.permute.xlu0 %1413
  %1416 = vset.pattern.permute.xlu0 10
  %1417 = vperm.xlu0 %1416, %v957
  %v1418 = vpop.permute.xlu0 %1417
  %1420 = vset.pattern.permute.xlu0 10
  %1421 = vperm.xlu0 %1420, %v958
  %v1422 = vpop.permute.xlu0 %1421
  %1424 = vset.pattern.permute.xlu0 10
  %1425 = vperm.xlu0 %1424, %v959
  %v1426 = vpop.permute.xlu0 %1425
  %1428 = vset.pattern.permute.xlu0 10
  %1429 = vperm.xlu0 %1428, %v960
  %v1430 = vpop.permute.xlu0 %1429
  %1432 = vset.pattern.permute.xlu0 10
  %1433 = vperm.xlu0 %1432, %v961
  %v1434 = vpop.permute.xlu0 %1433
  %1436 = vset.pattern.permute.xlu0 10
  %1437 = vperm.xlu0 %1436, %v962
  %v1438 = vpop.permute.xlu0 %1437
  %1440 = vset.pattern.permute.xlu0 10
  %1441 = vperm.xlu0 %1440, %v963
  %v1442 = vpop.permute.xlu0 %1441
  %v1444 = vlaneseq
  %v1445 = vshrl.u32 %v1444, 7
  %v1446 = vsub.s32 2, %v1445
  %v1447 = vrot.slane %v955, %v1446
  %v1448 = vmul.f32 %v1414, %v1447
  %v1449 = vmul.f32 %v1418, %v1447
  %v1450 = vmul.f32 %v1422, %v1447
  %v1451 = vmul.f32 %v1426, %v1447
  %v1452 = vmul.f32 %v1430, %v1447
  %v1453 = vmul.f32 %v1434, %v1447
  %v1454 = vmul.f32 %v1438, %v1447
  %v1455 = vmul.f32 %v1442, %v1447
  %1456 = vset.pattern.permute.xlu0 11
  %1457 = vperm.xlu0 %1456, %v956
  %v1458 = vpop.permute.xlu0 %1457
  %1460 = vset.pattern.permute.xlu0 11
  %1461 = vperm.xlu0 %1460, %v957
  %v1462 = vpop.permute.xlu0 %1461
  %1464 = vset.pattern.permute.xlu0 11
  %1465 = vperm.xlu0 %1464, %v958
  %v1466 = vpop.permute.xlu0 %1465
  %1468 = vset.pattern.permute.xlu0 11
  %1469 = vperm.xlu0 %1468, %v959
  %v1470 = vpop.permute.xlu0 %1469
  %1472 = vset.pattern.permute.xlu0 11
  %1473 = vperm.xlu0 %1472, %v960
  %v1474 = vpop.permute.xlu0 %1473
  %1476 = vset.pattern.permute.xlu0 11
  %1477 = vperm.xlu0 %1476, %v961
  %v1478 = vpop.permute.xlu0 %1477
  %1480 = vset.pattern.permute.xlu0 11
  %1481 = vperm.xlu0 %1480, %v962
  %v1482 = vpop.permute.xlu0 %1481
  %1484 = vset.pattern.permute.xlu0 11
  %1485 = vperm.xlu0 %1484, %v963
  %v1486 = vpop.permute.xlu0 %1485
  %v1488 = vlaneseq
  %v1489 = vshrl.u32 %v1488, 7
  %v1490 = vsub.s32 3, %v1489
  %v1491 = vrot.slane %v955, %v1490
  %v1492 = vmul.f32 %v1458, %v1491
  %v1493 = vmul.f32 %v1462, %v1491
  %v1494 = vmul.f32 %v1466, %v1491
  %v1495 = vmul.f32 %v1470, %v1491
  %v1496 = vmul.f32 %v1474, %v1491
  %v1497 = vmul.f32 %v1478, %v1491
  %v1498 = vmul.f32 %v1482, %v1491
  %v1499 = vmul.f32 %v1486, %v1491
  %1500 = vset.pattern.permute.xlu0 12
  %1501 = vperm.xlu0 %1500, %v956
  %v1502 = vpop.permute.xlu0 %1501
  %1504 = vset.pattern.permute.xlu0 12
  %1505 = vperm.xlu0 %1504, %v957
  %v1506 = vpop.permute.xlu0 %1505
  %1508 = vset.pattern.permute.xlu0 12
  %1509 = vperm.xlu0 %1508, %v958
  %v1510 = vpop.permute.xlu0 %1509
  %1512 = vset.pattern.permute.xlu0 12
  %1513 = vperm.xlu0 %1512, %v959
  %v1514 = vpop.permute.xlu0 %1513
  %1516 = vset.pattern.permute.xlu0 12
  %1517 = vperm.xlu0 %1516, %v960
  %v1518 = vpop.permute.xlu0 %1517
  %1520 = vset.pattern.permute.xlu0 12
  %1521 = vperm.xlu0 %1520, %v961
  %v1522 = vpop.permute.xlu0 %1521
  %1524 = vset.pattern.permute.xlu0 12
  %1525 = vperm.xlu0 %1524, %v962
  %v1526 = vpop.permute.xlu0 %1525
  %1528 = vset.pattern.permute.xlu0 12
  %1529 = vperm.xlu0 %1528, %v963
  %v1530 = vpop.permute.xlu0 %1529
  %v1532 = vlaneseq
  %v1533 = vshrl.u32 %v1532, 7
  %v1534 = vsub.s32 4, %v1533
  %v1535 = vrot.slane %v955, %v1534
  %v1536 = vmul.f32 %v1502, %v1535
  %v1537 = vmul.f32 %v1506, %v1535
  %v1538 = vmul.f32 %v1510, %v1535
  %v1539 = vmul.f32 %v1514, %v1535
  %v1540 = vmul.f32 %v1518, %v1535
  %v1541 = vmul.f32 %v1522, %v1535
  %v1542 = vmul.f32 %v1526, %v1535
  %v1543 = vmul.f32 %v1530, %v1535
  %1544 = vset.pattern.permute.xlu0 13
  %1545 = vperm.xlu0 %1544, %v956
  %v1546 = vpop.permute.xlu0 %1545
  %1548 = vset.pattern.permute.xlu0 13
  %1549 = vperm.xlu0 %1548, %v957
  %v1550 = vpop.permute.xlu0 %1549
  %1552 = vset.pattern.permute.xlu0 13
  %1553 = vperm.xlu0 %1552, %v958
  %v1554 = vpop.permute.xlu0 %1553
  %1556 = vset.pattern.permute.xlu0 13
  %1557 = vperm.xlu0 %1556, %v959
  %v1558 = vpop.permute.xlu0 %1557
  %1560 = vset.pattern.permute.xlu0 13
  %1561 = vperm.xlu0 %1560, %v960
  %v1562 = vpop.permute.xlu0 %1561
  %1564 = vset.pattern.permute.xlu0 13
  %1565 = vperm.xlu0 %1564, %v961
  %v1566 = vpop.permute.xlu0 %1565
  %1568 = vset.pattern.permute.xlu0 13
  %1569 = vperm.xlu0 %1568, %v962
  %v1570 = vpop.permute.xlu0 %1569
  %1572 = vset.pattern.permute.xlu0 13
  %1573 = vperm.xlu0 %1572, %v963
  %v1574 = vpop.permute.xlu0 %1573
  %v1576 = vlaneseq
  %v1577 = vshrl.u32 %v1576, 7
  %v1578 = vsub.s32 5, %v1577
  %v1579 = vrot.slane %v955, %v1578
  %v1580 = vmul.f32 %v1546, %v1579
  %v1581 = vmul.f32 %v1550, %v1579
  %v1582 = vmul.f32 %v1554, %v1579
  %v1583 = vmul.f32 %v1558, %v1579
  %v1584 = vmul.f32 %v1562, %v1579
  %v1585 = vmul.f32 %v1566, %v1579
  %v1586 = vmul.f32 %v1570, %v1579
  %v1587 = vmul.f32 %v1574, %v1579
  %1588 = vset.pattern.permute.xlu0 14
  %1589 = vperm.xlu0 %1588, %v956
  %v1590 = vpop.permute.xlu0 %1589
  %1592 = vset.pattern.permute.xlu0 14
  %1593 = vperm.xlu0 %1592, %v957
  %v1594 = vpop.permute.xlu0 %1593
  %1596 = vset.pattern.permute.xlu0 14
  %1597 = vperm.xlu0 %1596, %v958
  %v1598 = vpop.permute.xlu0 %1597
  %1600 = vset.pattern.permute.xlu0 14
  %1601 = vperm.xlu0 %1600, %v959
  %v1602 = vpop.permute.xlu0 %1601
  %1604 = vset.pattern.permute.xlu0 14
  %1605 = vperm.xlu0 %1604, %v960
  %v1606 = vpop.permute.xlu0 %1605
  %1608 = vset.pattern.permute.xlu0 14
  %1609 = vperm.xlu0 %1608, %v961
  %v1610 = vpop.permute.xlu0 %1609
  %1612 = vset.pattern.permute.xlu0 14
  %1613 = vperm.xlu0 %1612, %v962
  %v1614 = vpop.permute.xlu0 %1613
  %1616 = vset.pattern.permute.xlu0 14
  %1617 = vperm.xlu0 %1616, %v963
  %v1618 = vpop.permute.xlu0 %1617
  %v1620 = vlaneseq
  %v1621 = vshrl.u32 %v1620, 7
  %v1622 = vsub.s32 6, %v1621
  %v1623 = vrot.slane %v955, %v1622
  %v1624 = vmul.f32 %v1590, %v1623
  %v1625 = vmul.f32 %v1594, %v1623
  %v1626 = vmul.f32 %v1598, %v1623
  %v1627 = vmul.f32 %v1602, %v1623
  %v1628 = vmul.f32 %v1606, %v1623
  %v1629 = vmul.f32 %v1610, %v1623
  %v1630 = vmul.f32 %v1614, %v1623
  %v1631 = vmul.f32 %v1618, %v1623
  %1632 = vset.pattern.permute.xlu0 15
  %1633 = vperm.xlu0 %1632, %v956
  %v1634 = vpop.permute.xlu0 %1633
  %1636 = vset.pattern.permute.xlu0 15
  %1637 = vperm.xlu0 %1636, %v957
  %v1638 = vpop.permute.xlu0 %1637
  %1640 = vset.pattern.permute.xlu0 15
  %1641 = vperm.xlu0 %1640, %v958
  %v1642 = vpop.permute.xlu0 %1641
  %1644 = vset.pattern.permute.xlu0 15
  %1645 = vperm.xlu0 %1644, %v959
  %v1646 = vpop.permute.xlu0 %1645
  %1648 = vset.pattern.permute.xlu0 15
  %1649 = vperm.xlu0 %1648, %v960
  %v1650 = vpop.permute.xlu0 %1649
  %1652 = vset.pattern.permute.xlu0 15
  %1653 = vperm.xlu0 %1652, %v961
  %v1654 = vpop.permute.xlu0 %1653
  %1656 = vset.pattern.permute.xlu0 15
  %1657 = vperm.xlu0 %1656, %v962
  %v1658 = vpop.permute.xlu0 %1657
  %1660 = vset.pattern.permute.xlu0 15
  %1661 = vperm.xlu0 %1660, %v963
  %v1662 = vpop.permute.xlu0 %1661
  %v1664 = vlaneseq
  %v1665 = vshrl.u32 %v1664, 7
  %v1666 = vsub.s32 7, %v1665
  %v1667 = vrot.slane %v955, %v1666
  %v1668 = vmul.f32 %v1634, %v1667
  %v1669 = vmul.f32 %v1638, %v1667
  %v1670 = vmul.f32 %v1642, %v1667
  %v1671 = vmul.f32 %v1646, %v1667
  %v1672 = vmul.f32 %v1650, %v1667
  %v1673 = vmul.f32 %v1654, %v1667
  %v1674 = vmul.f32 %v1658, %v1667
  %v1675 = vmul.f32 %v1662, %v1667
  %v1676 = vadd.f32 %v1008, %v1052
  %v1677 = vadd.f32 %v1009, %v1053
  %v1678 = vadd.f32 %v1010, %v1054
  %v1679 = vadd.f32 %v1011, %v1055
  %v1680 = vadd.f32 %v1012, %v1056
  %v1681 = vadd.f32 %v1013, %v1057
  %v1682 = vadd.f32 %v1014, %v1058
  %v1683 = vadd.f32 %v1015, %v1059
  %v1684 = vadd.f32 %v1096, %v1140
  %v1685 = vadd.f32 %v1097, %v1141
  %v1686 = vadd.f32 %v1098, %v1142
  %v1687 = vadd.f32 %v1099, %v1143
  %v1688 = vadd.f32 %v1100, %v1144
  %v1689 = vadd.f32 %v1101, %v1145
  %v1690 = vadd.f32 %v1102, %v1146
  %v1691 = vadd.f32 %v1103, %v1147
  %v1692 = vadd.f32 %v1184, %v1228
  %v1693 = vadd.f32 %v1185, %v1229
  %v1694 = vadd.f32 %v1186, %v1230
  %v1695 = vadd.f32 %v1187, %v1231
  %v1696 = vadd.f32 %v1188, %v1232
  %v1697 = vadd.f32 %v1189, %v1233
  %v1698 = vadd.f32 %v1190, %v1234
  %v1699 = vadd.f32 %v1191, %v1235
  %v1700 = vadd.f32 %v1272, %v1316
  %v1701 = vadd.f32 %v1273, %v1317
  %v1702 = vadd.f32 %v1274, %v1318
  %v1703 = vadd.f32 %v1275, %v1319
  %v1704 = vadd.f32 %v1276, %v1320
  %v1705 = vadd.f32 %v1277, %v1321
  %v1706 = vadd.f32 %v1278, %v1322
  %v1707 = vadd.f32 %v1279, %v1323
  %v1708 = vadd.f32 %v1360, %v1404
  %v1709 = vadd.f32 %v1361, %v1405
  %v1710 = vadd.f32 %v1362, %v1406
  %v1711 = vadd.f32 %v1363, %v1407
  %v1712 = vadd.f32 %v1364, %v1408
  %v1713 = vadd.f32 %v1365, %v1409
  %v1714 = vadd.f32 %v1366, %v1410
  %v1715 = vadd.f32 %v1367, %v1411
  %v1716 = vadd.f32 %v1448, %v1492
  %v1717 = vadd.f32 %v1449, %v1493
  %v1718 = vadd.f32 %v1450, %v1494
  %v1719 = vadd.f32 %v1451, %v1495
  %v1720 = vadd.f32 %v1452, %v1496
  %v1721 = vadd.f32 %v1453, %v1497
  %v1722 = vadd.f32 %v1454, %v1498
  %v1723 = vadd.f32 %v1455, %v1499
  %v1724 = vadd.f32 %v1536, %v1580
  %v1725 = vadd.f32 %v1537, %v1581
  %v1726 = vadd.f32 %v1538, %v1582
  %v1727 = vadd.f32 %v1539, %v1583
  %v1728 = vadd.f32 %v1540, %v1584
  %v1729 = vadd.f32 %v1541, %v1585
  %v1730 = vadd.f32 %v1542, %v1586
  %v1731 = vadd.f32 %v1543, %v1587
  %v1732 = vadd.f32 %v1624, %v1668
  %v1733 = vadd.f32 %v1625, %v1669
  %v1734 = vadd.f32 %v1626, %v1670
  %v1735 = vadd.f32 %v1627, %v1671
  %v1736 = vadd.f32 %v1628, %v1672
  %v1737 = vadd.f32 %v1629, %v1673
  %v1738 = vadd.f32 %v1630, %v1674
  %v1739 = vadd.f32 %v1631, %v1675
  %v1740 = vadd.f32 %v1676, %v1684
  %v1741 = vadd.f32 %v1677, %v1685
  %v1742 = vadd.f32 %v1678, %v1686
  %v1743 = vadd.f32 %v1679, %v1687
  %v1744 = vadd.f32 %v1680, %v1688
  %v1745 = vadd.f32 %v1681, %v1689
  %v1746 = vadd.f32 %v1682, %v1690
  %v1747 = vadd.f32 %v1683, %v1691
  %v1748 = vadd.f32 %v1692, %v1700
  %v1749 = vadd.f32 %v1693, %v1701
  %v1750 = vadd.f32 %v1694, %v1702
  %v1751 = vadd.f32 %v1695, %v1703
  %v1752 = vadd.f32 %v1696, %v1704
  %v1753 = vadd.f32 %v1697, %v1705
  %v1754 = vadd.f32 %v1698, %v1706
  %v1755 = vadd.f32 %v1699, %v1707
  %v1756 = vadd.f32 %v1708, %v1716
  %v1757 = vadd.f32 %v1709, %v1717
  %v1758 = vadd.f32 %v1710, %v1718
  %v1759 = vadd.f32 %v1711, %v1719
  %v1760 = vadd.f32 %v1712, %v1720
  %v1761 = vadd.f32 %v1713, %v1721
  %v1762 = vadd.f32 %v1714, %v1722
  %v1763 = vadd.f32 %v1715, %v1723
  %v1764 = vadd.f32 %v1724, %v1732
  %v1765 = vadd.f32 %v1725, %v1733
  %v1766 = vadd.f32 %v1726, %v1734
  %v1767 = vadd.f32 %v1727, %v1735
  %v1768 = vadd.f32 %v1728, %v1736
  %v1769 = vadd.f32 %v1729, %v1737
  %v1770 = vadd.f32 %v1730, %v1738
  %v1771 = vadd.f32 %v1731, %v1739
  %v1772 = vadd.f32 %v1740, %v1748
  %v1773 = vadd.f32 %v1741, %v1749
  %v1774 = vadd.f32 %v1742, %v1750
  %v1775 = vadd.f32 %v1743, %v1751
  %v1776 = vadd.f32 %v1744, %v1752
  %v1777 = vadd.f32 %v1745, %v1753
  %v1778 = vadd.f32 %v1746, %v1754
  %v1779 = vadd.f32 %v1747, %v1755
  %v1780 = vadd.f32 %v1756, %v1764
  %v1781 = vadd.f32 %v1757, %v1765
  %v1782 = vadd.f32 %v1758, %v1766
  %v1783 = vadd.f32 %v1759, %v1767
  %v1784 = vadd.f32 %v1760, %v1768
  %v1785 = vadd.f32 %v1761, %v1769
  %v1786 = vadd.f32 %v1762, %v1770
  %v1787 = vadd.f32 %v1763, %v1771
  %v1788 = vadd.f32 %v1772, %v1780
  %v1789 = vadd.f32 %v1773, %v1781
  %v1790 = vadd.f32 %v1774, %v1782
  %v1791 = vadd.f32 %v1775, %v1783
  %v1792 = vadd.f32 %v1776, %v1784
  %v1793 = vadd.f32 %v1777, %v1785
  %v1794 = vadd.f32 %v1778, %v1786
  %v1795 = vadd.f32 %v1779, %v1787
  %1796 = vset.pattern.permute.xlu0 16
  %1797 = vperm.xlu0 %1796, %v956
  %v1798 = vpop.permute.xlu0 %1797
  %1800 = vset.pattern.permute.xlu0 16
  %1801 = vperm.xlu0 %1800, %v957
  %v1802 = vpop.permute.xlu0 %1801
  %1804 = vset.pattern.permute.xlu0 16
  %1805 = vperm.xlu0 %1804, %v958
  %v1806 = vpop.permute.xlu0 %1805
  %1808 = vset.pattern.permute.xlu0 16
  %1809 = vperm.xlu0 %1808, %v959
  %v1810 = vpop.permute.xlu0 %1809
  %1812 = vset.pattern.permute.xlu0 16
  %1813 = vperm.xlu0 %1812, %v960
  %v1814 = vpop.permute.xlu0 %1813
  %1816 = vset.pattern.permute.xlu0 16
  %1817 = vperm.xlu0 %1816, %v961
  %v1818 = vpop.permute.xlu0 %1817
  %1820 = vset.pattern.permute.xlu0 16
  %1821 = vperm.xlu0 %1820, %v962
  %v1822 = vpop.permute.xlu0 %1821
  %1824 = vset.pattern.permute.xlu0 16
  %1825 = vperm.xlu0 %1824, %v963
  %v1826 = vpop.permute.xlu0 %1825
  %v1828 = vadd.f32 %v1788, %v1798
  %v1829 = vadd.f32 %v1789, %v1802
  %v1830 = vadd.f32 %v1790, %v1806
  %v1831 = vadd.f32 %v1791, %v1810
  %v1832 = vadd.f32 %v1792, %v1814
  %v1833 = vadd.f32 %v1793, %v1818
  %v1834 = vadd.f32 %v1794, %v1822
  %v1835 = vadd.f32 %v1795, %v1826
  %v1836 = vmax.f32 %v1828, 0.0
  %v1837 = vmax.f32 %v1829, 0.0
  %v1838 = vmax.f32 %v1830, 0.0
  %v1839 = vmax.f32 %v1831, 0.0
  %v1840 = vmax.f32 %v1832, 0.0
  %v1841 = vmax.f32 %v1833, 0.0
  %v1842 = vmax.f32 %v1834, 0.0
  %v1843 = vmax.f32 %v1835, 0.0
  %vm1844 = vcmask 15360
  %v1845 = vsel %vm1844, %v1836, 0.0
  %1846 = vadd.xlane.f32.xlu0 %v1845
  %v1847 = vpop.xlane.xlu0 %1846
  %v1848 = vsel %vm1844, %v1837, 0.0
  %1849 = vadd.xlane.f32.xlu0 %v1848
  %v1850 = vpop.xlane.xlu0 %1849
  %v1851 = vsel %vm1844, %v1838, 0.0
  %1852 = vadd.xlane.f32.xlu0 %v1851
  %v1853 = vpop.xlane.xlu0 %1852
  %v1854 = vsel %vm1844, %v1839, 0.0
  %1855 = vadd.xlane.f32.xlu0 %v1854
  %v1856 = vpop.xlane.xlu0 %1855
  %v1857 = vsel %vm1844, %v1840, 0.0
  %1858 = vadd.xlane.f32.xlu0 %v1857
  %v1859 = vpop.xlane.xlu0 %1858
  %v1860 = vsel %vm1844, %v1841, 0.0
  %1861 = vadd.xlane.f32.xlu0 %v1860
  %v1862 = vpop.xlane.xlu0 %1861
  %v1863 = vsel %vm1844, %v1842, 0.0
  %1864 = vadd.xlane.f32.xlu0 %v1863
  %v1865 = vpop.xlane.xlu0 %1864
  %v1866 = vsel %vm1844, %v1843, 0.0
  %1867 = vadd.xlane.f32.xlu0 %v1866
  %v1868 = vpop.xlane.xlu0 %1867
  %v1869 = vrcp.pop 2.0
  %v1870 = vmul.f32 %v1847, %v1869
  %v1871 = vmul.f32 %v1850, %v1869
  %v1872 = vmul.f32 %v1853, %v1869
  %v1873 = vmul.f32 %v1856, %v1869
  %v1874 = vmul.f32 %v1859, %v1869
  %v1875 = vmul.f32 %v1862, %v1869
  %v1876 = vmul.f32 %v1865, %v1869
  %v1877 = vmul.f32 %v1868, %v1869
  %v1878 = vmul.f32 %v1836, %v1836
  %v1879 = vmul.f32 %v1837, %v1837
  %v1880 = vmul.f32 %v1838, %v1838
  %v1881 = vmul.f32 %v1839, %v1839
  %v1882 = vmul.f32 %v1840, %v1840
  %v1883 = vmul.f32 %v1841, %v1841
  %v1884 = vmul.f32 %v1842, %v1842
  %v1885 = vmul.f32 %v1843, %v1843
  %v1886 = vsel %vm1844, %v1878, 0.0
  %1887 = vadd.xlane.f32.xlu0 %v1886
  %v1888 = vpop.xlane.xlu0 %1887
  %v1889 = vsel %vm1844, %v1879, 0.0
  %1890 = vadd.xlane.f32.xlu0 %v1889
  %v1891 = vpop.xlane.xlu0 %1890
  %v1892 = vsel %vm1844, %v1880, 0.0
  %1893 = vadd.xlane.f32.xlu0 %v1892
  %v1894 = vpop.xlane.xlu0 %1893
  %v1895 = vsel %vm1844, %v1881, 0.0
  %1896 = vadd.xlane.f32.xlu0 %v1895
  %v1897 = vpop.xlane.xlu0 %1896
  %v1898 = vsel %vm1844, %v1882, 0.0
  %1899 = vadd.xlane.f32.xlu0 %v1898
  %v1900 = vpop.xlane.xlu0 %1899
  %v1901 = vsel %vm1844, %v1883, 0.0
  %1902 = vadd.xlane.f32.xlu0 %v1901
  %v1903 = vpop.xlane.xlu0 %1902
  %v1904 = vsel %vm1844, %v1884, 0.0
  %1905 = vadd.xlane.f32.xlu0 %v1904
  %v1906 = vpop.xlane.xlu0 %1905
  %v1907 = vsel %vm1844, %v1885, 0.0
  %1908 = vadd.xlane.f32.xlu0 %v1907
  %v1909 = vpop.xlane.xlu0 %1908
  %v1910 = vmul.f32 %v1888, %v1869
  %v1911 = vmul.f32 %v1891, %v1869
  %v1912 = vmul.f32 %v1894, %v1869
  %v1913 = vmul.f32 %v1897, %v1869
  %v1914 = vmul.f32 %v1900, %v1869
  %v1915 = vmul.f32 %v1903, %v1869
  %v1916 = vmul.f32 %v1906, %v1869
  %v1917 = vmul.f32 %v1909, %v1869
  %v1918 = vmul.f32 %v1870, %v1870
  %v1919 = vmul.f32 %v1871, %v1871
  %v1920 = vmul.f32 %v1872, %v1872
  %v1921 = vmul.f32 %v1873, %v1873
  %v1922 = vmul.f32 %v1874, %v1874
  %v1923 = vmul.f32 %v1875, %v1875
  %v1924 = vmul.f32 %v1876, %v1876
  %v1925 = vmul.f32 %v1877, %v1877
  %v1926 = vsub.f32 %v1910, %v1918
  %v1927 = vsub.f32 %v1911, %v1919
  %v1928 = vsub.f32 %v1912, %v1920
  %v1929 = vsub.f32 %v1913, %v1921
  %v1930 = vsub.f32 %v1914, %v1922
  %v1931 = vsub.f32 %v1915, %v1923
  %v1932 = vsub.f32 %v1916, %v1924
  %v1933 = vsub.f32 %v1917, %v1925
  %v1934 = vmax.f32 %v1926, 0.0
  %v1935 = vmax.f32 %v1927, 0.0
  %v1936 = vmax.f32 %v1928, 0.0
  %v1937 = vmax.f32 %v1929, 0.0
  %v1938 = vmax.f32 %v1930, 0.0
  %v1939 = vmax.f32 %v1931, 0.0
  %v1940 = vmax.f32 %v1932, 0.0
  %v1941 = vmax.f32 %v1933, 0.0
  %v1942 = vadd.f32 %v1934, 1e-05
  %v1943 = vadd.f32 %v1935, 1e-05
  %v1944 = vadd.f32 %v1936, 1e-05
  %v1945 = vadd.f32 %v1937, 1e-05
  %v1946 = vadd.f32 %v1938, 1e-05
  %v1947 = vadd.f32 %v1939, 1e-05
  %v1948 = vadd.f32 %v1940, 1e-05
  %v1949 = vadd.f32 %v1941, 1e-05
  %v1950 = vrsqrt.pop %v1942
  %v1951 = vrsqrt.pop %v1943
  %v1952 = vrsqrt.pop %v1944
  %v1953 = vrsqrt.pop %v1945
  %v1954 = vrsqrt.pop %v1946
  %v1955 = vrsqrt.pop %v1947
  %v1956 = vrsqrt.pop %v1948
  %v1957 = vrsqrt.pop %v1949
  %v1958 = vmul.f32 %v956, %v1950
  %v1959 = vmul.f32 %v957, %v1951
  %v1960 = vmul.f32 %v958, %v1952
  %v1961 = vmul.f32 %v959, %v1953
  %v1962 = vmul.f32 %v960, %v1954
  %v1963 = vmul.f32 %v961, %v1955
  %v1964 = vmul.f32 %v962, %v1956
  %v1965 = vmul.f32 %v963, %v1957
  %v1966 = vmul.f32 %v1870, %v1958
  %v1967 = vmul.f32 %v1871, %v1959
  %v1968 = vmul.f32 %v1872, %v1960
  %v1969 = vmul.f32 %v1873, %v1961
  %v1970 = vmul.f32 %v1874, %v1962
  %v1971 = vmul.f32 %v1875, %v1963
  %v1972 = vmul.f32 %v1876, %v1964
  %v1973 = vmul.f32 %v1877, %v1965
  %1982 = vrot.lane.b32.xlu0 %v1966, 1
  %v1983 = vpop.permute.xlu0 %1982
  %1984 = vrot.lane.b32.xlu0 %v1967, 1
  %v1985 = vpop.permute.xlu0 %1984
  %1986 = vrot.lane.b32.xlu0 %v1968, 1
  %v1987 = vpop.permute.xlu0 %1986
  %1988 = vrot.lane.b32.xlu0 %v1969, 1
  %v1989 = vpop.permute.xlu0 %1988
  %1990 = vrot.lane.b32.xlu0 %v1970, 1
  %v1991 = vpop.permute.xlu0 %1990
  %1992 = vrot.lane.b32.xlu0 %v1971, 1
  %v1993 = vpop.permute.xlu0 %1992
  %1994 = vrot.lane.b32.xlu0 %v1972, 1
  %v1995 = vpop.permute.xlu0 %1994
  %1996 = vrot.lane.b32.xlu0 %v1973, 1
  %v1997 = vpop.permute.xlu0 %1996
  %v2006 = vsub.f32 %v956, %v1983
  %v2007 = vsub.f32 %v957, %v1985
  %v2008 = vsub.f32 %v958, %v1987
  %v2009 = vsub.f32 %v959, %v1989
  %v2010 = vsub.f32 %v960, %v1991
  %v2011 = vsub.f32 %v961, %v1993
  %v2012 = vsub.f32 %v962, %v1995
  %v2013 = vsub.f32 %v963, %v1997
  %2015 = vset.pattern.permute.xlu0 17
  %2016 = vperm.xlu0 %2015, %v1958
  %v2017 = vpop.permute.xlu0 %2016
  %2020 = vset.pattern.permute.xlu0 17
  %2021 = vperm.xlu0 %2020, %v1959
  %v2022 = vpop.permute.xlu0 %2021
  %2025 = vset.pattern.permute.xlu0 17
  %2026 = vperm.xlu0 %2025, %v1960
  %v2027 = vpop.permute.xlu0 %2026
  %2030 = vset.pattern.permute.xlu0 17
  %2031 = vperm.xlu0 %2030, %v1961
  %v2032 = vpop.permute.xlu0 %2031
  %2035 = vset.pattern.permute.xlu0 17
  %2036 = vperm.xlu0 %2035, %v1962
  %v2037 = vpop.permute.xlu0 %2036
  %2040 = vset.pattern.permute.xlu0 17
  %2041 = vperm.xlu0 %2040, %v1963
  %v2042 = vpop.permute.xlu0 %2041
  %2045 = vset.pattern.permute.xlu0 17
  %2046 = vperm.xlu0 %2045, %v1964
  %v2047 = vpop.permute.xlu0 %2046
  %2050 = vset.pattern.permute.xlu0 17
  %2051 = vperm.xlu0 %2050, %v1965
  %v2052 = vpop.permute.xlu0 %2051
  %v2054 = vmul.f32 %v1836, %v2017
  %v2055 = vmul.f32 %v1837, %v2022
  %v2056 = vmul.f32 %v1838, %v2027
  %v2057 = vmul.f32 %v1839, %v2032
  %v2058 = vmul.f32 %v1840, %v2037
  %v2059 = vmul.f32 %v1841, %v2042
  %v2060 = vmul.f32 %v1842, %v2047
  %v2061 = vmul.f32 %v1843, %v2052
  %2063 = vset.pattern.permute.xlu0 18
  %2064 = vperm.xlu0 %2063, %v2006
  %v2065 = vpop.permute.xlu0 %2064
  %2068 = vset.pattern.permute.xlu0 18
  %2069 = vperm.xlu0 %2068, %v2007
  %v2070 = vpop.permute.xlu0 %2069
  %2073 = vset.pattern.permute.xlu0 18
  %2074 = vperm.xlu0 %2073, %v2008
  %v2075 = vpop.permute.xlu0 %2074
  %2078 = vset.pattern.permute.xlu0 18
  %2079 = vperm.xlu0 %2078, %v2009
  %v2080 = vpop.permute.xlu0 %2079
  %2083 = vset.pattern.permute.xlu0 18
  %2084 = vperm.xlu0 %2083, %v2010
  %v2085 = vpop.permute.xlu0 %2084
  %2088 = vset.pattern.permute.xlu0 18
  %2089 = vperm.xlu0 %2088, %v2011
  %v2090 = vpop.permute.xlu0 %2089
  %2093 = vset.pattern.permute.xlu0 18
  %2094 = vperm.xlu0 %2093, %v2012
  %v2095 = vpop.permute.xlu0 %2094
  %2098 = vset.pattern.permute.xlu0 18
  %2099 = vperm.xlu0 %2098, %v2013
  %v2100 = vpop.permute.xlu0 %2099
  %v2102 = vadd.f32 %v2054, %v2065
  %v2103 = vadd.f32 %v2055, %v2070
  %v2104 = vadd.f32 %v2056, %v2075
  %v2105 = vadd.f32 %v2057, %v2080
  %v2106 = vadd.f32 %v2058, %v2085
  %v2107 = vadd.f32 %v2059, %v2090
  %v2108 = vadd.f32 %v2060, %v2095
  %v2109 = vadd.f32 %v2061, %v2100
  %2112 = vrot.lane.b32.xlu0 %v596, 126
  %v2113 = vpop.permute.xlu0 %2112
  %2114 = vrot.lane.b32.xlu0 %v597, 126
  %v2115 = vpop.permute.xlu0 %2114
  %2118 = vrot.lane.b32.xlu0 %v596, 124
  %v2119 = vpop.permute.xlu0 %2118
  %2120 = vrot.lane.b32.xlu0 %v597, 124
  %v2121 = vpop.permute.xlu0 %2120
  %2124 = vrot.lane.b32.xlu0 %v596, 122
  %v2125 = vpop.permute.xlu0 %2124
  %2126 = vrot.lane.b32.xlu0 %v597, 122
  %v2127 = vpop.permute.xlu0 %2126
  %v2130 = vld [vmem:[%s1 + $0x70] sm:$0xf]
  %v2131 = vld [vmem:[%s2] sm:$0xff]
  %v2132 = vld [vmem:[%s2 + $0x8] sm:$0xff]
  %v2133 = vld [vmem:[%s2 + $0x10] sm:$0xff]
  %v2134 = vld [vmem:[%s2 + $0x18] sm:$0xff]
  %v2135 = vld [vmem:[%s2 + $0x20] sm:$0xff]
  %v2136 = vld [vmem:[%s2 + $0x28] sm:$0xff]
  %v2137 = vld [vmem:[%s2 + $0x30] sm:$0xff]
  %v2138 = vld [vmem:[%s2 + $0x38] sm:$0xff]
  %v2139 = vld [vmem:[%s2 + $0x40] sm:$0xff]
  %v2140 = vld [vmem:[%s2 + $0x48] sm:$0xff]
  %v2141 = vld [vmem:[%s2 + $0x50] sm:$0xff]
  %v2142 = vld [vmem:[%s2 + $0x58] sm:$0xff]
  %v2143 = vld [vmem:[%s2 + $0x60] sm:$0xff]
  %v2144 = vld [vmem:[%s2 + $0x68] sm:$0xff]
  %v2145 = vld [vmem:[%s2 + $0x70] sm:$0xff]
  %v2146 = vld [vmem:[%s2 + $0x78] sm:$0xff]
  %v2147 = vld [vmem:[%s2 + $0x80] sm:$0xff]
  %v2148 = vld [vmem:[%s2 + $0x88] sm:$0xff]
  %v2149 = vld [vmem:[%s2 + $0x90] sm:$0xff]
  %v2150 = vld [vmem:[%s2 + $0x98] sm:$0xff]
  %v2151 = vld [vmem:[%s2 + $0xa0] sm:$0xff]
  %v2152 = vld [vmem:[%s2 + $0xa8] sm:$0xff]
  %v2153 = vld [vmem:[%s2 + $0xb0] sm:$0xff]
  %v2154 = vld [vmem:[%s2 + $0xb8] sm:$0xff]
  %v2155 = vld [vmem:[%s2 + $0xc0] sm:$0xff]
  %v2156 = vld [vmem:[%s2 + $0xc8] sm:$0xff]
  %v2157 = vld [vmem:[%s2 + $0xd0] sm:$0xff]
  %v2158 = vld [vmem:[%s2 + $0xd8] sm:$0xff]
  %v2159 = vld [vmem:[%s2 + $0xe0] sm:$0xff]
  %v2160 = vld [vmem:[%s2 + $0xe8] sm:$0xff]
  %v2161 = vld [vmem:[%s2 + $0xf0] sm:$0xff]
  %v2162 = vld [vmem:[%s2 + $0xf8] sm:$0xff]
  %v2163 = vld [vmem:[%s2 + $0x100] sm:$0xff]
  %v2164 = vld [vmem:[%s2 + $0x108] sm:$0xff]
  %v2165 = vld [vmem:[%s2 + $0x110] sm:$0xff]
  %v2166 = vld [vmem:[%s2 + $0x118] sm:$0xff]
  %v2167 = vld [vmem:[%s2 + $0x120] sm:$0xff]
  %v2168 = vld [vmem:[%s2 + $0x128] sm:$0xff]
  %v2169 = vld [vmem:[%s2 + $0x130] sm:$0xff]
  %v2170 = vld [vmem:[%s2 + $0x138] sm:$0xff]
  %v2171 = vld [vmem:[%s2 + $0x140] sm:$0xff]
  %v2172 = vld [vmem:[%s2 + $0x148] sm:$0xff]
  %v2173 = vld [vmem:[%s2 + $0x150] sm:$0xff]
  %v2174 = vld [vmem:[%s2 + $0x158] sm:$0xff]
  %v2175 = vld [vmem:[%s2 + $0x160] sm:$0xff]
  %v2176 = vld [vmem:[%s2 + $0x168] sm:$0xff]
  %v2177 = vld [vmem:[%s2 + $0x170] sm:$0xff]
  %v2178 = vld [vmem:[%s2 + $0x178] sm:$0xff]
  %v2179 = vld [vmem:[%s2 + $0x180] sm:$0xff]
  %v2180 = vld [vmem:[%s2 + $0x188] sm:$0xff]
  %v2181 = vld [vmem:[%s2 + $0x190] sm:$0xff]
  %v2182 = vld [vmem:[%s2 + $0x198] sm:$0xff]
  %v2183 = vld [vmem:[%s2 + $0x1a0] sm:$0xff]
  %v2184 = vld [vmem:[%s2 + $0x1a8] sm:$0xff]
  %v2185 = vld [vmem:[%s2 + $0x1b0] sm:$0xff]
  %v2186 = vld [vmem:[%s2 + $0x1b8] sm:$0xff]
  %v2187 = vld [vmem:[%s2 + $0x1c0] sm:$0xff]
  %v2188 = vld [vmem:[%s2 + $0x1c8] sm:$0xff]
  %v2189 = vld [vmem:[%s2 + $0x1d0] sm:$0xff]
  %v2190 = vld [vmem:[%s2 + $0x1d8] sm:$0xff]
  %v2191 = vld [vmem:[%s2 + $0x1e0] sm:$0xff]
  %v2192 = vld [vmem:[%s2 + $0x1e8] sm:$0xff]
  %v2193 = vld [vmem:[%s2 + $0x1f0] sm:$0xff]
  %v2194 = vld [vmem:[%s2 + $0x1f8] sm:$0xff]
  %s2195 = scalar_lea.vmem %s2, 1152
  %v2196 = vld [vmem:[%s2195] ss:$8 sm:$0xf]
  %v2197 = vld [vmem:[%s2195] ss:$8 sm:$0xf0]
  %v2198 = vor.u32 %v2196, %v2197
  %2199 = vrot.lane.b32.xlu0 %v596, 2
  %v2200 = vpop.permute.xlu0 %2199
  %2201 = vrot.lane.b32.xlu0 %v597, 2
  %v2202 = vpop.permute.xlu0 %2201
  %2203 = vrot.lane.b32.xlu0 %v2113, 2
  %v2204 = vpop.permute.xlu0 %2203
  %2205 = vrot.lane.b32.xlu0 %v2115, 2
  %v2206 = vpop.permute.xlu0 %2205
  %2207 = vrot.lane.b32.xlu0 %v2119, 2
  %v2208 = vpop.permute.xlu0 %2207
  %2209 = vrot.lane.b32.xlu0 %v2121, 2
  %v2210 = vpop.permute.xlu0 %2209
  %2211 = vrot.lane.b32.xlu0 %v2125, 2
  %v2212 = vpop.permute.xlu0 %2211
  %2213 = vrot.lane.b32.xlu0 %v2127, 2
  %v2214 = vpop.permute.xlu0 %2213
  %v2223 = vsel %vm1844, %v596, %v2200
  %v2224 = vsel %vm1844, %v597, %v2202
  %v2225 = vsel %vm1844, %v2113, %v2204
  %v2226 = vsel %vm1844, %v2115, %v2206
  %v2227 = vsel %vm1844, %v2119, %v2208
  %v2228 = vsel %vm1844, %v2121, %v2210
  %v2229 = vsel %vm1844, %v2125, %v2212
  %v2230 = vsel %vm1844, %v2127, %v2214
  %v2232 = vlaneseq
  %v2233 = vshrl.u32 %v2232, 7
  %v2234 = vsub.s32 0, %v2233
  %v2235 = vrot.slane %v2198, %v2234
  %v2236 = vlaneseq
  %v2237 = vshrl.u32 %v2236, 7
  %v2238 = vsub.s32 1, %v2237
  %v2239 = vrot.slane %v2198, %v2238
  %v2240 = vlaneseq
  %v2241 = vshrl.u32 %v2240, 7
  %v2242 = vsub.s32 2, %v2241
  %v2243 = vrot.slane %v2198, %v2242
  %v2244 = vlaneseq
  %v2245 = vshrl.u32 %v2244, 7
  %v2246 = vsub.s32 3, %v2245
  %v2247 = vrot.slane %v2198, %v2246
  %v2248 = vlaneseq
  %v2249 = vshrl.u32 %v2248, 7
  %v2250 = vsub.s32 4, %v2249
  %v2251 = vrot.slane %v2198, %v2250
  %v2252 = vlaneseq
  %v2253 = vshrl.u32 %v2252, 7
  %v2254 = vsub.s32 5, %v2253
  %v2255 = vrot.slane %v2198, %v2254
  %v2256 = vlaneseq
  %v2257 = vshrl.u32 %v2256, 7
  %v2258 = vsub.s32 6, %v2257
  %v2259 = vrot.slane %v2198, %v2258
  %v2260 = vlaneseq
  %v2261 = vshrl.u32 %v2260, 7
  %v2262 = vsub.s32 7, %v2261
  %v2263 = vrot.slane %v2198, %v2262
  %2272 = vxpose.xlu0.b32.start [1/16] %v2223, 128
  %2273 = vxpose.xlu0.b32.cont [2/16] %v2224, 128
  %2274 = vxpose.xlu0.b32.cont [3/16] %v2225, 128
  %2275 = vxpose.xlu0.b32.cont [4/16] %v2226, 128
  %2276 = vxpose.xlu0.b32.cont [5/16] %v2227, 128
  %2277 = vxpose.xlu0.b32.cont [6/16] %v2228, 128
  %2278 = vxpose.xlu0.b32.cont [7/16] %v2229, 128
  %2279 = vxpose.xlu0.b32.cont [8/16] %v2230, 128
  %2280 = vxpose.xlu0.b32.cont [9/16] 0.0, 128
  %2281 = vxpose.xlu0.b32.cont [10/16] 0.0, 128
  %2282 = vxpose.xlu0.b32.cont [11/16] 0.0, 128
  %2283 = vxpose.xlu0.b32.cont [12/16] 0.0, 128
  %2284 = vxpose.xlu0.b32.cont [13/16] 0.0, 128
  %2285 = vxpose.xlu0.b32.cont [14/16] 0.0, 128
  %2286 = vxpose.xlu0.b32.cont [15/16] 0.0, 128
  %2287 = vxpose.xlu0.b32.end [16/16] 0.0, 128
  %v2288 = vpop.trf.xlu0
  %v2289 = vpop.trf.xlu0
  %v2290 = vpop.trf.xlu0
  %v2291 = vpop.trf.xlu0
  %v2292 = vpop.trf.xlu0
  %v2293 = vpop.trf.xlu0
  %v2294 = vpop.trf.xlu0
  %v2295 = vpop.trf.xlu0
  %v2296 = vpop.trf.xlu0
  %v2297 = vpop.trf.xlu0
  %v2298 = vpop.trf.xlu0
  %v2299 = vpop.trf.xlu0
  %v2300 = vpop.trf.xlu0
  %v2301 = vpop.trf.xlu0
  %v2302 = vpop.trf.xlu0
  %v2303 = vpop.trf.xlu0
  %vm2304 = vcmask 523264
  %v2306 = vsel %vm2304, %v2288, 0
  %2308 = vmatprep.subr.mxu0 0.0
  %2309 = vmatpush1.msra.mxu0 0.0
  %2310 = vmatprep.subr.mxu0 0.0
  %2311 = vmatpush1.msra.mxu0 0.0
  %2312 = vmatprep.subr.mxu0 0.0
  %2313 = vmatpush1.msra.mxu0 0.0
  %2314 = vmatprep.subr.mxu0 0.0
  %2315 = vmatpush1.msra.mxu0 0.0
  %2316 = vmatprep.subr.mxu0 0.0
  %2317 = vmatpush1.msra.mxu0 0.0
  %2318 = vmatprep.subr.mxu0 0.0
  %2319 = vmatpush1.msra.mxu0 0.0
  %2320 = vmatprep.subr.mxu0 0.0
  %2321 = vmatpush1.msra.mxu0 0.0
  %2322 = vmatprep.subr.mxu0 0.0
  %2323 = vmatpush1.msra.mxu0 0.0
  %2324 = vmatprep.subr.mxu0 %v2188
  %2325 = vmatpush1.msra.mxu0 %v2187
  %2326 = vmatprep.subr.mxu0 %v2180
  %2327 = vmatpush1.msra.mxu0 %v2179
  %2328 = vmatprep.subr.mxu0 %v2172
  %2329 = vmatpush1.msra.mxu0 %v2171
  %2330 = vmatprep.subr.mxu0 %v2164
  %2331 = vmatpush1.msra.mxu0 %v2163
  %2332 = vmatprep.subr.mxu0 %v2156
  %2333 = vmatpush1.msra.mxu0 %v2155
  %2334 = vmatprep.subr.mxu0 %v2148
  %2335 = vmatpush1.msra.mxu0 %v2147
  %2336 = vmatprep.subr.mxu0 %v2140
  %2337 = vmatpush1.msra.mxu0 %v2139
  %2338 = vmatprep.subr.mxu0 %v2132
  %2339 = vmatpush1.msra.mxu0 %v2131
  %2340 = vmatprep.subr.mxu0 0.0
  %2341 = vmatpush2.msra.mxu0 0.0
  %2342 = vmatprep.subr.mxu0 0.0
  %2343 = vmatpush2.msra.mxu0 0.0
  %2344 = vmatprep.subr.mxu0 0.0
  %2345 = vmatpush2.msra.mxu0 0.0
  %2346 = vmatprep.subr.mxu0 0.0
  %2347 = vmatpush2.msra.mxu0 0.0
  %2348 = vmatprep.subr.mxu0 0.0
  %2349 = vmatpush2.msra.mxu0 0.0
  %2350 = vmatprep.subr.mxu0 0.0
  %2351 = vmatpush2.msra.mxu0 0.0
  %2352 = vmatprep.subr.mxu0 0.0
  %2353 = vmatpush2.msra.mxu0 0.0
  %2354 = vmatprep.subr.mxu0 0.0
  %2355 = vmatpush2.msra.mxu0 0.0
  %2356 = vmatprep.subr.mxu0 0.0
  %2357 = vmatpush2.msra.mxu0 0.0
  %2358 = vmatprep.subr.mxu0 0.0
  %2359 = vmatpush2.msra.mxu0 0.0
  %2360 = vmatprep.subr.mxu0 0.0
  %2361 = vmatpush2.msra.mxu0 0.0
  %2362 = vmatprep.subr.mxu0 0.0
  %2363 = vmatpush2.msra.mxu0 0.0
  %2364 = vmatprep.subr.mxu0 0.0
  %2365 = vmatpush2.msra.mxu0 0.0
  %2366 = vmatprep.subr.mxu0 0.0
  %2367 = vmatpush2.msra.mxu0 0.0
  %2368 = vmatprep.subr.mxu0 0.0
  %2369 = vmatpush2.msra.mxu0 0.0
  %2370 = vmatprep.subr.mxu0 0.0
  %2371 = vmatpush2.msra.mxu0 0.0
  %2372 = vmatprep.mubr.f32.mxu0 0.0
  %2373 = vmatmul.mubr.f32.gmra.mxu0 %v2306
  %v2374 = vpop.f32.mrf.mxu0
  %v2375 = vadd.f32 %v2235, %v2374
  %v2376 = vpop.f32.mrf.mxu0
  %v2377 = vadd.f32 %v2239, %v2376
  %2378 = vdwg.mxu0
  %2379 = vmatprep.subr.mxu0 0.0
  %2380 = vmatpush1.msra.mxu0 0.0
  %2381 = vmatprep.subr.mxu0 0.0
  %2382 = vmatpush1.msra.mxu0 0.0
  %2383 = vmatprep.subr.mxu0 0.0
  %2384 = vmatpush1.msra.mxu0 0.0
  %2385 = vmatprep.subr.mxu0 0.0
  %2386 = vmatpush1.msra.mxu0 0.0
  %2387 = vmatprep.subr.mxu0 0.0
  %2388 = vmatpush1.msra.mxu0 0.0
  %2389 = vmatprep.subr.mxu0 0.0
  %2390 = vmatpush1.msra.mxu0 0.0
  %2391 = vmatprep.subr.mxu0 0.0
  %2392 = vmatpush1.msra.mxu0 0.0
  %2393 = vmatprep.subr.mxu0 0.0
  %2394 = vmatpush1.msra.mxu0 0.0
  %2395 = vmatprep.subr.mxu0 %v2190
  %2396 = vmatpush1.msra.mxu0 %v2189
  %2397 = vmatprep.subr.mxu0 %v2182
  %2398 = vmatpush1.msra.mxu0 %v2181
  %2399 = vmatprep.subr.mxu0 %v2174
  %2400 = vmatpush1.msra.mxu0 %v2173
  %2401 = vmatprep.subr.mxu0 %v2166
  %2402 = vmatpush1.msra.mxu0 %v2165
  %2403 = vmatprep.subr.mxu0 %v2158
  %2404 = vmatpush1.msra.mxu0 %v2157
  %2405 = vmatprep.subr.mxu0 %v2150
  %2406 = vmatpush1.msra.mxu0 %v2149
  %2407 = vmatprep.subr.mxu0 %v2142
  %2408 = vmatpush1.msra.mxu0 %v2141
  %2409 = vmatprep.subr.mxu0 %v2134
  %2410 = vmatpush1.msra.mxu0 %v2133
  %2411 = vmatprep.subr.mxu0 0.0
  %2412 = vmatpush2.msra.mxu0 0.0
  %2413 = vmatprep.subr.mxu0 0.0
  %2414 = vmatpush2.msra.mxu0 0.0
  %2415 = vmatprep.subr.mxu0 0.0
  %2416 = vmatpush2.msra.mxu0 0.0
  %2417 = vmatprep.subr.mxu0 0.0
  %2418 = vmatpush2.msra.mxu0 0.0
  %2419 = vmatprep.subr.mxu0 0.0
  %2420 = vmatpush2.msra.mxu0 0.0
  %2421 = vmatprep.subr.mxu0 0.0
  %2422 = vmatpush2.msra.mxu0 0.0
  %2423 = vmatprep.subr.mxu0 0.0
  %2424 = vmatpush2.msra.mxu0 0.0
  %2425 = vmatprep.subr.mxu0 0.0
  %2426 = vmatpush2.msra.mxu0 0.0
  %2427 = vmatprep.subr.mxu0 0.0
  %2428 = vmatpush2.msra.mxu0 0.0
  %2429 = vmatprep.subr.mxu0 0.0
  %2430 = vmatpush2.msra.mxu0 0.0
  %2431 = vmatprep.subr.mxu0 0.0
  %2432 = vmatpush2.msra.mxu0 0.0
  %2433 = vmatprep.subr.mxu0 0.0
  %2434 = vmatpush2.msra.mxu0 0.0
  %2435 = vmatprep.subr.mxu0 0.0
  %2436 = vmatpush2.msra.mxu0 0.0
  %2437 = vmatprep.subr.mxu0 0.0
  %2438 = vmatpush2.msra.mxu0 0.0
  %2439 = vmatprep.subr.mxu0 0.0
  %2440 = vmatpush2.msra.mxu0 0.0
  %2441 = vmatprep.subr.mxu0 0.0
  %2442 = vmatpush2.msra.mxu0 0.0
  %2443 = vmatprep.mubr.f32.mxu0 0.0
  %2444 = vmatmul.mubr.f32.gmra.mxu0 %v2306
  %v2445 = vpop.f32.mrf.mxu0
  %v2446 = vadd.f32 %v2243, %v2445
  %v2447 = vpop.f32.mrf.mxu0
  %v2448 = vadd.f32 %v2247, %v2447
  %2449 = vdwg.mxu0
  %2450 = vmatprep.subr.mxu0 0.0
  %2451 = vmatpush1.msra.mxu0 0.0
  %2452 = vmatprep.subr.mxu0 0.0
  %2453 = vmatpush1.msra.mxu0 0.0
  %2454 = vmatprep.subr.mxu0 0.0
  %2455 = vmatpush1.msra.mxu0 0.0
  %2456 = vmatprep.subr.mxu0 0.0
  %2457 = vmatpush1.msra.mxu0 0.0
  %2458 = vmatprep.subr.mxu0 0.0
  %2459 = vmatpush1.msra.mxu0 0.0
  %2460 = vmatprep.subr.mxu0 0.0
  %2461 = vmatpush1.msra.mxu0 0.0
  %2462 = vmatprep.subr.mxu0 0.0
  %2463 = vmatpush1.msra.mxu0 0.0
  %2464 = vmatprep.subr.mxu0 0.0
  %2465 = vmatpush1.msra.mxu0 0.0
  %2466 = vmatprep.subr.mxu0 %v2192
  %2467 = vmatpush1.msra.mxu0 %v2191
  %2468 = vmatprep.subr.mxu0 %v2184
  %2469 = vmatpush1.msra.mxu0 %v2183
  %2470 = vmatprep.subr.mxu0 %v2176
  %2471 = vmatpush1.msra.mxu0 %v2175
  %2472 = vmatprep.subr.mxu0 %v2168
  %2473 = vmatpush1.msra.mxu0 %v2167
  %2474 = vmatprep.subr.mxu0 %v2160
  %2475 = vmatpush1.msra.mxu0 %v2159
  %2476 = vmatprep.subr.mxu0 %v2152
  %2477 = vmatpush1.msra.mxu0 %v2151
  %2478 = vmatprep.subr.mxu0 %v2144
  %2479 = vmatpush1.msra.mxu0 %v2143
  %2480 = vmatprep.subr.mxu0 %v2136
  %2481 = vmatpush1.msra.mxu0 %v2135
  %2482 = vmatprep.subr.mxu0 0.0
  %2483 = vmatpush2.msra.mxu0 0.0
  %2484 = vmatprep.subr.mxu0 0.0
  %2485 = vmatpush2.msra.mxu0 0.0
  %2486 = vmatprep.subr.mxu0 0.0
  %2487 = vmatpush2.msra.mxu0 0.0
  %2488 = vmatprep.subr.mxu0 0.0
  %2489 = vmatpush2.msra.mxu0 0.0
  %2490 = vmatprep.subr.mxu0 0.0
  %2491 = vmatpush2.msra.mxu0 0.0
  %2492 = vmatprep.subr.mxu0 0.0
  %2493 = vmatpush2.msra.mxu0 0.0
  %2494 = vmatprep.subr.mxu0 0.0
  %2495 = vmatpush2.msra.mxu0 0.0
  %2496 = vmatprep.subr.mxu0 0.0
  %2497 = vmatpush2.msra.mxu0 0.0
  %2498 = vmatprep.subr.mxu0 0.0
  %2499 = vmatpush2.msra.mxu0 0.0
  %2500 = vmatprep.subr.mxu0 0.0
  %2501 = vmatpush2.msra.mxu0 0.0
  %2502 = vmatprep.subr.mxu0 0.0
  %2503 = vmatpush2.msra.mxu0 0.0
  %2504 = vmatprep.subr.mxu0 0.0
  %2505 = vmatpush2.msra.mxu0 0.0
  %2506 = vmatprep.subr.mxu0 0.0
  %2507 = vmatpush2.msra.mxu0 0.0
  %2508 = vmatprep.subr.mxu0 0.0
  %2509 = vmatpush2.msra.mxu0 0.0
  %2510 = vmatprep.subr.mxu0 0.0
  %2511 = vmatpush2.msra.mxu0 0.0
  %2512 = vmatprep.subr.mxu0 0.0
  %2513 = vmatpush2.msra.mxu0 0.0
  %2514 = vmatprep.mubr.f32.mxu0 0.0
  %2515 = vmatmul.mubr.f32.gmra.mxu0 %v2306
  %v2516 = vpop.f32.mrf.mxu0
  %v2517 = vadd.f32 %v2251, %v2516
  %v2518 = vpop.f32.mrf.mxu0
  %v2519 = vadd.f32 %v2255, %v2518
  %2520 = vdwg.mxu0
  %2521 = vmatprep.subr.mxu0 0.0
  %2522 = vmatpush1.msra.mxu0 0.0
  %2523 = vmatprep.subr.mxu0 0.0
  %2524 = vmatpush1.msra.mxu0 0.0
  %2525 = vmatprep.subr.mxu0 0.0
  %2526 = vmatpush1.msra.mxu0 0.0
  %2527 = vmatprep.subr.mxu0 0.0
  %2528 = vmatpush1.msra.mxu0 0.0
  %2529 = vmatprep.subr.mxu0 0.0
  %2530 = vmatpush1.msra.mxu0 0.0
  %2531 = vmatprep.subr.mxu0 0.0
  %2532 = vmatpush1.msra.mxu0 0.0
  %2533 = vmatprep.subr.mxu0 0.0
  %2534 = vmatpush1.msra.mxu0 0.0
  %2535 = vmatprep.subr.mxu0 0.0
  %2536 = vmatpush1.msra.mxu0 0.0
  %2537 = vmatprep.subr.mxu0 %v2194
  %2538 = vmatpush1.msra.mxu0 %v2193
  %2539 = vmatprep.subr.mxu0 %v2186
  %2540 = vmatpush1.msra.mxu0 %v2185
  %2541 = vmatprep.subr.mxu0 %v2178
  %2542 = vmatpush1.msra.mxu0 %v2177
  %2543 = vmatprep.subr.mxu0 %v2170
  %2544 = vmatpush1.msra.mxu0 %v2169
  %2545 = vmatprep.subr.mxu0 %v2162
  %2546 = vmatpush1.msra.mxu0 %v2161
  %2547 = vmatprep.subr.mxu0 %v2154
  %2548 = vmatpush1.msra.mxu0 %v2153
  %2549 = vmatprep.subr.mxu0 %v2146
  %2550 = vmatpush1.msra.mxu0 %v2145
  %2551 = vmatprep.subr.mxu0 %v2138
  %2552 = vmatpush1.msra.mxu0 %v2137
  %2553 = vmatprep.subr.mxu0 0.0
  %2554 = vmatpush2.msra.mxu0 0.0
  %2555 = vmatprep.subr.mxu0 0.0
  %2556 = vmatpush2.msra.mxu0 0.0
  %2557 = vmatprep.subr.mxu0 0.0
  %2558 = vmatpush2.msra.mxu0 0.0
  %2559 = vmatprep.subr.mxu0 0.0
  %2560 = vmatpush2.msra.mxu0 0.0
  %2561 = vmatprep.subr.mxu0 0.0
  %2562 = vmatpush2.msra.mxu0 0.0
  %2563 = vmatprep.subr.mxu0 0.0
  %2564 = vmatpush2.msra.mxu0 0.0
  %2565 = vmatprep.subr.mxu0 0.0
  %2566 = vmatpush2.msra.mxu0 0.0
  %2567 = vmatprep.subr.mxu0 0.0
  %2568 = vmatpush2.msra.mxu0 0.0
  %2569 = vmatprep.subr.mxu0 0.0
  %2570 = vmatpush2.msra.mxu0 0.0
  %2571 = vmatprep.subr.mxu0 0.0
  %2572 = vmatpush2.msra.mxu0 0.0
  %2573 = vmatprep.subr.mxu0 0.0
  %2574 = vmatpush2.msra.mxu0 0.0
  %2575 = vmatprep.subr.mxu0 0.0
  %2576 = vmatpush2.msra.mxu0 0.0
  %2577 = vmatprep.subr.mxu0 0.0
  %2578 = vmatpush2.msra.mxu0 0.0
  %2579 = vmatprep.subr.mxu0 0.0
  %2580 = vmatpush2.msra.mxu0 0.0
  %2581 = vmatprep.subr.mxu0 0.0
  %2582 = vmatpush2.msra.mxu0 0.0
  %2583 = vmatprep.subr.mxu0 0.0
  %2584 = vmatpush2.msra.mxu0 0.0
  %2585 = vmatprep.mubr.f32.mxu0 0.0
  %2586 = vmatmul.mubr.f32.gmra.mxu0 %v2306
  %v2587 = vpop.f32.mrf.mxu0
  %v2588 = vadd.f32 %v2259, %v2587
  %v2589 = vpop.f32.mrf.mxu0
  %v2590 = vadd.f32 %v2263, %v2589
  %2591 = vdwg.mxu0
  %v2592 = vmax.f32 %v2375, 0.0
  %v2593 = vmax.f32 %v2377, 0.0
  %v2594 = vmax.f32 %v2446, 0.0
  %v2595 = vmax.f32 %v2448, 0.0
  %v2596 = vmax.f32 %v2517, 0.0
  %v2597 = vmax.f32 %v2519, 0.0
  %v2598 = vmax.f32 %v2588, 0.0
  %v2599 = vmax.f32 %v2590, 0.0
  %2601 = vset.pattern.permute.xlu0 0
  %2602 = vperm.xlu0 %2601, %v2130
  %v2603 = vpop.permute.xlu0 %2602
  %v2605 = vmul.f32 %v2603, %v2592
  %v2606 = vmul.f32 %v2603, %v2593
  %2607 = vset.pattern.permute.xlu0 1
  %2608 = vperm.xlu0 %2607, %v2130
  %v2609 = vpop.permute.xlu0 %2608
  %v2611 = vmul.f32 %v2609, %v2594
  %v2612 = vmul.f32 %v2609, %v2595
  %v2613 = vadd.f32 %v2605, %v2611
  %v2614 = vadd.f32 %v2606, %v2612
  %2615 = vset.pattern.permute.xlu0 2
  %2616 = vperm.xlu0 %2615, %v2130
  %v2617 = vpop.permute.xlu0 %2616
  %v2619 = vadd.f32 %v2613, %v2617
  %v2620 = vadd.f32 %v2614, %v2617
  %v2621 = vmax.f32 %v2619, 0.0
  %v2622 = vmax.f32 %v2620, 0.0
  %2623 = vset.pattern.permute.xlu0 3
  %2624 = vperm.xlu0 %2623, %v2130
  %v2625 = vpop.permute.xlu0 %2624
  %v2627 = vmul.f32 %v2625, %v2596
  %v2628 = vmul.f32 %v2625, %v2597
  %2629 = vset.pattern.permute.xlu0 4
  %2630 = vperm.xlu0 %2629, %v2130
  %v2631 = vpop.permute.xlu0 %2630
  %v2633 = vmul.f32 %v2631, %v2598
  %v2634 = vmul.f32 %v2631, %v2599
  %v2635 = vadd.f32 %v2627, %v2633
  %v2636 = vadd.f32 %v2628, %v2634
  %2637 = vset.pattern.permute.xlu0 5
  %2638 = vperm.xlu0 %2637, %v2130
  %v2639 = vpop.permute.xlu0 %2638
  %v2641 = vadd.f32 %v2635, %v2639
  %v2642 = vadd.f32 %v2636, %v2639
  %v2643 = vmax.f32 %v2641, 0.0
  %v2644 = vmax.f32 %v2642, 0.0
  %v2645 = vld [vmem:[%s2 + $0x200] sm:$0xff]
  %v2646 = vld [vmem:[%s2 + $0x208] sm:$0xff]
  %v2647 = vld [vmem:[%s2 + $0x210] sm:$0xff]
  %v2648 = vld [vmem:[%s2 + $0x218] sm:$0xff]
  %v2649 = vld [vmem:[%s2 + $0x220] sm:$0xff]
  %v2650 = vld [vmem:[%s2 + $0x228] sm:$0xff]
  %v2651 = vld [vmem:[%s2 + $0x230] sm:$0xff]
  %v2652 = vld [vmem:[%s2 + $0x238] sm:$0xff]
  %v2653 = vld [vmem:[%s2 + $0x240] sm:$0xff]
  %v2654 = vld [vmem:[%s2 + $0x248] sm:$0xff]
  %v2655 = vld [vmem:[%s2 + $0x250] sm:$0xff]
  %v2656 = vld [vmem:[%s2 + $0x258] sm:$0xff]
  %v2657 = vld [vmem:[%s2 + $0x260] sm:$0xff]
  %v2658 = vld [vmem:[%s2 + $0x268] sm:$0xff]
  %v2659 = vld [vmem:[%s2 + $0x270] sm:$0xff]
  %v2660 = vld [vmem:[%s2 + $0x278] sm:$0xff]
  %s2661 = scalar_lea.vmem %s2, 1216
  %v2662 = vld [vmem:[%s2661] ss:$8 sm:$0xf]
  %v2663 = vld [vmem:[%s2661] ss:$8 sm:$0xf0]
  %v2664 = vor.u32 %v2662, %v2663
  %2667 = vrot.lane.b32.xlu0 %v954, 2
  %v2668 = vpop.permute.xlu0 %2667
  %2669 = vrot.lane.b32.xlu0 %v955, 2
  %v2670 = vpop.permute.xlu0 %2669
  %v2673 = vsel %vm1844, %v954, %v2668
  %v2674 = vsel %vm1844, %v955, %v2670
  %v2676 = vlaneseq
  %v2677 = vshrl.u32 %v2676, 7
  %v2678 = vsub.s32 0, %v2677
  %v2679 = vrot.slane %v2664, %v2678
  %v2680 = vlaneseq
  %v2681 = vshrl.u32 %v2680, 7
  %v2682 = vsub.s32 1, %v2681
  %v2683 = vrot.slane %v2664, %v2682
  %v2684 = vlaneseq
  %v2685 = vshrl.u32 %v2684, 7
  %v2686 = vsub.s32 2, %v2685
  %v2687 = vrot.slane %v2664, %v2686
  %v2688 = vlaneseq
  %v2689 = vshrl.u32 %v2688, 7
  %v2690 = vsub.s32 3, %v2689
  %v2691 = vrot.slane %v2664, %v2690
  %v2692 = vlaneseq
  %v2693 = vshrl.u32 %v2692, 7
  %v2694 = vsub.s32 4, %v2693
  %v2695 = vrot.slane %v2664, %v2694
  %v2696 = vlaneseq
  %v2697 = vshrl.u32 %v2696, 7
  %v2698 = vsub.s32 5, %v2697
  %v2699 = vrot.slane %v2664, %v2698
  %v2700 = vlaneseq
  %v2701 = vshrl.u32 %v2700, 7
  %v2702 = vsub.s32 6, %v2701
  %v2703 = vrot.slane %v2664, %v2702
  %v2704 = vlaneseq
  %v2705 = vshrl.u32 %v2704, 7
  %v2706 = vsub.s32 7, %v2705
  %v2707 = vrot.slane %v2664, %v2706
  %2716 = vxpose.xlu0.b32.start [1/16] %v2673, 128
  %2717 = vxpose.xlu0.b32.cont [2/16] %v2674, 128
  %2718 = vxpose.xlu0.b32.cont [3/16] 0.0, 128
  %2719 = vxpose.xlu0.b32.cont [4/16] 0.0, 128
  %2720 = vxpose.xlu0.b32.cont [5/16] 0.0, 128
  %2721 = vxpose.xlu0.b32.cont [6/16] 0.0, 128
  %2722 = vxpose.xlu0.b32.cont [7/16] 0.0, 128
  %2723 = vxpose.xlu0.b32.cont [8/16] 0.0, 128
  %2724 = vxpose.xlu0.b32.cont [9/16] 0.0, 128
  %2725 = vxpose.xlu0.b32.cont [10/16] 0.0, 128
  %2726 = vxpose.xlu0.b32.cont [11/16] 0.0, 128
  %2727 = vxpose.xlu0.b32.cont [12/16] 0.0, 128
  %2728 = vxpose.xlu0.b32.cont [13/16] 0.0, 128
  %2729 = vxpose.xlu0.b32.cont [14/16] 0.0, 128
  %2730 = vxpose.xlu0.b32.cont [15/16] 0.0, 128
  %2731 = vxpose.xlu0.b32.end [16/16] 0.0, 128
  %v2732 = vpop.trf.xlu0
  %v2733 = vpop.trf.xlu0
  %v2734 = vpop.trf.xlu0
  %v2735 = vpop.trf.xlu0
  %v2736 = vpop.trf.xlu0
  %v2737 = vpop.trf.xlu0
  %v2738 = vpop.trf.xlu0
  %v2739 = vpop.trf.xlu0
  %v2740 = vpop.trf.xlu0
  %v2741 = vpop.trf.xlu0
  %v2742 = vpop.trf.xlu0
  %v2743 = vpop.trf.xlu0
  %v2744 = vpop.trf.xlu0
  %v2745 = vpop.trf.xlu0
  %v2746 = vpop.trf.xlu0
  %v2747 = vpop.trf.xlu0
  %vm2748 = vcmask 130048
  %v2750 = vsel %vm2748, %v2732, 0
  %2752 = vmatprep.subr.mxu0 0.0
  %2753 = vmatpush1.msra.mxu0 0.0
  %2754 = vmatprep.subr.mxu0 0.0
  %2755 = vmatpush1.msra.mxu0 0.0
  %2756 = vmatprep.subr.mxu0 0.0
  %2757 = vmatpush1.msra.mxu0 0.0
  %2758 = vmatprep.subr.mxu0 0.0
  %2759 = vmatpush1.msra.mxu0 0.0
  %2760 = vmatprep.subr.mxu0 0.0
  %2761 = vmatpush1.msra.mxu0 0.0
  %2762 = vmatprep.subr.mxu0 0.0
  %2763 = vmatpush1.msra.mxu0 0.0
  %2764 = vmatprep.subr.mxu0 0.0
  %2765 = vmatpush1.msra.mxu0 0.0
  %2766 = vmatprep.subr.mxu0 0.0
  %2767 = vmatpush1.msra.mxu0 0.0
  %2768 = vmatprep.subr.mxu0 0.0
  %2769 = vmatpush1.msra.mxu0 0.0
  %2770 = vmatprep.subr.mxu0 0.0
  %2771 = vmatpush1.msra.mxu0 0.0
  %2772 = vmatprep.subr.mxu0 0.0
  %2773 = vmatpush1.msra.mxu0 0.0
  %2774 = vmatprep.subr.mxu0 0.0
  %2775 = vmatpush1.msra.mxu0 0.0
  %2776 = vmatprep.subr.mxu0 0.0
  %2777 = vmatpush1.msra.mxu0 0.0
  %2778 = vmatprep.subr.mxu0 0.0
  %2779 = vmatpush1.msra.mxu0 0.0
  %2780 = vmatprep.subr.mxu0 %v2654
  %2781 = vmatpush1.msra.mxu0 %v2653
  %2782 = vmatprep.subr.mxu0 %v2646
  %2783 = vmatpush1.msra.mxu0 %v2645
  %2784 = vmatprep.subr.mxu0 0.0
  %2785 = vmatpush2.msra.mxu0 0.0
  %2786 = vmatprep.subr.mxu0 0.0
  %2787 = vmatpush2.msra.mxu0 0.0
  %2788 = vmatprep.subr.mxu0 0.0
  %2789 = vmatpush2.msra.mxu0 0.0
  %2790 = vmatprep.subr.mxu0 0.0
  %2791 = vmatpush2.msra.mxu0 0.0
  %2792 = vmatprep.subr.mxu0 0.0
  %2793 = vmatpush2.msra.mxu0 0.0
  %2794 = vmatprep.subr.mxu0 0.0
  %2795 = vmatpush2.msra.mxu0 0.0
  %2796 = vmatprep.subr.mxu0 0.0
  %2797 = vmatpush2.msra.mxu0 0.0
  %2798 = vmatprep.subr.mxu0 0.0
  %2799 = vmatpush2.msra.mxu0 0.0
  %2800 = vmatprep.subr.mxu0 0.0
  %2801 = vmatpush2.msra.mxu0 0.0
  %2802 = vmatprep.subr.mxu0 0.0
  %2803 = vmatpush2.msra.mxu0 0.0
  %2804 = vmatprep.subr.mxu0 0.0
  %2805 = vmatpush2.msra.mxu0 0.0
  %2806 = vmatprep.subr.mxu0 0.0
  %2807 = vmatpush2.msra.mxu0 0.0
  %2808 = vmatprep.subr.mxu0 0.0
  %2809 = vmatpush2.msra.mxu0 0.0
  %2810 = vmatprep.subr.mxu0 0.0
  %2811 = vmatpush2.msra.mxu0 0.0
  %2812 = vmatprep.subr.mxu0 0.0
  %2813 = vmatpush2.msra.mxu0 0.0
  %2814 = vmatprep.subr.mxu0 0.0
  %2815 = vmatpush2.msra.mxu0 0.0
  %2816 = vmatprep.mubr.f32.mxu0 0.0
  %2817 = vmatmul.mubr.f32.gmra.mxu0 %v2750
  %v2818 = vpop.f32.mrf.mxu0
  %v2819 = vadd.f32 %v2679, %v2818
  %v2820 = vpop.f32.mrf.mxu0
  %v2821 = vadd.f32 %v2683, %v2820
  %2822 = vdwg.mxu0
  %2823 = vmatprep.subr.mxu0 0.0
  %2824 = vmatpush1.msra.mxu0 0.0
  %2825 = vmatprep.subr.mxu0 0.0
  %2826 = vmatpush1.msra.mxu0 0.0
  %2827 = vmatprep.subr.mxu0 0.0
  %2828 = vmatpush1.msra.mxu0 0.0
  %2829 = vmatprep.subr.mxu0 0.0
  %2830 = vmatpush1.msra.mxu0 0.0
  %2831 = vmatprep.subr.mxu0 0.0
  %2832 = vmatpush1.msra.mxu0 0.0
  %2833 = vmatprep.subr.mxu0 0.0
  %2834 = vmatpush1.msra.mxu0 0.0
  %2835 = vmatprep.subr.mxu0 0.0
  %2836 = vmatpush1.msra.mxu0 0.0
  %2837 = vmatprep.subr.mxu0 0.0
  %2838 = vmatpush1.msra.mxu0 0.0
  %2839 = vmatprep.subr.mxu0 0.0
  %2840 = vmatpush1.msra.mxu0 0.0
  %2841 = vmatprep.subr.mxu0 0.0
  %2842 = vmatpush1.msra.mxu0 0.0
  %2843 = vmatprep.subr.mxu0 0.0
  %2844 = vmatpush1.msra.mxu0 0.0
  %2845 = vmatprep.subr.mxu0 0.0
  %2846 = vmatpush1.msra.mxu0 0.0
  %2847 = vmatprep.subr.mxu0 0.0
  %2848 = vmatpush1.msra.mxu0 0.0
  %2849 = vmatprep.subr.mxu0 0.0
  %2850 = vmatpush1.msra.mxu0 0.0
  %2851 = vmatprep.subr.mxu0 %v2656
  %2852 = vmatpush1.msra.mxu0 %v2655
  %2853 = vmatprep.subr.mxu0 %v2648
  %2854 = vmatpush1.msra.mxu0 %v2647
  %2855 = vmatprep.subr.mxu0 0.0
  %2856 = vmatpush2.msra.mxu0 0.0
  %2857 = vmatprep.subr.mxu0 0.0
  %2858 = vmatpush2.msra.mxu0 0.0
  %2859 = vmatprep.subr.mxu0 0.0
  %2860 = vmatpush2.msra.mxu0 0.0
  %2861 = vmatprep.subr.mxu0 0.0
  %2862 = vmatpush2.msra.mxu0 0.0
  %2863 = vmatprep.subr.mxu0 0.0
  %2864 = vmatpush2.msra.mxu0 0.0
  %2865 = vmatprep.subr.mxu0 0.0
  %2866 = vmatpush2.msra.mxu0 0.0
  %2867 = vmatprep.subr.mxu0 0.0
  %2868 = vmatpush2.msra.mxu0 0.0
  %2869 = vmatprep.subr.mxu0 0.0
  %2870 = vmatpush2.msra.mxu0 0.0
  %2871 = vmatprep.subr.mxu0 0.0
  %2872 = vmatpush2.msra.mxu0 0.0
  %2873 = vmatprep.subr.mxu0 0.0
  %2874 = vmatpush2.msra.mxu0 0.0
  %2875 = vmatprep.subr.mxu0 0.0
  %2876 = vmatpush2.msra.mxu0 0.0
  %2877 = vmatprep.subr.mxu0 0.0
  %2878 = vmatpush2.msra.mxu0 0.0
  %2879 = vmatprep.subr.mxu0 0.0
  %2880 = vmatpush2.msra.mxu0 0.0
  %2881 = vmatprep.subr.mxu0 0.0
  %2882 = vmatpush2.msra.mxu0 0.0
  %2883 = vmatprep.subr.mxu0 0.0
  %2884 = vmatpush2.msra.mxu0 0.0
  %2885 = vmatprep.subr.mxu0 0.0
  %2886 = vmatpush2.msra.mxu0 0.0
  %2887 = vmatprep.mubr.f32.mxu0 0.0
  %2888 = vmatmul.mubr.f32.gmra.mxu0 %v2750
  %v2889 = vpop.f32.mrf.mxu0
  %v2890 = vadd.f32 %v2687, %v2889
  %v2891 = vpop.f32.mrf.mxu0
  %v2892 = vadd.f32 %v2691, %v2891
  %2893 = vdwg.mxu0
  %2894 = vmatprep.subr.mxu0 0.0
  %2895 = vmatpush1.msra.mxu0 0.0
  %2896 = vmatprep.subr.mxu0 0.0
  %2897 = vmatpush1.msra.mxu0 0.0
  %2898 = vmatprep.subr.mxu0 0.0
  %2899 = vmatpush1.msra.mxu0 0.0
  %2900 = vmatprep.subr.mxu0 0.0
  %2901 = vmatpush1.msra.mxu0 0.0
  %2902 = vmatprep.subr.mxu0 0.0
  %2903 = vmatpush1.msra.mxu0 0.0
  %2904 = vmatprep.subr.mxu0 0.0
  %2905 = vmatpush1.msra.mxu0 0.0
  %2906 = vmatprep.subr.mxu0 0.0
  %2907 = vmatpush1.msra.mxu0 0.0
  %2908 = vmatprep.subr.mxu0 0.0
  %2909 = vmatpush1.msra.mxu0 0.0
  %2910 = vmatprep.subr.mxu0 0.0
  %2911 = vmatpush1.msra.mxu0 0.0
  %2912 = vmatprep.subr.mxu0 0.0
  %2913 = vmatpush1.msra.mxu0 0.0
  %2914 = vmatprep.subr.mxu0 0.0
  %2915 = vmatpush1.msra.mxu0 0.0
  %2916 = vmatprep.subr.mxu0 0.0
  %2917 = vmatpush1.msra.mxu0 0.0
  %2918 = vmatprep.subr.mxu0 0.0
  %2919 = vmatpush1.msra.mxu0 0.0
  %2920 = vmatprep.subr.mxu0 0.0
  %2921 = vmatpush1.msra.mxu0 0.0
  %2922 = vmatprep.subr.mxu0 %v2658
  %2923 = vmatpush1.msra.mxu0 %v2657
  %2924 = vmatprep.subr.mxu0 %v2650
  %2925 = vmatpush1.msra.mxu0 %v2649
  %2926 = vmatprep.subr.mxu0 0.0
  %2927 = vmatpush2.msra.mxu0 0.0
  %2928 = vmatprep.subr.mxu0 0.0
  %2929 = vmatpush2.msra.mxu0 0.0
  %2930 = vmatprep.subr.mxu0 0.0
  %2931 = vmatpush2.msra.mxu0 0.0
  %2932 = vmatprep.subr.mxu0 0.0
  %2933 = vmatpush2.msra.mxu0 0.0
  %2934 = vmatprep.subr.mxu0 0.0
  %2935 = vmatpush2.msra.mxu0 0.0
  %2936 = vmatprep.subr.mxu0 0.0
  %2937 = vmatpush2.msra.mxu0 0.0
  %2938 = vmatprep.subr.mxu0 0.0
  %2939 = vmatpush2.msra.mxu0 0.0
  %2940 = vmatprep.subr.mxu0 0.0
  %2941 = vmatpush2.msra.mxu0 0.0
  %2942 = vmatprep.subr.mxu0 0.0
  %2943 = vmatpush2.msra.mxu0 0.0
  %2944 = vmatprep.subr.mxu0 0.0
  %2945 = vmatpush2.msra.mxu0 0.0
  %2946 = vmatprep.subr.mxu0 0.0
  %2947 = vmatpush2.msra.mxu0 0.0
  %2948 = vmatprep.subr.mxu0 0.0
  %2949 = vmatpush2.msra.mxu0 0.0
  %2950 = vmatprep.subr.mxu0 0.0
  %2951 = vmatpush2.msra.mxu0 0.0
  %2952 = vmatprep.subr.mxu0 0.0
  %2953 = vmatpush2.msra.mxu0 0.0
  %2954 = vmatprep.subr.mxu0 0.0
  %2955 = vmatpush2.msra.mxu0 0.0
  %2956 = vmatprep.subr.mxu0 0.0
  %2957 = vmatpush2.msra.mxu0 0.0
  %2958 = vmatprep.mubr.f32.mxu0 0.0
  %2959 = vmatmul.mubr.f32.gmra.mxu0 %v2750
  %v2960 = vpop.f32.mrf.mxu0
  %v2961 = vadd.f32 %v2695, %v2960
  %v2962 = vpop.f32.mrf.mxu0
  %v2963 = vadd.f32 %v2699, %v2962
  %2964 = vdwg.mxu0
  %2965 = vmatprep.subr.mxu0 0.0
  %2966 = vmatpush1.msra.mxu0 0.0
  %2967 = vmatprep.subr.mxu0 0.0
  %2968 = vmatpush1.msra.mxu0 0.0
  %2969 = vmatprep.subr.mxu0 0.0
  %2970 = vmatpush1.msra.mxu0 0.0
  %2971 = vmatprep.subr.mxu0 0.0
  %2972 = vmatpush1.msra.mxu0 0.0
  %2973 = vmatprep.subr.mxu0 0.0
  %2974 = vmatpush1.msra.mxu0 0.0
  %2975 = vmatprep.subr.mxu0 0.0
  %2976 = vmatpush1.msra.mxu0 0.0
  %2977 = vmatprep.subr.mxu0 0.0
  %2978 = vmatpush1.msra.mxu0 0.0
  %2979 = vmatprep.subr.mxu0 0.0
  %2980 = vmatpush1.msra.mxu0 0.0
  %2981 = vmatprep.subr.mxu0 0.0
  %2982 = vmatpush1.msra.mxu0 0.0
  %2983 = vmatprep.subr.mxu0 0.0
  %2984 = vmatpush1.msra.mxu0 0.0
  %2985 = vmatprep.subr.mxu0 0.0
  %2986 = vmatpush1.msra.mxu0 0.0
  %2987 = vmatprep.subr.mxu0 0.0
  %2988 = vmatpush1.msra.mxu0 0.0
  %2989 = vmatprep.subr.mxu0 0.0
  %2990 = vmatpush1.msra.mxu0 0.0
  %2991 = vmatprep.subr.mxu0 0.0
  %2992 = vmatpush1.msra.mxu0 0.0
  %2993 = vmatprep.subr.mxu0 %v2660
  %2994 = vmatpush1.msra.mxu0 %v2659
  %2995 = vmatprep.subr.mxu0 %v2652
  %2996 = vmatpush1.msra.mxu0 %v2651
  %2997 = vmatprep.subr.mxu0 0.0
  %2998 = vmatpush2.msra.mxu0 0.0
  %2999 = vmatprep.subr.mxu0 0.0
  %3000 = vmatpush2.msra.mxu0 0.0
  %3001 = vmatprep.subr.mxu0 0.0
  %3002 = vmatpush2.msra.mxu0 0.0
  %3003 = vmatprep.subr.mxu0 0.0
  %3004 = vmatpush2.msra.mxu0 0.0
  %3005 = vmatprep.subr.mxu0 0.0
  %3006 = vmatpush2.msra.mxu0 0.0
  %3007 = vmatprep.subr.mxu0 0.0
  %3008 = vmatpush2.msra.mxu0 0.0
  %3009 = vmatprep.subr.mxu0 0.0
  %3010 = vmatpush2.msra.mxu0 0.0
  %3011 = vmatprep.subr.mxu0 0.0
  %3012 = vmatpush2.msra.mxu0 0.0
  %3013 = vmatprep.subr.mxu0 0.0
  %3014 = vmatpush2.msra.mxu0 0.0
  %3015 = vmatprep.subr.mxu0 0.0
  %3016 = vmatpush2.msra.mxu0 0.0
  %3017 = vmatprep.subr.mxu0 0.0
  %3018 = vmatpush2.msra.mxu0 0.0
  %3019 = vmatprep.subr.mxu0 0.0
  %3020 = vmatpush2.msra.mxu0 0.0
  %3021 = vmatprep.subr.mxu0 0.0
  %3022 = vmatpush2.msra.mxu0 0.0
  %3023 = vmatprep.subr.mxu0 0.0
  %3024 = vmatpush2.msra.mxu0 0.0
  %3025 = vmatprep.subr.mxu0 0.0
  %3026 = vmatpush2.msra.mxu0 0.0
  %3027 = vmatprep.subr.mxu0 0.0
  %3028 = vmatpush2.msra.mxu0 0.0
  %3029 = vmatprep.mubr.f32.mxu0 0.0
  %3030 = vmatmul.mubr.f32.gmra.mxu0 %v2750
  %v3031 = vpop.f32.mrf.mxu0
  %v3032 = vadd.f32 %v2703, %v3031
  %v3033 = vpop.f32.mrf.mxu0
  %v3034 = vadd.f32 %v2707, %v3033
  %3035 = vdwg.mxu0
  %v3036 = vmax.f32 %v2819, 0.0
  %v3037 = vmax.f32 %v2821, 0.0
  %v3038 = vmax.f32 %v2890, 0.0
  %v3039 = vmax.f32 %v2892, 0.0
  %v3040 = vmax.f32 %v2961, 0.0
  %v3041 = vmax.f32 %v2963, 0.0
  %v3042 = vmax.f32 %v3032, 0.0
  %v3043 = vmax.f32 %v3034, 0.0
  %3044 = vset.pattern.permute.xlu0 6
  %3045 = vperm.xlu0 %3044, %v2130
  %v3046 = vpop.permute.xlu0 %3045
  %v3048 = vmul.f32 %v3046, %v3036
  %v3049 = vmul.f32 %v3046, %v3037
  %3050 = vset.pattern.permute.xlu0 7
  %3051 = vperm.xlu0 %3050, %v2130
  %v3052 = vpop.permute.xlu0 %3051
  %v3054 = vmul.f32 %v3052, %v3038
  %v3055 = vmul.f32 %v3052, %v3039
  %v3056 = vadd.f32 %v3048, %v3054
  %v3057 = vadd.f32 %v3049, %v3055
  %3058 = vset.pattern.permute.xlu0 8
  %3059 = vperm.xlu0 %3058, %v2130
  %v3060 = vpop.permute.xlu0 %3059
  %v3062 = vadd.f32 %v3056, %v3060
  %v3063 = vadd.f32 %v3057, %v3060
  %v3064 = vmax.f32 %v3062, 0.0
  %v3065 = vmax.f32 %v3063, 0.0
  %3066 = vset.pattern.permute.xlu0 9
  %3067 = vperm.xlu0 %3066, %v2130
  %v3068 = vpop.permute.xlu0 %3067
  %v3070 = vmul.f32 %v3068, %v3040
  %v3071 = vmul.f32 %v3068, %v3041
  %3072 = vset.pattern.permute.xlu0 10
  %3073 = vperm.xlu0 %3072, %v2130
  %v3074 = vpop.permute.xlu0 %3073
  %v3076 = vmul.f32 %v3074, %v3042
  %v3077 = vmul.f32 %v3074, %v3043
  %v3078 = vadd.f32 %v3070, %v3076
  %v3079 = vadd.f32 %v3071, %v3077
  %3080 = vset.pattern.permute.xlu0 11
  %3081 = vperm.xlu0 %3080, %v2130
  %v3082 = vpop.permute.xlu0 %3081
  %v3084 = vadd.f32 %v3078, %v3082
  %v3085 = vadd.f32 %v3079, %v3082
  %v3086 = vmax.f32 %v3084, 0.0
  %v3087 = vmax.f32 %v3085, 0.0
  %v3088 = vld [vmem:[%s2 + $0x280] sm:$0xff]
  %v3089 = vld [vmem:[%s2 + $0x288] sm:$0xff]
  %v3090 = vld [vmem:[%s2 + $0x290] sm:$0xff]
  %v3091 = vld [vmem:[%s2 + $0x298] sm:$0xff]
  %v3092 = vld [vmem:[%s2 + $0x2a0] sm:$0xff]
  %v3093 = vld [vmem:[%s2 + $0x2a8] sm:$0xff]
  %v3094 = vld [vmem:[%s2 + $0x2b0] sm:$0xff]
  %v3095 = vld [vmem:[%s2 + $0x2b8] sm:$0xff]
  %v3096 = vld [vmem:[%s2 + $0x2c0] sm:$0xff]
  %v3097 = vld [vmem:[%s2 + $0x2c8] sm:$0xff]
  %v3098 = vld [vmem:[%s2 + $0x2d0] sm:$0xff]
  %v3099 = vld [vmem:[%s2 + $0x2d8] sm:$0xff]
  %v3100 = vld [vmem:[%s2 + $0x2e0] sm:$0xff]
  %v3101 = vld [vmem:[%s2 + $0x2e8] sm:$0xff]
  %v3102 = vld [vmem:[%s2 + $0x2f0] sm:$0xff]
  %v3103 = vld [vmem:[%s2 + $0x2f8] sm:$0xff]
  %v3104 = vld [vmem:[%s2 + $0x300] sm:$0xff]
  %v3105 = vld [vmem:[%s2 + $0x308] sm:$0xff]
  %v3106 = vld [vmem:[%s2 + $0x310] sm:$0xff]
  %v3107 = vld [vmem:[%s2 + $0x318] sm:$0xff]
  %v3108 = vld [vmem:[%s2 + $0x320] sm:$0xff]
  %v3109 = vld [vmem:[%s2 + $0x328] sm:$0xff]
  %v3110 = vld [vmem:[%s2 + $0x330] sm:$0xff]
  %v3111 = vld [vmem:[%s2 + $0x338] sm:$0xff]
  %v3112 = vld [vmem:[%s2 + $0x340] sm:$0xff]
  %v3113 = vld [vmem:[%s2 + $0x348] sm:$0xff]
  %v3114 = vld [vmem:[%s2 + $0x350] sm:$0xff]
  %v3115 = vld [vmem:[%s2 + $0x358] sm:$0xff]
  %v3116 = vld [vmem:[%s2 + $0x360] sm:$0xff]
  %v3117 = vld [vmem:[%s2 + $0x368] sm:$0xff]
  %v3118 = vld [vmem:[%s2 + $0x370] sm:$0xff]
  %v3119 = vld [vmem:[%s2 + $0x378] sm:$0xff]
  %v3120 = vld [vmem:[%s2 + $0x380] sm:$0xff]
  %v3121 = vld [vmem:[%s2 + $0x388] sm:$0xff]
  %v3122 = vld [vmem:[%s2 + $0x390] sm:$0xff]
  %v3123 = vld [vmem:[%s2 + $0x398] sm:$0xff]
  %v3124 = vld [vmem:[%s2 + $0x3a0] sm:$0xff]
  %v3125 = vld [vmem:[%s2 + $0x3a8] sm:$0xff]
  %v3126 = vld [vmem:[%s2 + $0x3b0] sm:$0xff]
  %v3127 = vld [vmem:[%s2 + $0x3b8] sm:$0xff]
  %v3128 = vld [vmem:[%s2 + $0x3c0] sm:$0xff]
  %v3129 = vld [vmem:[%s2 + $0x3c8] sm:$0xff]
  %v3130 = vld [vmem:[%s2 + $0x3d0] sm:$0xff]
  %v3131 = vld [vmem:[%s2 + $0x3d8] sm:$0xff]
  %v3132 = vld [vmem:[%s2 + $0x3e0] sm:$0xff]
  %v3133 = vld [vmem:[%s2 + $0x3e8] sm:$0xff]
  %v3134 = vld [vmem:[%s2 + $0x3f0] sm:$0xff]
  %v3135 = vld [vmem:[%s2 + $0x3f8] sm:$0xff]
  %v3136 = vld [vmem:[%s2 + $0x400] sm:$0xff]
  %v3137 = vld [vmem:[%s2 + $0x408] sm:$0xff]
  %v3138 = vld [vmem:[%s2 + $0x410] sm:$0xff]
  %v3139 = vld [vmem:[%s2 + $0x418] sm:$0xff]
  %v3140 = vld [vmem:[%s2 + $0x420] sm:$0xff]
  %v3141 = vld [vmem:[%s2 + $0x428] sm:$0xff]
  %v3142 = vld [vmem:[%s2 + $0x430] sm:$0xff]
  %v3143 = vld [vmem:[%s2 + $0x438] sm:$0xff]
  %v3144 = vld [vmem:[%s2 + $0x440] sm:$0xff]
  %v3145 = vld [vmem:[%s2 + $0x448] sm:$0xff]
  %v3146 = vld [vmem:[%s2 + $0x450] sm:$0xff]
  %v3147 = vld [vmem:[%s2 + $0x458] sm:$0xff]
  %v3148 = vld [vmem:[%s2 + $0x460] sm:$0xff]
  %v3149 = vld [vmem:[%s2 + $0x468] sm:$0xff]
  %v3150 = vld [vmem:[%s2 + $0x470] sm:$0xff]
  %v3151 = vld [vmem:[%s2 + $0x478] sm:$0xff]
  %s3152 = scalar_lea.vmem %s2, 1280
  %v3153 = vld [vmem:[%s3152] ss:$8 sm:$0xf]
  %v3154 = vld [vmem:[%s3152] ss:$8 sm:$0xf0]
  %v3155 = vor.u32 %v3153, %v3154
  %3164 = vrot.lane.b32.xlu0 %v2102, 2
  %v3165 = vpop.permute.xlu0 %3164
  %3166 = vrot.lane.b32.xlu0 %v2103, 2
  %v3167 = vpop.permute.xlu0 %3166
  %3168 = vrot.lane.b32.xlu0 %v2104, 2
  %v3169 = vpop.permute.xlu0 %3168
  %3170 = vrot.lane.b32.xlu0 %v2105, 2
  %v3171 = vpop.permute.xlu0 %3170
  %3172 = vrot.lane.b32.xlu0 %v2106, 2
  %v3173 = vpop.permute.xlu0 %3172
  %3174 = vrot.lane.b32.xlu0 %v2107, 2
  %v3175 = vpop.permute.xlu0 %3174
  %3176 = vrot.lane.b32.xlu0 %v2108, 2
  %v3177 = vpop.permute.xlu0 %3176
  %3178 = vrot.lane.b32.xlu0 %v2109, 2
  %v3179 = vpop.permute.xlu0 %3178
  %v3188 = vsel %vm1844, %v2102, %v3165
  %v3189 = vsel %vm1844, %v2103, %v3167
  %v3190 = vsel %vm1844, %v2104, %v3169
  %v3191 = vsel %vm1844, %v2105, %v3171
  %v3192 = vsel %vm1844, %v2106, %v3173
  %v3193 = vsel %vm1844, %v2107, %v3175
  %v3194 = vsel %vm1844, %v2108, %v3177
  %v3195 = vsel %vm1844, %v2109, %v3179
  %v3197 = vlaneseq
  %v3198 = vshrl.u32 %v3197, 7
  %v3199 = vsub.s32 0, %v3198
  %v3200 = vrot.slane %v3155, %v3199
  %v3201 = vlaneseq
  %v3202 = vshrl.u32 %v3201, 7
  %v3203 = vsub.s32 1, %v3202
  %v3204 = vrot.slane %v3155, %v3203
  %v3205 = vlaneseq
  %v3206 = vshrl.u32 %v3205, 7
  %v3207 = vsub.s32 2, %v3206
  %v3208 = vrot.slane %v3155, %v3207
  %v3209 = vlaneseq
  %v3210 = vshrl.u32 %v3209, 7
  %v3211 = vsub.s32 3, %v3210
  %v3212 = vrot.slane %v3155, %v3211
  %v3213 = vlaneseq
  %v3214 = vshrl.u32 %v3213, 7
  %v3215 = vsub.s32 4, %v3214
  %v3216 = vrot.slane %v3155, %v3215
  %v3217 = vlaneseq
  %v3218 = vshrl.u32 %v3217, 7
  %v3219 = vsub.s32 5, %v3218
  %v3220 = vrot.slane %v3155, %v3219
  %v3221 = vlaneseq
  %v3222 = vshrl.u32 %v3221, 7
  %v3223 = vsub.s32 6, %v3222
  %v3224 = vrot.slane %v3155, %v3223
  %v3225 = vlaneseq
  %v3226 = vshrl.u32 %v3225, 7
  %v3227 = vsub.s32 7, %v3226
  %v3228 = vrot.slane %v3155, %v3227
  %3237 = vxpose.xlu0.b32.start [1/16] %v3188, 128
  %3238 = vxpose.xlu0.b32.cont [2/16] %v3189, 128
  %3239 = vxpose.xlu0.b32.cont [3/16] %v3190, 128
  %3240 = vxpose.xlu0.b32.cont [4/16] %v3191, 128
  %3241 = vxpose.xlu0.b32.cont [5/16] %v3192, 128
  %3242 = vxpose.xlu0.b32.cont [6/16] %v3193, 128
  %3243 = vxpose.xlu0.b32.cont [7/16] %v3194, 128
  %3244 = vxpose.xlu0.b32.cont [8/16] %v3195, 128
  %3245 = vxpose.xlu0.b32.cont [9/16] 0.0, 128
  %3246 = vxpose.xlu0.b32.cont [10/16] 0.0, 128
  %3247 = vxpose.xlu0.b32.cont [11/16] 0.0, 128
  %3248 = vxpose.xlu0.b32.cont [12/16] 0.0, 128
  %3249 = vxpose.xlu0.b32.cont [13/16] 0.0, 128
  %3250 = vxpose.xlu0.b32.cont [14/16] 0.0, 128
  %3251 = vxpose.xlu0.b32.cont [15/16] 0.0, 128
  %3252 = vxpose.xlu0.b32.end [16/16] 0.0, 128
  %v3253 = vpop.trf.xlu0
  %v3254 = vpop.trf.xlu0
  %v3255 = vpop.trf.xlu0
  %v3256 = vpop.trf.xlu0
  %v3257 = vpop.trf.xlu0
  %v3258 = vpop.trf.xlu0
  %v3259 = vpop.trf.xlu0
  %v3260 = vpop.trf.xlu0
  %v3261 = vpop.trf.xlu0
  %v3262 = vpop.trf.xlu0
  %v3263 = vpop.trf.xlu0
  %v3264 = vpop.trf.xlu0
  %v3265 = vpop.trf.xlu0
  %v3266 = vpop.trf.xlu0
  %v3267 = vpop.trf.xlu0
  %v3268 = vpop.trf.xlu0
  %v3270 = vsel %vm2304, %v3253, 0
  %3272 = vmatprep.subr.mxu0 0.0
  %3273 = vmatpush1.msra.mxu0 0.0
  %3274 = vmatprep.subr.mxu0 0.0
  %3275 = vmatpush1.msra.mxu0 0.0
  %3276 = vmatprep.subr.mxu0 0.0
  %3277 = vmatpush1.msra.mxu0 0.0
  %3278 = vmatprep.subr.mxu0 0.0
  %3279 = vmatpush1.msra.mxu0 0.0
  %3280 = vmatprep.subr.mxu0 0.0
  %3281 = vmatpush1.msra.mxu0 0.0
  %3282 = vmatprep.subr.mxu0 0.0
  %3283 = vmatpush1.msra.mxu0 0.0
  %3284 = vmatprep.subr.mxu0 0.0
  %3285 = vmatpush1.msra.mxu0 0.0
  %3286 = vmatprep.subr.mxu0 0.0
  %3287 = vmatpush1.msra.mxu0 0.0
  %3288 = vmatprep.subr.mxu0 %v3145
  %3289 = vmatpush1.msra.mxu0 %v3144
  %3290 = vmatprep.subr.mxu0 %v3137
  %3291 = vmatpush1.msra.mxu0 %v3136
  %3292 = vmatprep.subr.mxu0 %v3129
  %3293 = vmatpush1.msra.mxu0 %v3128
  %3294 = vmatprep.subr.mxu0 %v3121
  %3295 = vmatpush1.msra.mxu0 %v3120
  %3296 = vmatprep.subr.mxu0 %v3113
  %3297 = vmatpush1.msra.mxu0 %v3112
  %3298 = vmatprep.subr.mxu0 %v3105
  %3299 = vmatpush1.msra.mxu0 %v3104
  %3300 = vmatprep.subr.mxu0 %v3097
  %3301 = vmatpush1.msra.mxu0 %v3096
  %3302 = vmatprep.subr.mxu0 %v3089
  %3303 = vmatpush1.msra.mxu0 %v3088
  %3304 = vmatprep.subr.mxu0 0.0
  %3305 = vmatpush2.msra.mxu0 0.0
  %3306 = vmatprep.subr.mxu0 0.0
  %3307 = vmatpush2.msra.mxu0 0.0
  %3308 = vmatprep.subr.mxu0 0.0
  %3309 = vmatpush2.msra.mxu0 0.0
  %3310 = vmatprep.subr.mxu0 0.0
  %3311 = vmatpush2.msra.mxu0 0.0
  %3312 = vmatprep.subr.mxu0 0.0
  %3313 = vmatpush2.msra.mxu0 0.0
  %3314 = vmatprep.subr.mxu0 0.0
  %3315 = vmatpush2.msra.mxu0 0.0
  %3316 = vmatprep.subr.mxu0 0.0
  %3317 = vmatpush2.msra.mxu0 0.0
  %3318 = vmatprep.subr.mxu0 0.0
  %3319 = vmatpush2.msra.mxu0 0.0
  %3320 = vmatprep.subr.mxu0 0.0
  %3321 = vmatpush2.msra.mxu0 0.0
  %3322 = vmatprep.subr.mxu0 0.0
  %3323 = vmatpush2.msra.mxu0 0.0
  %3324 = vmatprep.subr.mxu0 0.0
  %3325 = vmatpush2.msra.mxu0 0.0
  %3326 = vmatprep.subr.mxu0 0.0
  %3327 = vmatpush2.msra.mxu0 0.0
  %3328 = vmatprep.subr.mxu0 0.0
  %3329 = vmatpush2.msra.mxu0 0.0
  %3330 = vmatprep.subr.mxu0 0.0
  %3331 = vmatpush2.msra.mxu0 0.0
  %3332 = vmatprep.subr.mxu0 0.0
  %3333 = vmatpush2.msra.mxu0 0.0
  %3334 = vmatprep.subr.mxu0 0.0
  %3335 = vmatpush2.msra.mxu0 0.0
  %3336 = vmatprep.mubr.f32.mxu0 0.0
  %3337 = vmatmul.mubr.f32.gmra.mxu0 %v3270
  %v3338 = vpop.f32.mrf.mxu0
  %v3339 = vadd.f32 %v3200, %v3338
  %v3340 = vpop.f32.mrf.mxu0
  %v3341 = vadd.f32 %v3204, %v3340
  %3342 = vdwg.mxu0
  %3343 = vmatprep.subr.mxu0 0.0
  %3344 = vmatpush1.msra.mxu0 0.0
  %3345 = vmatprep.subr.mxu0 0.0
  %3346 = vmatpush1.msra.mxu0 0.0
  %3347 = vmatprep.subr.mxu0 0.0
  %3348 = vmatpush1.msra.mxu0 0.0
  %3349 = vmatprep.subr.mxu0 0.0
  %3350 = vmatpush1.msra.mxu0 0.0
  %3351 = vmatprep.subr.mxu0 0.0
  %3352 = vmatpush1.msra.mxu0 0.0
  %3353 = vmatprep.subr.mxu0 0.0
  %3354 = vmatpush1.msra.mxu0 0.0
  %3355 = vmatprep.subr.mxu0 0.0
  %3356 = vmatpush1.msra.mxu0 0.0
  %3357 = vmatprep.subr.mxu0 0.0
  %3358 = vmatpush1.msra.mxu0 0.0
  %3359 = vmatprep.subr.mxu0 %v3147
  %3360 = vmatpush1.msra.mxu0 %v3146
  %3361 = vmatprep.subr.mxu0 %v3139
  %3362 = vmatpush1.msra.mxu0 %v3138
  %3363 = vmatprep.subr.mxu0 %v3131
  %3364 = vmatpush1.msra.mxu0 %v3130
  %3365 = vmatprep.subr.mxu0 %v3123
  %3366 = vmatpush1.msra.mxu0 %v3122
  %3367 = vmatprep.subr.mxu0 %v3115
  %3368 = vmatpush1.msra.mxu0 %v3114
  %3369 = vmatprep.subr.mxu0 %v3107
  %3370 = vmatpush1.msra.mxu0 %v3106
  %3371 = vmatprep.subr.mxu0 %v3099
  %3372 = vmatpush1.msra.mxu0 %v3098
  %3373 = vmatprep.subr.mxu0 %v3091
  %3374 = vmatpush1.msra.mxu0 %v3090
  %3375 = vmatprep.subr.mxu0 0.0
  %3376 = vmatpush2.msra.mxu0 0.0
  %3377 = vmatprep.subr.mxu0 0.0
  %3378 = vmatpush2.msra.mxu0 0.0
  %3379 = vmatprep.subr.mxu0 0.0
  %3380 = vmatpush2.msra.mxu0 0.0
  %3381 = vmatprep.subr.mxu0 0.0
  %3382 = vmatpush2.msra.mxu0 0.0
  %3383 = vmatprep.subr.mxu0 0.0
  %3384 = vmatpush2.msra.mxu0 0.0
  %3385 = vmatprep.subr.mxu0 0.0
  %3386 = vmatpush2.msra.mxu0 0.0
  %3387 = vmatprep.subr.mxu0 0.0
  %3388 = vmatpush2.msra.mxu0 0.0
  %3389 = vmatprep.subr.mxu0 0.0
  %3390 = vmatpush2.msra.mxu0 0.0
  %3391 = vmatprep.subr.mxu0 0.0
  %3392 = vmatpush2.msra.mxu0 0.0
  %3393 = vmatprep.subr.mxu0 0.0
  %3394 = vmatpush2.msra.mxu0 0.0
  %3395 = vmatprep.subr.mxu0 0.0
  %3396 = vmatpush2.msra.mxu0 0.0
  %3397 = vmatprep.subr.mxu0 0.0
  %3398 = vmatpush2.msra.mxu0 0.0
  %3399 = vmatprep.subr.mxu0 0.0
  %3400 = vmatpush2.msra.mxu0 0.0
  %3401 = vmatprep.subr.mxu0 0.0
  %3402 = vmatpush2.msra.mxu0 0.0
  %3403 = vmatprep.subr.mxu0 0.0
  %3404 = vmatpush2.msra.mxu0 0.0
  %3405 = vmatprep.subr.mxu0 0.0
  %3406 = vmatpush2.msra.mxu0 0.0
  %3407 = vmatprep.mubr.f32.mxu0 0.0
  %3408 = vmatmul.mubr.f32.gmra.mxu0 %v3270
  %v3409 = vpop.f32.mrf.mxu0
  %v3410 = vadd.f32 %v3208, %v3409
  %v3411 = vpop.f32.mrf.mxu0
  %v3412 = vadd.f32 %v3212, %v3411
  %3413 = vdwg.mxu0
  %3414 = vmatprep.subr.mxu0 0.0
  %3415 = vmatpush1.msra.mxu0 0.0
  %3416 = vmatprep.subr.mxu0 0.0
  %3417 = vmatpush1.msra.mxu0 0.0
  %3418 = vmatprep.subr.mxu0 0.0
  %3419 = vmatpush1.msra.mxu0 0.0
  %3420 = vmatprep.subr.mxu0 0.0
  %3421 = vmatpush1.msra.mxu0 0.0
  %3422 = vmatprep.subr.mxu0 0.0
  %3423 = vmatpush1.msra.mxu0 0.0
  %3424 = vmatprep.subr.mxu0 0.0
  %3425 = vmatpush1.msra.mxu0 0.0
  %3426 = vmatprep.subr.mxu0 0.0
  %3427 = vmatpush1.msra.mxu0 0.0
  %3428 = vmatprep.subr.mxu0 0.0
  %3429 = vmatpush1.msra.mxu0 0.0
  %3430 = vmatprep.subr.mxu0 %v3149
  %3431 = vmatpush1.msra.mxu0 %v3148
  %3432 = vmatprep.subr.mxu0 %v3141
  %3433 = vmatpush1.msra.mxu0 %v3140
  %3434 = vmatprep.subr.mxu0 %v3133
  %3435 = vmatpush1.msra.mxu0 %v3132
  %3436 = vmatprep.subr.mxu0 %v3125
  %3437 = vmatpush1.msra.mxu0 %v3124
  %3438 = vmatprep.subr.mxu0 %v3117
  %3439 = vmatpush1.msra.mxu0 %v3116
  %3440 = vmatprep.subr.mxu0 %v3109
  %3441 = vmatpush1.msra.mxu0 %v3108
  %3442 = vmatprep.subr.mxu0 %v3101
  %3443 = vmatpush1.msra.mxu0 %v3100
  %3444 = vmatprep.subr.mxu0 %v3093
  %3445 = vmatpush1.msra.mxu0 %v3092
  %3446 = vmatprep.subr.mxu0 0.0
  %3447 = vmatpush2.msra.mxu0 0.0
  %3448 = vmatprep.subr.mxu0 0.0
  %3449 = vmatpush2.msra.mxu0 0.0
  %3450 = vmatprep.subr.mxu0 0.0
  %3451 = vmatpush2.msra.mxu0 0.0
  %3452 = vmatprep.subr.mxu0 0.0
  %3453 = vmatpush2.msra.mxu0 0.0
  %3454 = vmatprep.subr.mxu0 0.0
  %3455 = vmatpush2.msra.mxu0 0.0
  %3456 = vmatprep.subr.mxu0 0.0
  %3457 = vmatpush2.msra.mxu0 0.0
  %3458 = vmatprep.subr.mxu0 0.0
  %3459 = vmatpush2.msra.mxu0 0.0
  %3460 = vmatprep.subr.mxu0 0.0
  %3461 = vmatpush2.msra.mxu0 0.0
  %3462 = vmatprep.subr.mxu0 0.0
  %3463 = vmatpush2.msra.mxu0 0.0
  %3464 = vmatprep.subr.mxu0 0.0
  %3465 = vmatpush2.msra.mxu0 0.0
  %3466 = vmatprep.subr.mxu0 0.0
  %3467 = vmatpush2.msra.mxu0 0.0
  %3468 = vmatprep.subr.mxu0 0.0
  %3469 = vmatpush2.msra.mxu0 0.0
  %3470 = vmatprep.subr.mxu0 0.0
  %3471 = vmatpush2.msra.mxu0 0.0
  %3472 = vmatprep.subr.mxu0 0.0
  %3473 = vmatpush2.msra.mxu0 0.0
  %3474 = vmatprep.subr.mxu0 0.0
  %3475 = vmatpush2.msra.mxu0 0.0
  %3476 = vmatprep.subr.mxu0 0.0
  %3477 = vmatpush2.msra.mxu0 0.0
  %3478 = vmatprep.mubr.f32.mxu0 0.0
  %3479 = vmatmul.mubr.f32.gmra.mxu0 %v3270
  %v3480 = vpop.f32.mrf.mxu0
  %v3481 = vadd.f32 %v3216, %v3480
  %v3482 = vpop.f32.mrf.mxu0
  %v3483 = vadd.f32 %v3220, %v3482
  %3484 = vdwg.mxu0
  %3485 = vmatprep.subr.mxu0 0.0
  %3486 = vmatpush1.msra.mxu0 0.0
  %3487 = vmatprep.subr.mxu0 0.0
  %3488 = vmatpush1.msra.mxu0 0.0
  %3489 = vmatprep.subr.mxu0 0.0
  %3490 = vmatpush1.msra.mxu0 0.0
  %3491 = vmatprep.subr.mxu0 0.0
  %3492 = vmatpush1.msra.mxu0 0.0
  %3493 = vmatprep.subr.mxu0 0.0
  %3494 = vmatpush1.msra.mxu0 0.0
  %3495 = vmatprep.subr.mxu0 0.0
  %3496 = vmatpush1.msra.mxu0 0.0
  %3497 = vmatprep.subr.mxu0 0.0
  %3498 = vmatpush1.msra.mxu0 0.0
  %3499 = vmatprep.subr.mxu0 0.0
  %3500 = vmatpush1.msra.mxu0 0.0
  %3501 = vmatprep.subr.mxu0 %v3151
  %3502 = vmatpush1.msra.mxu0 %v3150
  %3503 = vmatprep.subr.mxu0 %v3143
  %3504 = vmatpush1.msra.mxu0 %v3142
  %3505 = vmatprep.subr.mxu0 %v3135
  %3506 = vmatpush1.msra.mxu0 %v3134
  %3507 = vmatprep.subr.mxu0 %v3127
  %3508 = vmatpush1.msra.mxu0 %v3126
  %3509 = vmatprep.subr.mxu0 %v3119
  %3510 = vmatpush1.msra.mxu0 %v3118
  %3511 = vmatprep.subr.mxu0 %v3111
  %3512 = vmatpush1.msra.mxu0 %v3110
  %3513 = vmatprep.subr.mxu0 %v3103
  %3514 = vmatpush1.msra.mxu0 %v3102
  %3515 = vmatprep.subr.mxu0 %v3095
  %3516 = vmatpush1.msra.mxu0 %v3094
  %3517 = vmatprep.subr.mxu0 0.0
  %3518 = vmatpush2.msra.mxu0 0.0
  %3519 = vmatprep.subr.mxu0 0.0
  %3520 = vmatpush2.msra.mxu0 0.0
  %3521 = vmatprep.subr.mxu0 0.0
  %3522 = vmatpush2.msra.mxu0 0.0
  %3523 = vmatprep.subr.mxu0 0.0
  %3524 = vmatpush2.msra.mxu0 0.0
  %3525 = vmatprep.subr.mxu0 0.0
  %3526 = vmatpush2.msra.mxu0 0.0
  %3527 = vmatprep.subr.mxu0 0.0
  %3528 = vmatpush2.msra.mxu0 0.0
  %3529 = vmatprep.subr.mxu0 0.0
  %3530 = vmatpush2.msra.mxu0 0.0
  %3531 = vmatprep.subr.mxu0 0.0
  %3532 = vmatpush2.msra.mxu0 0.0
  %3533 = vmatprep.subr.mxu0 0.0
  %3534 = vmatpush2.msra.mxu0 0.0
  %3535 = vmatprep.subr.mxu0 0.0
  %3536 = vmatpush2.msra.mxu0 0.0
  %3537 = vmatprep.subr.mxu0 0.0
  %3538 = vmatpush2.msra.mxu0 0.0
  %3539 = vmatprep.subr.mxu0 0.0
  %3540 = vmatpush2.msra.mxu0 0.0
  %3541 = vmatprep.subr.mxu0 0.0
  %3542 = vmatpush2.msra.mxu0 0.0
  %3543 = vmatprep.subr.mxu0 0.0
  %3544 = vmatpush2.msra.mxu0 0.0
  %3545 = vmatprep.subr.mxu0 0.0
  %3546 = vmatpush2.msra.mxu0 0.0
  %3547 = vmatprep.subr.mxu0 0.0
  %3548 = vmatpush2.msra.mxu0 0.0
  %3549 = vmatprep.mubr.f32.mxu0 0.0
  %3550 = vmatmul.mubr.f32.gmra.mxu0 %v3270
  %v3551 = vpop.f32.mrf.mxu0
  %v3552 = vadd.f32 %v3224, %v3551
  %v3553 = vpop.f32.mrf.mxu0
  %v3554 = vadd.f32 %v3228, %v3553
  %3555 = vdwg.mxu0
  %v3556 = vmax.f32 %v3339, 0.0
  %v3557 = vmax.f32 %v3341, 0.0
  %v3558 = vmax.f32 %v3410, 0.0
  %v3559 = vmax.f32 %v3412, 0.0
  %v3560 = vmax.f32 %v3481, 0.0
  %v3561 = vmax.f32 %v3483, 0.0
  %v3562 = vmax.f32 %v3552, 0.0
  %v3563 = vmax.f32 %v3554, 0.0
  %3564 = vset.pattern.permute.xlu0 12
  %3565 = vperm.xlu0 %3564, %v2130
  %v3566 = vpop.permute.xlu0 %3565
  %v3568 = vmul.f32 %v3566, %v3556
  %v3569 = vmul.f32 %v3566, %v3557
  %3570 = vset.pattern.permute.xlu0 13
  %3571 = vperm.xlu0 %3570, %v2130
  %v3572 = vpop.permute.xlu0 %3571
  %v3574 = vmul.f32 %v3572, %v3558
  %v3575 = vmul.f32 %v3572, %v3559
  %v3576 = vadd.f32 %v3568, %v3574
  %v3577 = vadd.f32 %v3569, %v3575
  %3578 = vset.pattern.permute.xlu0 14
  %3579 = vperm.xlu0 %3578, %v2130
  %v3580 = vpop.permute.xlu0 %3579
  %v3582 = vadd.f32 %v3576, %v3580
  %v3583 = vadd.f32 %v3577, %v3580
  %v3584 = vmax.f32 %v3582, 0.0
  %v3585 = vmax.f32 %v3583, 0.0
  %3586 = vset.pattern.permute.xlu0 15
  %3587 = vperm.xlu0 %3586, %v2130
  %v3588 = vpop.permute.xlu0 %3587
  %v3590 = vmul.f32 %v3588, %v3560
  %v3591 = vmul.f32 %v3588, %v3561
  %3592 = vset.pattern.permute.xlu0 16
  %3593 = vperm.xlu0 %3592, %v2130
  %v3594 = vpop.permute.xlu0 %3593
  %v3596 = vmul.f32 %v3594, %v3562
  %v3597 = vmul.f32 %v3594, %v3563
  %v3598 = vadd.f32 %v3590, %v3596
  %v3599 = vadd.f32 %v3591, %v3597
  %3600 = vset.pattern.permute.xlu0 17
  %3601 = vperm.xlu0 %3600, %v2130
  %v3602 = vpop.permute.xlu0 %3601
  %v3604 = vadd.f32 %v3598, %v3602
  %v3605 = vadd.f32 %v3599, %v3602
  %v3606 = vmax.f32 %v3604, 0.0
  %v3607 = vmax.f32 %v3605, 0.0
  %v3608 = vadd.f32 %v2621, %v3064
  %v3609 = vadd.f32 %v2622, %v3065
  %v3610 = vadd.f32 %v3608, %v3584
  %v3611 = vadd.f32 %v3609, %v3585
  %v3612 = vadd.f32 %v2643, %v3086
  %v3613 = vadd.f32 %v2644, %v3087
  %v3614 = vadd.f32 %v3612, %v3606
  %v3615 = vadd.f32 %v3613, %v3607
  %v3618 = vrot.slane %v3614, 4
  %v3619 = vrot.slane %v3615, 4
  %v3624 = vrot.slane %v3064, 4
  %v3625 = vrot.slane %v3065, 4
  %v3630 = vrot.slane %v2643, 4
  %v3631 = vrot.slane %v2644, 4
  %v3636 = vrot.slane %v3606, 4
  %v3637 = vrot.slane %v3607, 4
  %v3640 = vsel %vm220, %v3610, %v3618
  %v3641 = vsel %vm220, %v3611, %v3619
  %v3642 = vsel %vm220, %v2621, %v3624
  %v3643 = vsel %vm220, %v2622, %v3625
  %v3644 = vsel %vm220, %v3584, %v3630
  %v3645 = vsel %vm220, %v3585, %v3631
  %v3646 = vsel %vm220, %v3086, %v3636
  %v3647 = vsel %vm220, %v3087, %v3637
  %3648 = vst [vmem:[%s3] sm:$0xff] %v3640
  %3649 = vst [vmem:[%s3 + $0x8] sm:$0xff] %v3641
  %3650 = vst [vmem:[%s3 + $0x10] sm:$0xff] %v3642
  %3651 = vst [vmem:[%s3 + $0x18] sm:$0xff] %v3643
  %3652 = vst [vmem:[%s3 + $0x20] sm:$0xff] %v3644
  %3653 = vst [vmem:[%s3 + $0x28] sm:$0xff] %v3645
  %3654 = vst [vmem:[%s3 + $0x30] sm:$0xff] %v3646
  %3655 = vst [vmem:[%s3 + $0x38] sm:$0xff] %v3647
  // Predicated region
  $region14: #{dcan_forward.1} parent=0 // pred_check
    _
  $region15: #{dcan_forward.1} parent=0 // pred_check_branch
    %3657 = sbr.rel (0) target = $region17
  $region16: #{dcan_forward.1} parent=0 // pred_region
    _
  $region17: #{dcan_forward.1} parent=0 // pred_fallthru
    _
  // Predicated region
  $region18: #{dcan_forward.1} parent=0 // pred_check
    _
  $region19: #{dcan_forward.1} parent=0 // pred_check_branch
    %3659 = sbr.rel (0) target = $region21
  $region20: #{dcan_forward.1} parent=0 // pred_region
    _
  $region21: #{dcan_forward.1} parent=0 // pred_fallthru
    _

</llo_original>
